<compile_context>
chip_gen: v7x
topology: tpu7x:2x2x1
jax: 0.10.0
libtpu: 0.0.40
codegen_flags: <defaults>
</compile_context>

<pallas_src>
import functools

import jax
import jax.numpy as jnp
from jax.experimental import pallas as pl
from jax.experimental.pallas import tpu as pltpu

BN_EPS = 1e-5      # PyTorch nn.BatchNorm2d default eps
NEG_SLOPE = 0.2    # LeakyReLU negative slope
TILE_M = 512       # target rows per grid step for the big layer-1 GEMM
LANE = 128         # TPU lane width

# (kernel_size, stride, has_bn_and_act) for the four conv blocks.
ENCODER_CFG = ((7, 3, True), (5, 3, True), (4, 2, True), (2, 1, False))


def _round_up(x, m):
    return ((x + m - 1) // m) * m


def _im2col(x, kh, kw, stride, k_pad=None):
    """NHWC -> (B, OH, OW, KH*KW*C [zero-padded to k_pad]) with (kh, kw, c) layout."""
    B, H, W, C = x.shape
    OH = (H - kh) // stride + 1
    OW = (W - kw) // stride + 1
    cols = []
    for i in range(kh):
        for j in range(kw):
            cols.append(jax.lax.slice(
                x,
                (0, i, j, 0),
                (B, i + (OH - 1) * stride + 1, j + (OW - 1) * stride + 1, C),
                (1, stride, stride, 1)))
    k = kh * kw * C
    if k_pad is not None and k_pad > k:
        # Fold K padding into the same concatenate -> patches hit HBM once.
        cols.append(jnp.zeros((B, OH, OW, k_pad - k), x.dtype))
    return jnp.concatenate(cols, axis=-1), OH, OW


# ---------------------------------------------------------------------------
# Kernel 1: layer-1 row-tiled GEMM + folded BN + LeakyReLU
# ---------------------------------------------------------------------------
def _gemm_bn_lrelu_kernel(x_ref, w_ref, ss_ref, o_ref, *, neg_slope):
    acc = jnp.dot(x_ref[...], w_ref[...], preferred_element_type=jnp.float32)
    y = acc * ss_ref[0:1, :] + ss_ref[1:2, :]          # folded BatchNorm (eval)
    o_ref[...] = jnp.where(y >= 0.0, y, neg_slope * y).astype(o_ref.dtype)


def _conv_bn_lrelu_tiled(x, w, scale, shift, *, stride, tile_m=TILE_M):
    """Conv2d(bias=False) + BN + LeakyReLU on an NHWC tensor via a tiled GEMM."""
    B, H, W, Cin = x.shape
    KH, KW, _, Cout = w.shape
    K = KH * KW * Cin
    K_pad = _round_up(K, LANE)
    C_pad = _round_up(Cout, LANE)

    patches, OH, OW = _im2col(x.astype(jnp.bfloat16), KH, KW, stride, k_pad=K_pad)
    M = B * OH * OW
    lhs = patches.reshape(M, K_pad)

    rhs = jnp.zeros((K_pad, C_pad), jnp.bfloat16).at[:K, :Cout].set(
        w.reshape(K, Cout).astype(jnp.bfloat16))
    ss = (jnp.zeros((2, C_pad), jnp.float32)
          .at[0, :Cout].set(scale).at[1, :Cout].set(shift))

    # Row tiling: pick the tile so M splits evenly (e.g. 800 -> 2 x 400).
    n_tiles = max(1, (M + tile_m - 1) // tile_m)
    tm = _round_up((M + n_tiles - 1) // n_tiles, 8)
    m_pad = n_tiles * tm
    if m_pad != M:
        lhs = jnp.pad(lhs, ((0, m_pad - M), (0, 0)))

    flops = 2 * m_pad * K_pad * C_pad
    bytes_accessed = lhs.size * 2 + rhs.size * 2 + ss.size * 4 + m_pad * C_pad * 4

    out = pl.pallas_call(
        functools.partial(_gemm_bn_lrelu_kernel, neg_slope=NEG_SLOPE),
        out_shape=jax.ShapeDtypeStruct((m_pad, C_pad), jnp.float32),
        grid=(n_tiles,),
        in_specs=[
            pl.BlockSpec((tm, K_pad), lambda i: (i, 0)),     # streamed patch tiles
            pl.BlockSpec((K_pad, C_pad), lambda i: (0, 0)),  # resident weights
            pl.BlockSpec((2, C_pad), lambda i: (0, 0)),      # resident scale/shift
        ],
        out_specs=pl.BlockSpec((tm, C_pad), lambda i: (i, 0)),
        compiler_params=pltpu.CompilerParams(
            dimension_semantics=("parallel",)),              # megacore on v7x
        cost_estimate=pl.CostEstimate(flops=flops, transcendentals=0,
                                      bytes_accessed=bytes_accessed),
    )(lhs, rhs, ss)

    return out[:M, :Cout].reshape(B, OH, OW, Cout)


# ---------------------------------------------------------------------------
# Kernel 2: layers 2-4 fused in one pallas_call (intermediates stay in VMEM)
# ---------------------------------------------------------------------------
def _fused_tail_kernel(x2_ref, w2_ref, ss2_ref, w3_ref, ss3_ref, w4_ref, o_ref,
                       *, neg_slope, batch, n_k3, n_k4):
    c2p = w2_ref.shape[1]
    c3p = w3_ref.shape[1]
    rows3 = n_k4 * batch     # layer-3 output rows, ordered (oh3*OW3 + ow3, b)

    # ---- layer 2: expanded-row GEMM + folded BN + LeakyReLU ----------------
    y2 = jnp.dot(x2_ref[...], w2_ref[...], preferred_element_type=jnp.float32)
    y2 = y2 * ss2_ref[0:1, :] + ss2_ref[1:2, :]
    y2 = jnp.where(y2 >= 0.0, y2, neg_slope * y2)

    # ---- layer 3: 4x4/s2 conv as n_k3 accumulated row-block GEMMs ----------
    # x2e rows were pre-ordered per layer-3 kernel position, so the in-kernel
    # "im2col" is just contiguous, 8-aligned row-block slices of y2.
    y3 = jnp.zeros((rows3, c3p), jnp.float32)
    for idx in range(n_k3):
        blk = y2[idx * rows3:(idx + 1) * rows3, :].astype(jnp.bfloat16)
        w3k = w3_ref[idx * c2p:(idx + 1) * c2p, :]
        y3 = y3 + jnp.dot(blk, w3k, preferred_element_type=jnp.float32)
    y3 = y3 * ss3_ref[0:1, :] + ss3_ref[1:2, :]
    y3 = jnp.where(y3 >= 0.0, y3, neg_slope * y3)

    # ---- layer 4: 2x2/s1 conv -> 1x1 output (no BN / activation) -----------
    # y4[b] = sum_p y3[p*batch + b] @ W4[p].  The per-position row gather is a
    # tiny constant selection matmul so every op stays 8-sublane aligned.
    ri = jax.lax.broadcasted_iota(jnp.int32, (rows3, rows3), 0)
    ci = jax.lax.broadcasted_iota(jnp.int32, (rows3, rows3), 1)
    y4 = jnp.zeros((rows3, w4_ref.shape[1]), jnp.float32)
    for p in range(n_k4):
        sel = ((ci == ri + p * batch) & (ri < batch)).astype(jnp.float32)
        gathered = jnp.dot(sel, y3, preferred_element_type=jnp.float32)
        w4k = w4_ref[p * c3p:(p + 1) * c3p, :]
        y4 = y4 + jnp.dot(gathered.astype(jnp.bfloat16), w4k,
                          preferred_element_type=jnp.float32)
    o_ref[...] = y4          # rows [0, batch) hold the real outputs


def _fused_tail(a1, w2, scale2, shift2, w3, scale3, shift3, w4,
                *, stride2, stride3):
    B = a1.shape[0]
    KH2, KW2, C1, C2 = w2.shape
    KH3, KW3, _, C3 = w3.shape
    KH4, KW4, _, C4 = w4.shape
    K2 = KH2 * KW2 * C1
    K2p, C2p = _round_up(K2, LANE), _round_up(C2, LANE)
    C3p, C4p = _round_up(C3, LANE), _round_up(C4, LANE)

    # Layer-2 im2col (bf16, K padded inside the same concatenate).
    p2, OH2, OW2 = _im2col(a1.astype(jnp.bfloat16), KH2, KW2, stride2, k_pad=K2p)

    OH3 = (OH2 - KH3) // stride3 + 1
    OW3 = (OW2 - KW3) // stride3 + 1
    assert OH3 == KH4 and OW3 == KW4, "fused tail expects a 1x1 final output"

    # Expand/reorder layer-2 patch rows by layer-3 kernel position (i, j) so
    # the in-kernel layer-3 im2col becomes contiguous row-block GEMMs.
    # Row order: (i, j) blocks of (oh3*OW3 + ow3, b) rows.
    blocks = []
    for i in range(KH3):
        for j in range(KW3):
            blk = jax.lax.slice(
                p2, (0, i, j, 0),
                (B, i + (OH3 - 1) * stride3 + 1, j + (OW3 - 1) * stride3 + 1, K2p),
                (1, stride3, stride3, 1))                 # (B, OH3, OW3, K2p)
            blk = jnp.transpose(blk, (1, 2, 0, 3))        # (OH3, OW3, B, K2p)
            blocks.append(blk.reshape(OH3 * OW3 * B, K2p))
    x2e = jnp.concatenate(blocks, axis=0)                 # (n_k3 * n_k4 * B, K2p)

    # Zero-padded bf16 weight slabs + packed f32 BN scale/shift.
    w2m = jnp.zeros((K2p, C2p), jnp.bfloat16).at[:K2, :C2].set(
        w2.reshape(K2, C2).astype(jnp.bfloat16))
    ss2 = (jnp.zeros((2, C2p), jnp.float32)
           .at[0, :C2].set(scale2).at[1, :C2].set(shift2))
    w3m = jnp.zeros((KH3 * KW3, C2p, C3p), jnp.bfloat16).at[:, :C2, :C3].set(
        w3.reshape(KH3 * KW3, C2, C3).astype(jnp.bfloat16)
    ).reshape(KH3 * KW3 * C2p, C3p)
    ss3 = (jnp.zeros((2, C3p), jnp.float32)
           .at[0, :C3].set(scale3).at[1, :C3].set(shift3))
    w4m = jnp.zeros((KH4 * KW4, C3p, C4p), jnp.bfloat16).at[:, :C3, :C4].set(
        w4.reshape(KH4 * KW4, C3, C4).astype(jnp.bfloat16)
    ).reshape(KH4 * KW4 * C3p, C4p)

    M2 = x2e.shape[0]
    rows3 = KH4 * KW4 * B
    flops = 2 * (M2 * K2p * C2p
                 + KH3 * KW3 * rows3 * C2p * C3p
                 + KH4 * KW4 * (rows3 * rows3 * C3p + rows3 * C3p * C4p))
    bytes_accessed = (x2e.size * 2 + w2m.size * 2 + w3m.size * 2 + w4m.size * 2
                      + ss2.size * 4 + ss3.size * 4 + rows3 * C4p * 4)

    out = pl.pallas_call(
        functools.partial(_fused_tail_kernel, neg_slope=NEG_SLOPE, batch=B,
                          n_k3=KH3 * KW3, n_k4=KH4 * KW4),
        out_shape=jax.ShapeDtypeStruct((rows3, C4p), jnp.float32),
        grid=(1,),
        in_specs=[
            pl.BlockSpec((M2, K2p), lambda i: (0, 0)),
            pl.BlockSpec((K2p, C2p), lambda i: (0, 0)),
            pl.BlockSpec((2, C2p), lambda i: (0, 0)),
            pl.BlockSpec((KH3 * KW3 * C2p, C3p), lambda i: (0, 0)),
            pl.BlockSpec((2, C3p), lambda i: (0, 0)),
            pl.BlockSpec((KH4 * KW4 * C3p, C4p), lambda i: (0, 0)),
        ],
        out_specs=pl.BlockSpec((rows3, C4p), lambda i: (0, 0)),
        compiler_params=pltpu.CompilerParams(dimension_semantics=("arbitrary",)),
        cost_estimate=pl.CostEstimate(flops=flops, transcendentals=0,
                                      bytes_accessed=bytes_accessed),
    )(x2e, w2m, ss2, w3m, ss3, w4m)

    return out[:B, :C4].reshape(B, 1, 1, C4)


# ---------------------------------------------------------------------------
# Forward pass
# ---------------------------------------------------------------------------
def encoder_forward(image, params):
    """image: (B, im_chan, H, W) NCHW float.  Returns (B, z_dim, OH, OW)."""
    x = jnp.transpose(image, (0, 2, 3, 1)).astype(jnp.float32)    # -> NHWC

    def bn_fold(layer):
        # TODO(synk): eval-mode BatchNorm only (running stats folded into a
        # per-channel scale/shift); training-mode batch statistics are not computed.
        scale = layer["gamma"] * jax.lax.rsqrt(layer["var"] + BN_EPS)
        return scale, layer["beta"] - layer["mean"] * scale

    l1, l2, l3, l4 = params
    s1, b1 = bn_fold(l1)
    s2, b2 = bn_fold(l2)
    s3, b3 = bn_fold(l3)

    # Layer 1: big row-tiled GEMM + BN + LeakyReLU (one pallas_call).
    a1 = _conv_bn_lrelu_tiled(x, l1["w"], s1, b1, stride=ENCODER_CFG[0][1])

    # Layers 2-4: one fused pallas_call with VMEM-resident intermediates.
    y = _fused_tail(a1, l2["w"], s2, b2, l3["w"], s3, b3, l4["w"],
                    stride2=ENCODER_CFG[1][1], stride3=ENCODER_CFG[2][1])
    return jnp.transpose(y, (0, 3, 1, 2))                          # -> NCHW


# ---------------------------------------------------------------------------
# Deterministic synthetic parameters (shapes match nn.Module __init__)
# ---------------------------------------------------------------------------
def init_params(key, im_chan=2, z_dim=100, hidden_dim=48):
    chans = [im_chan, hidden_dim, hidden_dim * 2, hidden_dim * 4, z_dim]
    layers = []
    for li, (k, s, has_bn) in enumerate(ENCODER_CFG):
        cin, cout = chans[li], chans[li + 1]
        key, kw, kg, kb, km, kv = jax.random.split(key, 6)
        bound = 1.0 / ((cin * k * k) ** 0.5)
        layer = {"w": jax.random.uniform(kw, (k, k, cin, cout),
                                         jnp.float32, -bound, bound)}
        if has_bn:
            layer["gamma"] = jax.random.uniform(kg, (cout,), jnp.float32, 0.5, 1.5)
            layer["beta"] = 0.1 * jax.random.normal(kb, (cout,), jnp.float32)
            layer["mean"] = 0.1 * jax.random.normal(km, (cout,), jnp.float32)
            layer["var"] = jax.random.uniform(kv, (cout,), jnp.float32, 0.5, 1.5)
        layers.append(layer)
    return layers


# ---------------------------------------------------------------------------
# Pure-JAX reference (f32 XLA conv) for a correctness check
# ---------------------------------------------------------------------------
def reference_forward(image, params):
    x = jnp.transpose(image, (0, 2, 3, 1)).astype(jnp.float32)
    for (k, s, has_bn), layer in zip(ENCODER_CFG, params):
        x = jax.lax.conv_general_dilated(
            x, layer["w"], window_strides=(s, s), padding="VALID",
            dimension_numbers=("NHWC", "HWIO", "NHWC"))
        if has_bn:
            scale = layer["gamma"] * jax.lax.rsqrt(layer["var"] + BN_EPS)
            shift = layer["beta"] - layer["mean"] * scale
            x = x * scale + shift
            x = jnp.where(x >= 0.0, x, NEG_SLOPE * x)
    return jnp.transpose(x, (0, 3, 1, 2))


if __name__ == "__main__":
    key = jax.random.PRNGKey(0)
    kp, ki = jax.random.split(key)

    B, IM_CHAN, H, W = 2, 2, 64, 64          # 64x64 -> 20 -> 6 -> 2 -> 1
    Z_DIM, HIDDEN = 100, 48                  # module defaults

    params = init_params(kp, IM_CHAN, Z_DIM, HIDDEN)
    image = jax.random.normal(ki, (B, IM_CHAN, H, W), jnp.float32)

    out = jax.jit(encoder_forward)(image, params)
    jax.block_until_ready(out)

    ref = reference_forward(image, params)
    assert out.shape == (B, Z_DIM, 1, 1), out.shape
    # bf16 MXU inputs (f32 accumulate) -> loosened tolerance vs. the f32 reference.
    max_err = float(jnp.max(jnp.abs(out - ref)))
    assert jnp.allclose(out, ref, atol=2e-2, rtol=2e-2), max_err

    print("KERNEL_OK")
</pallas_src>

<mosaic_0001>
module attributes {stable_mosaic.version = 11 : i64} {
  func.func @_gemm_bn_lrelu_kernel(%arg0: i32, %arg1: memref<400x128xbf16, #tpu.memory_space<vmem>>, %arg2: memref<128x128xbf16, #tpu.memory_space<vmem>>, %arg3: memref<2x128xf32, #tpu.memory_space<vmem>>, %arg4: memref<400x128xf32, #tpu.memory_space<vmem>>) attributes {dimension_semantics = [#tpu.dimension_semantics<parallel>], iteration_bounds = array<i64: 2>, scalar_prefetch = 0 : i64, scratch_operands = 0 : i64, tpu.core_type = #tpu.core_type<tc>, window_params = [{transform_indices = @transform_0, window_bounds = array<i64: 400, 128>}, {pipeline_mode = #tpu.pipeline_mode<synchronous>, transform_indices = @transform_1, window_bounds = array<i64: 128, 128>}, {pipeline_mode = #tpu.pipeline_mode<synchronous>, transform_indices = @transform_2, window_bounds = array<i64: 2, 128>}, {transform_indices = @transform_3, window_bounds = array<i64: 400, 128>}]} {
    %c0 = arith.constant 0 : index
    %c0_0 = arith.constant 0 : index
    %0 = vector.load %arg1[%c0, %c0_0] : memref<400x128xbf16, #tpu.memory_space<vmem>>, vector<400x128xbf16>
    %c0_1 = arith.constant 0 : index
    %c0_2 = arith.constant 0 : index
    %1 = vector.load %arg2[%c0_1, %c0_2] : memref<128x128xbf16, #tpu.memory_space<vmem>>, vector<128x128xbf16>
    %cst = arith.constant dense<0.000000e+00> : vector<400x128xf32>
    %2 = tpu.matmul %0, %1, %cst {dimension_numbers = #tpu.dot_dimension_numbers<[1], [0], [0], [1], [0, 0, 1, 1], [], []>} : vector<400x128xbf16>, vector<128x128xbf16>, vector<400x128xf32> -> vector<400x128xf32>
    %c0_3 = arith.constant 0 : index
    %c0_4 = arith.constant 0 : index
    %3 = vector.load %arg3[%c0_3, %c0_4] : memref<2x128xf32, #tpu.memory_space<vmem>>, vector<1x128xf32>
    %4 = vector.broadcast %3 : vector<1x128xf32> to vector<400x128xf32>
    %5 = arith.mulf %2, %4 : vector<400x128xf32>
    %c1 = arith.constant 1 : index
    %c0_5 = arith.constant 0 : index
    %6 = vector.load %arg3[%c1, %c0_5] : memref<2x128xf32, #tpu.memory_space<vmem>>, vector<1x128xf32>
    %7 = vector.broadcast %6 : vector<1x128xf32> to vector<400x128xf32>
    %8 = arith.addf %5, %7 : vector<400x128xf32>
    %cst_6 = arith.constant 0.000000e+00 : f32
    %9 = vector.broadcast %cst_6 : f32 to vector<400x128xf32>
    %10 = arith.cmpf oge, %8, %9 : vector<400x128xf32>
    %cst_7 = arith.constant 2.000000e-01 : f32
    %11 = vector.broadcast %cst_7 : f32 to vector<400x128xf32>
    %12 = arith.mulf %11, %8 : vector<400x128xf32>
    %13 = arith.select %10, %8, %12 : vector<400x128xi1>, vector<400x128xf32>
    %c0_8 = arith.constant 0 : index
    %c0_9 = arith.constant 0 : index
    %14 = vector.load %arg4[%c0_8, %c0_9] : memref<400x128xf32, #tpu.memory_space<vmem>>, vector<400x128xf32>
    tpu.vector_store %arg4[%c0_8, %c0_9], %13 {strides = array<i32>} : memref<400x128xf32, #tpu.memory_space<vmem>>, vector<400x128xf32>,
    return
  }
  func.func @transform_0(%arg0: i32) -> (i32, i32) {
    %c0_i32 = arith.constant 0 : i32
    %c0_i32_0 = arith.constant 0 : i32
    return %arg0, %c0_i32 : i32, i32
  }
  func.func @transform_1(%arg0: i32) -> (i32, i32) {
    %c0_i32 = arith.constant 0 : i32
    %c0_i32_0 = arith.constant 0 : i32
    %c0_i32_1 = arith.constant 0 : i32
    return %c0_i32, %c0_i32_0 : i32, i32
  }
  func.func @transform_2(%arg0: i32) -> (i32, i32) {
    %c0_i32 = arith.constant 0 : i32
    %c0_i32_0 = arith.constant 0 : i32
    %c0_i32_1 = arith.constant 0 : i32
    return %c0_i32, %c0_i32_0 : i32, i32
  }
  func.func @transform_3(%arg0: i32) -> (i32, i32) {
    %c0_i32 = arith.constant 0 : i32
    %c0_i32_0 = arith.constant 0 : i32
    return %arg0, %c0_i32 : i32, i32
  }
}

module attributes {stable_mosaic.version = 11 : i64} {
  func.func @_fused_tail_kernel(%arg0: i32, %arg1: memref<128x1280xbf16, #tpu.memory_space<vmem>>, %arg2: memref<1280x128xbf16, #tpu.memory_space<vmem>>, %arg3: memref<2x128xf32, #tpu.memory_space<vmem>>, %arg4: memref<2048x256xbf16, #tpu.memory_space<vmem>>, %arg5: memref<2x256xf32, #tpu.memory_space<vmem>>, %arg6: memref<1024x128xbf16, #tpu.memory_space<vmem>>, %arg7: memref<8x128xf32, #tpu.memory_space<vmem>>) attributes {dimension_semantics = [#tpu.dimension_semantics<arbitrary>], iteration_bounds = array<i64: 1>, scalar_prefetch = 0 : i64, scratch_operands = 0 : i64, tpu.core_type = #tpu.core_type<tc>, window_params = [{pipeline_mode = #tpu.pipeline_mode<synchronous>, transform_indices = @transform_0, window_bounds = array<i64: 128, 1280>}, {pipeline_mode = #tpu.pipeline_mode<synchronous>, transform_indices = @transform_1, window_bounds = array<i64: 1280, 128>}, {pipeline_mode = #tpu.pipeline_mode<synchronous>, transform_indices = @transform_2, window_bounds = array<i64: 2, 128>}, {pipeline_mode = #tpu.pipeline_mode<synchronous>, transform_indices = @transform_3, window_bounds = array<i64: 2048, 256>}, {pipeline_mode = #tpu.pipeline_mode<synchronous>, transform_indices = @transform_4, window_bounds = array<i64: 2, 256>}, {pipeline_mode = #tpu.pipeline_mode<synchronous>, transform_indices = @transform_5, window_bounds = array<i64: 1024, 128>}, {pipeline_mode = #tpu.pipeline_mode<synchronous>, transform_indices = @transform_6, window_bounds = array<i64: 8, 128>}]} {
    %c0 = arith.constant 0 : index
    %c0_0 = arith.constant 0 : index
    %0 = vector.load %arg1[%c0, %c0_0] : memref<128x1280xbf16, #tpu.memory_space<vmem>>, vector<128x1280xbf16>
    %c0_1 = arith.constant 0 : index
    %c0_2 = arith.constant 0 : index
    %1 = vector.load %arg2[%c0_1, %c0_2] : memref<1280x128xbf16, #tpu.memory_space<vmem>>, vector<1280x128xbf16>
    %cst = arith.constant dense<0.000000e+00> : vector<128x128xf32>
    %2 = tpu.matmul %0, %1, %cst {dimension_numbers = #tpu.dot_dimension_numbers<[1], [0], [0], [1], [0, 0, 1, 1], [], []>} : vector<128x1280xbf16>, vector<1280x128xbf16>, vector<128x128xf32> -> vector<128x128xf32>
    %c0_3 = arith.constant 0 : index
    %c0_4 = arith.constant 0 : index
    %3 = vector.load %arg3[%c0_3, %c0_4] : memref<2x128xf32, #tpu.memory_space<vmem>>, vector<1x128xf32>
    %4 = vector.broadcast %3 : vector<1x128xf32> to vector<128x128xf32>
    %5 = arith.mulf %2, %4 : vector<128x128xf32>
    %c1 = arith.constant 1 : index
    %c0_5 = arith.constant 0 : index
    %6 = vector.load %arg3[%c1, %c0_5] : memref<2x128xf32, #tpu.memory_space<vmem>>, vector<1x128xf32>
    %7 = vector.broadcast %6 : vector<1x128xf32> to vector<128x128xf32>
    %8 = arith.addf %5, %7 : vector<128x128xf32>
    %cst_6 = arith.constant 0.000000e+00 : f32
    %9 = vector.broadcast %cst_6 : f32 to vector<128x128xf32>
    %10 = arith.cmpf oge, %8, %9 : vector<128x128xf32>
    %cst_7 = arith.constant 2.000000e-01 : f32
    %11 = vector.broadcast %cst_7 : f32 to vector<128x128xf32>
    %12 = arith.mulf %11, %8 : vector<128x128xf32>
    %13 = arith.select %10, %8, %12 : vector<128x128xi1>, vector<128x128xf32>
    %cst_8 = arith.constant 0.000000e+00 : f32
    %14 = vector.broadcast %cst_8 : f32 to vector<8x256xf32>
    %15 = vector.extract_strided_slice %13 {offsets = [0, 0], sizes = [8, 128], strides = [1, 1]} : vector<128x128xf32> to vector<8x128xf32>
    %16 = arith.truncf %15 : vector<8x128xf32> to vector<8x128xbf16>
    %c0_9 = arith.constant 0 : index
    %c0_10 = arith.constant 0 : index
    %17 = vector.load %arg4[%c0_9, %c0_10] : memref<2048x256xbf16, #tpu.memory_space<vmem>>, vector<128x256xbf16>
    %cst_11 = arith.constant dense<0.000000e+00> : vector<8x256xf32>
    %18 = tpu.matmul %16, %17, %cst_11 {dimension_numbers = #tpu.dot_dimension_numbers<[1], [0], [0], [1], [0, 0, 1, 1], [], []>} : vector<8x128xbf16>, vector<128x256xbf16>, vector<8x256xf32> -> vector<8x256xf32>
    %19 = arith.addf %14, %18 : vector<8x256xf32>
    %20 = vector.extract_strided_slice %13 {offsets = [8, 0], sizes = [8, 128], strides = [1, 1]} : vector<128x128xf32> to vector<8x128xf32>
    %21 = arith.truncf %20 : vector<8x128xf32> to vector<8x128xbf16>
    %c128 = arith.constant 128 : index
    %c0_12 = arith.constant 0 : index
    %22 = vector.load %arg4[%c128, %c0_12] : memref<2048x256xbf16, #tpu.memory_space<vmem>>, vector<128x256xbf16>
    %cst_13 = arith.constant dense<0.000000e+00> : vector<8x256xf32>
    %23 = tpu.matmul %21, %22, %cst_13 {dimension_numbers = #tpu.dot_dimension_numbers<[1], [0], [0], [1], [0, 0, 1, 1], [], []>} : vector<8x128xbf16>, vector<128x256xbf16>, vector<8x256xf32> -> vector<8x256xf32>
    %24 = arith.addf %19, %23 : vector<8x256xf32>
    %25 = vector.extract_strided_slice %13 {offsets = [16, 0], sizes = [8, 128], strides = [1, 1]} : vector<128x128xf32> to vector<8x128xf32>
    %26 = arith.truncf %25 : vector<8x128xf32> to vector<8x128xbf16>
    %c256 = arith.constant 256 : index
    %c0_14 = arith.constant 0 : index
    %27 = vector.load %arg4[%c256, %c0_14] : memref<2048x256xbf16, #tpu.memory_space<vmem>>, vector<128x256xbf16>
    %cst_15 = arith.constant dense<0.000000e+00> : vector<8x256xf32>
    %28 = tpu.matmul %26, %27, %cst_15 {dimension_numbers = #tpu.dot_dimension_numbers<[1], [0], [0], [1], [0, 0, 1, 1], [], []>} : vector<8x128xbf16>, vector<128x256xbf16>, vector<8x256xf32> -> vector<8x256xf32>
    %29 = arith.addf %24, %28 : vector<8x256xf32>
    %30 = vector.extract_strided_slice %13 {offsets = [24, 0], sizes = [8, 128], strides = [1, 1]} : vector<128x128xf32> to vector<8x128xf32>
    %31 = arith.truncf %30 : vector<8x128xf32> to vector<8x128xbf16>
    %c384 = arith.constant 384 : index
    %c0_16 = arith.constant 0 : index
    %32 = vector.load %arg4[%c384, %c0_16] : memref<2048x256xbf16, #tpu.memory_space<vmem>>, vector<128x256xbf16>
    %cst_17 = arith.constant dense<0.000000e+00> : vector<8x256xf32>
    %33 = tpu.matmul %31, %32, %cst_17 {dimension_numbers = #tpu.dot_dimension_numbers<[1], [0], [0], [1], [0, 0, 1, 1], [], []>} : vector<8x128xbf16>, vector<128x256xbf16>, vector<8x256xf32> -> vector<8x256xf32>
    %34 = arith.addf %29, %33 : vector<8x256xf32>
    %35 = vector.extract_strided_slice %13 {offsets = [32, 0], sizes = [8, 128], strides = [1, 1]} : vector<128x128xf32> to vector<8x128xf32>
    %36 = arith.truncf %35 : vector<8x128xf32> to vector<8x128xbf16>
    %c512 = arith.constant 512 : index
    %c0_18 = arith.constant 0 : index
    %37 = vector.load %arg4[%c512, %c0_18] : memref<2048x256xbf16, #tpu.memory_space<vmem>>, vector<128x256xbf16>
    %cst_19 = arith.constant dense<0.000000e+00> : vector<8x256xf32>
    %38 = tpu.matmul %36, %37, %cst_19 {dimension_numbers = #tpu.dot_dimension_numbers<[1], [0], [0], [1], [0, 0, 1, 1], [], []>} : vector<8x128xbf16>, vector<128x256xbf16>, vector<8x256xf32> -> vector<8x256xf32>
    %39 = arith.addf %34, %38 : vector<8x256xf32>
    %40 = vector.extract_strided_slice %13 {offsets = [40, 0], sizes = [8, 128], strides = [1, 1]} : vector<128x128xf32> to vector<8x128xf32>
    %41 = arith.truncf %40 : vector<8x128xf32> to vector<8x128xbf16>
    %c640 = arith.constant 640 : index
    %c0_20 = arith.constant 0 : index
    %42 = vector.load %arg4[%c640, %c0_20] : memref<2048x256xbf16, #tpu.memory_space<vmem>>, vector<128x256xbf16>
    %cst_21 = arith.constant dense<0.000000e+00> : vector<8x256xf32>
    %43 = tpu.matmul %41, %42, %cst_21 {dimension_numbers = #tpu.dot_dimension_numbers<[1], [0], [0], [1], [0, 0, 1, 1], [], []>} : vector<8x128xbf16>, vector<128x256xbf16>, vector<8x256xf32> -> vector<8x256xf32>
    %44 = arith.addf %39, %43 : vector<8x256xf32>
    %45 = vector.extract_strided_slice %13 {offsets = [48, 0], sizes = [8, 128], strides = [1, 1]} : vector<128x128xf32> to vector<8x128xf32>
    %46 = arith.truncf %45 : vector<8x128xf32> to vector<8x128xbf16>
    %c768 = arith.constant 768 : index
    %c0_22 = arith.constant 0 : index
    %47 = vector.load %arg4[%c768, %c0_22] : memref<2048x256xbf16, #tpu.memory_space<vmem>>, vector<128x256xbf16>
    %cst_23 = arith.constant dense<0.000000e+00> : vector<8x256xf32>
    %48 = tpu.matmul %46, %47, %cst_23 {dimension_numbers = #tpu.dot_dimension_numbers<[1], [0], [0], [1], [0, 0, 1, 1], [], []>} : vector<8x128xbf16>, vector<128x256xbf16>, vector<8x256xf32> -> vector<8x256xf32>
    %49 = arith.addf %44, %48 : vector<8x256xf32>
    %50 = vector.extract_strided_slice %13 {offsets = [56, 0], sizes = [8, 128], strides = [1, 1]} : vector<128x128xf32> to vector<8x128xf32>
    %51 = arith.truncf %50 : vector<8x128xf32> to vector<8x128xbf16>
    %c896 = arith.constant 896 : index
    %c0_24 = arith.constant 0 : index
    %52 = vector.load %arg4[%c896, %c0_24] : memref<2048x256xbf16, #tpu.memory_space<vmem>>, vector<128x256xbf16>
    %cst_25 = arith.constant dense<0.000000e+00> : vector<8x256xf32>
    %53 = tpu.matmul %51, %52, %cst_25 {dimension_numbers = #tpu.dot_dimension_numbers<[1], [0], [0], [1], [0, 0, 1, 1], [], []>} : vector<8x128xbf16>, vector<128x256xbf16>, vector<8x256xf32> -> vector<8x256xf32>
    %54 = arith.addf %49, %53 : vector<8x256xf32>
    %55 = vector.extract_strided_slice %13 {offsets = [64, 0], sizes = [8, 128], strides = [1, 1]} : vector<128x128xf32> to vector<8x128xf32>
    %56 = arith.truncf %55 : vector<8x128xf32> to vector<8x128xbf16>
    %c1024 = arith.constant 1024 : index
    %c0_26 = arith.constant 0 : index
    %57 = vector.load %arg4[%c1024, %c0_26] : memref<2048x256xbf16, #tpu.memory_space<vmem>>, vector<128x256xbf16>
    %cst_27 = arith.constant dense<0.000000e+00> : vector<8x256xf32>
    %58 = tpu.matmul %56, %57, %cst_27 {dimension_numbers = #tpu.dot_dimension_numbers<[1], [0], [0], [1], [0, 0, 1, 1], [], []>} : vector<8x128xbf16>, vector<128x256xbf16>, vector<8x256xf32> -> vector<8x256xf32>
    %59 = arith.addf %54, %58 : vector<8x256xf32>
    %60 = vector.extract_strided_slice %13 {offsets = [72, 0], sizes = [8, 128], strides = [1, 1]} : vector<128x128xf32> to vector<8x128xf32>
    %61 = arith.truncf %60 : vector<8x128xf32> to vector<8x128xbf16>
    %c1152 = arith.constant 1152 : index
    %c0_28 = arith.constant 0 : index
    %62 = vector.load %arg4[%c1152, %c0_28] : memref<2048x256xbf16, #tpu.memory_space<vmem>>, vector<128x256xbf16>
    %cst_29 = arith.constant dense<0.000000e+00> : vector<8x256xf32>
    %63 = tpu.matmul %61, %62, %cst_29 {dimension_numbers = #tpu.dot_dimension_numbers<[1], [0], [0], [1], [0, 0, 1, 1], [], []>} : vector<8x128xbf16>, vector<128x256xbf16>, vector<8x256xf32> -> vector<8x256xf32>
    %64 = arith.addf %59, %63 : vector<8x256xf32>
    %65 = vector.extract_strided_slice %13 {offsets = [80, 0], sizes = [8, 128], strides = [1, 1]} : vector<128x128xf32> to vector<8x128xf32>
    %66 = arith.truncf %65 : vector<8x128xf32> to vector<8x128xbf16>
    %c1280 = arith.constant 1280 : index
    %c0_30 = arith.constant 0 : index
    %67 = vector.load %arg4[%c1280, %c0_30] : memref<2048x256xbf16, #tpu.memory_space<vmem>>, vector<128x256xbf16>
    %cst_31 = arith.constant dense<0.000000e+00> : vector<8x256xf32>
    %68 = tpu.matmul %66, %67, %cst_31 {dimension_numbers = #tpu.dot_dimension_numbers<[1], [0], [0], [1], [0, 0, 1, 1], [], []>} : vector<8x128xbf16>, vector<128x256xbf16>, vector<8x256xf32> -> vector<8x256xf32>
    %69 = arith.addf %64, %68 : vector<8x256xf32>
    %70 = vector.extract_strided_slice %13 {offsets = [88, 0], sizes = [8, 128], strides = [1, 1]} : vector<128x128xf32> to vector<8x128xf32>
    %71 = arith.truncf %70 : vector<8x128xf32> to vector<8x128xbf16>
    %c1408 = arith.constant 1408 : index
    %c0_32 = arith.constant 0 : index
    %72 = vector.load %arg4[%c1408, %c0_32] : memref<2048x256xbf16, #tpu.memory_space<vmem>>, vector<128x256xbf16>
    %cst_33 = arith.constant dense<0.000000e+00> : vector<8x256xf32>
    %73 = tpu.matmul %71, %72, %cst_33 {dimension_numbers = #tpu.dot_dimension_numbers<[1], [0], [0], [1], [0, 0, 1, 1], [], []>} : vector<8x128xbf16>, vector<128x256xbf16>, vector<8x256xf32> -> vector<8x256xf32>
    %74 = arith.addf %69, %73 : vector<8x256xf32>
    %75 = vector.extract_strided_slice %13 {offsets = [96, 0], sizes = [8, 128], strides = [1, 1]} : vector<128x128xf32> to vector<8x128xf32>
    %76 = arith.truncf %75 : vector<8x128xf32> to vector<8x128xbf16>
    %c1536 = arith.constant 1536 : index
    %c0_34 = arith.constant 0 : index
    %77 = vector.load %arg4[%c1536, %c0_34] : memref<2048x256xbf16, #tpu.memory_space<vmem>>, vector<128x256xbf16>
    %cst_35 = arith.constant dense<0.000000e+00> : vector<8x256xf32>
    %78 = tpu.matmul %76, %77, %cst_35 {dimension_numbers = #tpu.dot_dimension_numbers<[1], [0], [0], [1], [0, 0, 1, 1], [], []>} : vector<8x128xbf16>, vector<128x256xbf16>, vector<8x256xf32> -> vector<8x256xf32>
    %79 = arith.addf %74, %78 : vector<8x256xf32>
    %80 = vector.extract_strided_slice %13 {offsets = [104, 0], sizes = [8, 128], strides = [1, 1]} : vector<128x128xf32> to vector<8x128xf32>
    %81 = arith.truncf %80 : vector<8x128xf32> to vector<8x128xbf16>
    %c1664 = arith.constant 1664 : index
    %c0_36 = arith.constant 0 : index
    %82 = vector.load %arg4[%c1664, %c0_36] : memref<2048x256xbf16, #tpu.memory_space<vmem>>, vector<128x256xbf16>
    %cst_37 = arith.constant dense<0.000000e+00> : vector<8x256xf32>
    %83 = tpu.matmul %81, %82, %cst_37 {dimension_numbers = #tpu.dot_dimension_numbers<[1], [0], [0], [1], [0, 0, 1, 1], [], []>} : vector<8x128xbf16>, vector<128x256xbf16>, vector<8x256xf32> -> vector<8x256xf32>
    %84 = arith.addf %79, %83 : vector<8x256xf32>
    %85 = vector.extract_strided_slice %13 {offsets = [112, 0], sizes = [8, 128], strides = [1, 1]} : vector<128x128xf32> to vector<8x128xf32>
    %86 = arith.truncf %85 : vector<8x128xf32> to vector<8x128xbf16>
    %c1792 = arith.constant 1792 : index
    %c0_38 = arith.constant 0 : index
    %87 = vector.load %arg4[%c1792, %c0_38] : memref<2048x256xbf16, #tpu.memory_space<vmem>>, vector<128x256xbf16>
    %cst_39 = arith.constant dense<0.000000e+00> : vector<8x256xf32>
    %88 = tpu.matmul %86, %87, %cst_39 {dimension_numbers = #tpu.dot_dimension_numbers<[1], [0], [0], [1], [0, 0, 1, 1], [], []>} : vector<8x128xbf16>, vector<128x256xbf16>, vector<8x256xf32> -> vector<8x256xf32>
    %89 = arith.addf %84, %88 : vector<8x256xf32>
    %90 = vector.extract_strided_slice %13 {offsets = [120, 0], sizes = [8, 128], strides = [1, 1]} : vector<128x128xf32> to vector<8x128xf32>
    %91 = arith.truncf %90 : vector<8x128xf32> to vector<8x128xbf16>
    %c1920 = arith.constant 1920 : index
    %c0_40 = arith.constant 0 : index
    %92 = vector.load %arg4[%c1920, %c0_40] : memref<2048x256xbf16, #tpu.memory_space<vmem>>, vector<128x256xbf16>
    %cst_41 = arith.constant dense<0.000000e+00> : vector<8x256xf32>
    %93 = tpu.matmul %91, %92, %cst_41 {dimension_numbers = #tpu.dot_dimension_numbers<[1], [0], [0], [1], [0, 0, 1, 1], [], []>} : vector<8x128xbf16>, vector<128x256xbf16>, vector<8x256xf32> -> vector<8x256xf32>
    %94 = arith.addf %89, %93 : vector<8x256xf32>
    %c0_42 = arith.constant 0 : index
    %c0_43 = arith.constant 0 : index
    %95 = vector.load %arg5[%c0_42, %c0_43] : memref<2x256xf32, #tpu.memory_space<vmem>>, vector<1x256xf32>
    %96 = vector.broadcast %95 : vector<1x256xf32> to vector<8x256xf32>
    %97 = arith.mulf %94, %96 : vector<8x256xf32>
    %c1_44 = arith.constant 1 : index
    %c0_45 = arith.constant 0 : index
    %98 = vector.load %arg5[%c1_44, %c0_45] : memref<2x256xf32, #tpu.memory_space<vmem>>, vector<1x256xf32>
    %99 = vector.broadcast %98 : vector<1x256xf32> to vector<8x256xf32>
    %100 = arith.addf %97, %99 : vector<8x256xf32>
    %cst_46 = arith.constant 0.000000e+00 : f32
    %101 = vector.broadcast %cst_46 : f32 to vector<8x256xf32>
    %102 = arith.cmpf oge, %100, %101 : vector<8x256xf32>
    %cst_47 = arith.constant 2.000000e-01 : f32
    %103 = vector.broadcast %cst_47 : f32 to vector<8x256xf32>
    %104 = arith.mulf %103, %100 : vector<8x256xf32>
    %105 = arith.select %102, %100, %104 : vector<8x256xi1>, vector<8x256xf32>
    %106 = tpu.iota {dimensions = array<i32: 0>} : vector<8x8xi32>
    %107 = tpu.iota {dimensions = array<i32: 1>} : vector<8x8xi32>
    %cst_48 = arith.constant 0.000000e+00 : f32
    %108 = vector.broadcast %cst_48 : f32 to vector<8x128xf32>
    %c0_i32 = arith.constant 0 : i32
    %109 = vector.broadcast %c0_i32 : i32 to vector<8x8xi32>
    %110 = arith.addi %106, %109 : vector<8x8xi32>
    %111 = arith.cmpi eq, %107, %110 : vector<8x8xi32>
    %c2_i32 = arith.constant 2 : i32
    %112 = vector.broadcast %c2_i32 : i32 to vector<8x8xi32>
    %113 = arith.cmpi slt, %106, %112 : vector<8x8xi32>
    %114 = arith.andi %111, %113 : vector<8x8xi1>
    %115 = arith.extui %114 : vector<8x8xi1> to vector<8x8xi32>
    %116 = arith.sitofp %115 : vector<8x8xi32> to vector<8x8xf32>
    %cst_49 = arith.constant dense<0.000000e+00> : vector<8x256xf32>
    %117 = tpu.matmul %116, %105, %cst_49 {dimension_numbers = #tpu.dot_dimension_numbers<[1], [0], [0], [1], [0, 0, 1, 1], [], []>} : vector<8x8xf32>, vector<8x256xf32>, vector<8x256xf32> -> vector<8x256xf32>
    %c0_50 = arith.constant 0 : index
    %c0_51 = arith.constant 0 : index
    %118 = vector.load %arg6[%c0_50, %c0_51] : memref<1024x128xbf16, #tpu.memory_space<vmem>>, vector<256x128xbf16>
    %119 = arith.truncf %117 : vector<8x256xf32> to vector<8x256xbf16>
    %cst_52 = arith.constant dense<0.000000e+00> : vector<8x128xf32>
    %120 = tpu.matmul %119, %118, %cst_52 {dimension_numbers = #tpu.dot_dimension_numbers<[1], [0], [0], [1], [0, 0, 1, 1], [], []>} : vector<8x256xbf16>, vector<256x128xbf16>, vector<8x128xf32> -> vector<8x128xf32>
    %121 = arith.addf %108, %120 : vector<8x128xf32>
    %c2_i32_53 = arith.constant 2 : i32
    %122 = vector.broadcast %c2_i32_53 : i32 to vector<8x8xi32>
    %123 = arith.addi %106, %122 : vector<8x8xi32>
    %124 = arith.cmpi eq, %107, %123 : vector<8x8xi32>
    %c2_i32_54 = arith.constant 2 : i32
    %125 = vector.broadcast %c2_i32_54 : i32 to vector<8x8xi32>
    %126 = arith.cmpi slt, %106, %125 : vector<8x8xi32>
    %127 = arith.andi %124, %126 : vector<8x8xi1>
    %128 = arith.extui %127 : vector<8x8xi1> to vector<8x8xi32>
    %129 = arith.sitofp %128 : vector<8x8xi32> to vector<8x8xf32>
    %cst_55 = arith.constant dense<0.000000e+00> : vector<8x256xf32>
    %130 = tpu.matmul %129, %105, %cst_55 {dimension_numbers = #tpu.dot_dimension_numbers<[1], [0], [0], [1], [0, 0, 1, 1], [], []>} : vector<8x8xf32>, vector<8x256xf32>, vector<8x256xf32> -> vector<8x256xf32>
    %c256_56 = arith.constant 256 : index
    %c0_57 = arith.constant 0 : index
    %131 = vector.load %arg6[%c256_56, %c0_57] : memref<1024x128xbf16, #tpu.memory_space<vmem>>, vector<256x128xbf16>
    %132 = arith.truncf %130 : vector<8x256xf32> to vector<8x256xbf16>
    %cst_58 = arith.constant dense<0.000000e+00> : vector<8x128xf32>
    %133 = tpu.matmul %132, %131, %cst_58 {dimension_numbers = #tpu.dot_dimension_numbers<[1], [0], [0], [1], [0, 0, 1, 1], [], []>} : vector<8x256xbf16>, vector<256x128xbf16>, vector<8x128xf32> -> vector<8x128xf32>
    %134 = arith.addf %121, %133 : vector<8x128xf32>
    %c4_i32 = arith.constant 4 : i32
    %135 = vector.broadcast %c4_i32 : i32 to vector<8x8xi32>
    %136 = arith.addi %106, %135 : vector<8x8xi32>
    %137 = arith.cmpi eq, %107, %136 : vector<8x8xi32>
    %c2_i32_59 = arith.constant 2 : i32
    %138 = vector.broadcast %c2_i32_59 : i32 to vector<8x8xi32>
    %139 = arith.cmpi slt, %106, %138 : vector<8x8xi32>
    %140 = arith.andi %137, %139 : vector<8x8xi1>
    %141 = arith.extui %140 : vector<8x8xi1> to vector<8x8xi32>
    %142 = arith.sitofp %141 : vector<8x8xi32> to vector<8x8xf32>
    %cst_60 = arith.constant dense<0.000000e+00> : vector<8x256xf32>
    %143 = tpu.matmul %142, %105, %cst_60 {dimension_numbers = #tpu.dot_dimension_numbers<[1], [0], [0], [1], [0, 0, 1, 1], [], []>} : vector<8x8xf32>, vector<8x256xf32>, vector<8x256xf32> -> vector<8x256xf32>
    %c512_61 = arith.constant 512 : index
    %c0_62 = arith.constant 0 : index
    %144 = vector.load %arg6[%c512_61, %c0_62] : memref<1024x128xbf16, #tpu.memory_space<vmem>>, vector<256x128xbf16>
    %145 = arith.truncf %143 : vector<8x256xf32> to vector<8x256xbf16>
    %cst_63 = arith.constant dense<0.000000e+00> : vector<8x128xf32>
    %146 = tpu.matmul %145, %144, %cst_63 {dimension_numbers = #tpu.dot_dimension_numbers<[1], [0], [0], [1], [0, 0, 1, 1], [], []>} : vector<8x256xbf16>, vector<256x128xbf16>, vector<8x128xf32> -> vector<8x128xf32>
    %147 = arith.addf %134, %146 : vector<8x128xf32>
    %c6_i32 = arith.constant 6 : i32
    %148 = vector.broadcast %c6_i32 : i32 to vector<8x8xi32>
    %149 = arith.addi %106, %148 : vector<8x8xi32>
    %150 = arith.cmpi eq, %107, %149 : vector<8x8xi32>
    %c2_i32_64 = arith.constant 2 : i32
    %151 = vector.broadcast %c2_i32_64 : i32 to vector<8x8xi32>
    %152 = arith.cmpi slt, %106, %151 : vector<8x8xi32>
    %153 = arith.andi %150, %152 : vector<8x8xi1>
    %154 = arith.extui %153 : vector<8x8xi1> to vector<8x8xi32>
    %155 = arith.sitofp %154 : vector<8x8xi32> to vector<8x8xf32>
    %cst_65 = arith.constant dense<0.000000e+00> : vector<8x256xf32>
    %156 = tpu.matmul %155, %105, %cst_65 {dimension_numbers = #tpu.dot_dimension_numbers<[1], [0], [0], [1], [0, 0, 1, 1], [], []>} : vector<8x8xf32>, vector<8x256xf32>, vector<8x256xf32> -> vector<8x256xf32>
    %c768_66 = arith.constant 768 : index
    %c0_67 = arith.constant 0 : index
    %157 = vector.load %arg6[%c768_66, %c0_67] : memref<1024x128xbf16, #tpu.memory_space<vmem>>, vector<256x128xbf16>
    %158 = arith.truncf %156 : vector<8x256xf32> to vector<8x256xbf16>
    %cst_68 = arith.constant dense<0.000000e+00> : vector<8x128xf32>
    %159 = tpu.matmul %158, %157, %cst_68 {dimension_numbers = #tpu.dot_dimension_numbers<[1], [0], [0], [1], [0, 0, 1, 1], [], []>} : vector<8x256xbf16>, vector<256x128xbf16>, vector<8x128xf32> -> vector<8x128xf32>
    %160 = arith.addf %147, %159 : vector<8x128xf32>
    %c0_69 = arith.constant 0 : index
    %c0_70 = arith.constant 0 : index
    %161 = vector.load %arg7[%c0_69, %c0_70] : memref<8x128xf32, #tpu.memory_space<vmem>>, vector<8x128xf32>
    tpu.vector_store %arg7[%c0_69, %c0_70], %160 {strides = array<i32>} : memref<8x128xf32, #tpu.memory_space<vmem>>, vector<8x128xf32>,
    return
  }
  func.func @transform_0(%arg0: i32) -> (i32, i32) {
    %c0_i32 = arith.constant 0 : i32
    %c0_i32_0 = arith.constant 0 : i32
    %c0_i32_1 = arith.constant 0 : i32
    return %c0_i32, %c0_i32_0 : i32, i32
  }
  func.func @transform_1(%arg0: i32) -> (i32, i32) {
    %c0_i32 = arith.constant 0 : i32
    %c0_i32_0 = arith.constant 0 : i32
    %c0_i32_1 = arith.constant 0 : i32
    return %c0_i32, %c0_i32_0 : i32, i32
  }
  func.func @transform_2(%arg0: i32) -> (i32, i32) {
    %c0_i32 = arith.constant 0 : i32
    %c0_i32_0 = arith.constant 0 : i32
    %c0_i32_1 = arith.constant 0 : i32
    return %c0_i32, %c0_i32_0 : i32, i32
  }
  func.func @transform_3(%arg0: i32) -> (i32, i32) {
    %c0_i32 = arith.constant 0 : i32
    %c0_i32_0 = arith.constant 0 : i32
    %c0_i32_1 = arith.constant 0 : i32
    return %c0_i32, %c0_i32_0 : i32, i32
  }
  func.func @transform_4(%arg0: i32) -> (i32, i32) {
    %c0_i32 = arith.constant 0 : i32
    %c0_i32_0 = arith.constant 0 : i32
    %c0_i32_1 = arith.constant 0 : i32
    return %c0_i32, %c0_i32_0 : i32, i32
  }
  func.func @transform_5(%arg0: i32) -> (i32, i32) {
    %c0_i32 = arith.constant 0 : i32
    %c0_i32_0 = arith.constant 0 : i32
    %c0_i32_1 = arith.constant 0 : i32
    return %c0_i32, %c0_i32_0 : i32, i32
  }
  func.func @transform_6(%arg0: i32) -> (i32, i32) {
    %c0_i32 = arith.constant 0 : i32
    %c0_i32_0 = arith.constant 0 : i32
    %c0_i32_1 = arith.constant 0 : i32
    return %c0_i32, %c0_i32_0 : i32, i32
  }
}

</mosaic_0001>

<llo_original>
// kernel: encoder_forward.2
$region0: #{encoder_forward.2}
  #allocation0 [shape = 'u32[]', space=smem, size = 0x4, offset = 0x4, fixed_abs, tag = 'smem constant byte address 0x4 - core index']
  #allocation1 [shape = 'u32[144,128]{1,0:T(1,128)}', space=vmem, size = 0x12000, scoped, tag = 'internal scratch']
  %s0 = inlined_call_operand.vmem [shape: bf16[800,128], index: 0, kind: input, shape index: {}]
  %s1 = inlined_call_operand.vmem [shape: bf16[128,128], index: 1, kind: input, shape index: {}]
  %s2 = inlined_call_operand.vmem [shape: f32[2,128], index: 2, kind: input, shape index: {}]
  %s3 = inlined_call_operand.vmem [shape: f32[800,128], index: 3, kind: output, shape index: {}]
  %s4 = sld [smem:[#allocation0]]
  $region45: #{encoder_forward.2} parent=0
    _
  %s6 = ssub.s32 1, %s4
  %s7 = scalar_select 0, %s6, %s4
  loop: start=0, step=1, limit=4
  $region2: #{encoder_forward.2} parent=0 // loop_pre_header
    _
  $region3: #{encoder_forward.2} parent=0 // loop_header
    %s9 = sphi 0, %s13
    %p10 = scmp.ge.s32.totalorder %s9, 4
    %s19 = sphi 0, %s21
    %s22 = sphi 0, %s19
    %s23 = sphi 0, %s22
    %s39 = sphi 0, %s23
    %s43 = sphi 0, %s43
    %s45 = sphi 0, %s43
    %s46 = sphi 0, %s45
    %s60 = sphi 0, %s46
    %s64 = sphi 0, %s64
    %s66 = sphi 0, %s64
    %s67 = sphi 0, %s66
    %s81 = sphi 0, %s67
    %s87 = sphi 0, %s89
    %s90 = sphi 0, %s87
    %s91 = sphi 0, %s90
    %s107 = sphi 0, %s91
  $region4: #{encoder_forward.2} parent=0 // loop_header_branch
    %12 = sbr.rel (%p10) target = $region8
  $region5: #{encoder_forward.2} parent=0 // loop_body
    %s14 = ssub.s32 %s9, 1
    %s15 = ssub.s32 %s9, 2
    %s16 = sadd.s32 %s9, 1
    %s17 = ssub.s32 %s9, %s16
    %p18 = scmp.eq.s32.totalorder %s17, 0
    %s20 = sadd.s32 %s19, 1
    %s21 = scalar_select %p18, %s19, %s20
    %p24 = pneg %p18
    %p25 = scmp.eq.s32.totalorder %s9, 1
    %p26 = por %p24, %p25
    %p27 = scmp.ne.s32.totalorder %s19, %s22
    %p28 = scmp.eq.s32.totalorder %s9, 0
    %p29 = por %p27, %p28
    %p30 = scmp.ne.s32.totalorder %s19, %s22
    %p31 = scmp.eq.s32.totalorder %s14, 1
    %p32 = por %p30, %p31
    %p33 = scmp.ne.s32.totalorder %s22, %s23
    %p34 = scmp.eq.s32.totalorder %s14, 0
    %p35 = por %p33, %p34
    %p36 = scmp.ne.s32.totalorder %s22, %s23
    %p37 = scmp.eq.s32.totalorder %s15, 1
    %p38 = por %p36, %p37
    %p40 = scmp.ne.s32.totalorder %s23, %s39
    %p41 = scmp.eq.s32.totalorder %s15, 0
    %p42 = por %p40, %p41
    %s44 = sadd.s32 %s43, 1
    %p47 = scmp.eq.s32.totalorder %s9, 1
    %p48 = scmp.ne.s32.totalorder %s43, %s45
    %p49 = scmp.eq.s32.totalorder %s9, 0
    %p50 = por %p48, %p49
    %p51 = scmp.ne.s32.totalorder %s43, %s45
    %p52 = scmp.eq.s32.totalorder %s14, 1
    %p53 = por %p51, %p52
    %p54 = scmp.ne.s32.totalorder %s45, %s46
    %p55 = scmp.eq.s32.totalorder %s14, 0
    %p56 = por %p54, %p55
    %p57 = scmp.ne.s32.totalorder %s45, %s46
    %p58 = scmp.eq.s32.totalorder %s15, 1
    %p59 = por %p57, %p58
    %p61 = scmp.ne.s32.totalorder %s46, %s60
    %p62 = scmp.eq.s32.totalorder %s15, 0
    %p63 = por %p61, %p62
    %s65 = sadd.s32 %s64, 1
    %p68 = scmp.eq.s32.totalorder %s9, 1
    %p69 = scmp.ne.s32.totalorder %s64, %s66
    %p70 = scmp.eq.s32.totalorder %s9, 0
    %p71 = por %p69, %p70
    %p72 = scmp.ne.s32.totalorder %s64, %s66
    %p73 = scmp.eq.s32.totalorder %s14, 1
    %p74 = por %p72, %p73
    %p75 = scmp.ne.s32.totalorder %s66, %s67
    %p76 = scmp.eq.s32.totalorder %s14, 0
    %p77 = por %p75, %p76
    %p78 = scmp.ne.s32.totalorder %s66, %s67
    %p79 = scmp.eq.s32.totalorder %s15, 1
    %p80 = por %p78, %p79
    %p82 = scmp.ne.s32.totalorder %s67, %s81
    %p83 = scmp.eq.s32.totalorder %s15, 0
    %p84 = por %p82, %p83
    %s85 = ssub.s32 %s9, %s16
    %p86 = scmp.eq.s32.totalorder %s85, 0
    %s88 = sadd.s32 %s87, 1
    %s89 = scalar_select %p86, %s87, %s88
    %p92 = pneg %p86
    %p93 = scmp.eq.s32.totalorder %s9, 1
    %p94 = por %p92, %p93
    %p95 = scmp.ne.s32.totalorder %s87, %s90
    %p96 = scmp.eq.s32.totalorder %s9, 0
    %p97 = por %p95, %p96
    %p98 = scmp.ne.s32.totalorder %s87, %s90
    %p99 = scmp.eq.s32.totalorder %s14, 1
    %p100 = por %p98, %p99
    %p101 = scmp.ne.s32.totalorder %s90, %s91
    %p102 = scmp.eq.s32.totalorder %s14, 0
    %p103 = por %p101, %p102
    %p104 = scmp.ne.s32.totalorder %s90, %s91
    %p105 = scmp.eq.s32.totalorder %s15, 1
    %p106 = por %p104, %p105
    %p108 = scmp.ne.s32.totalorder %s91, %s107
    %p109 = scmp.eq.s32.totalorder %s15, 0
    %p110 = por %p108, %p109
    %p111 = scmp.le.s32.totalorder 1, %s9
    %p112 = scmp.lt.s32.totalorder %s9, 3
    %p113 = pnand %p111, %p112
    %p114 = pneg %p113
    // Predicated region
    $region9: #{encoder_forward.2} parent=5 // pred_check
      _
    $region10: #{encoder_forward.2} parent=5 // pred_check_branch
      %116 = sbr.rel (%p113) target = $region12
    $region11: #{encoder_forward.2} parent=5 // pred_region
      %s117 = ssub.s32 %s9, 1
      // Predicated region
      $region13: #{encoder_forward.2} parent=11 // pred_check
        %p118 = pneg %p56
      $region14: #{encoder_forward.2} parent=11 // pred_check_branch
        %120 = sbr.rel (%p118) target = $region16
      $region15: #{encoder_forward.2} parent=11 // pred_region
        _
      $region16: #{encoder_forward.2} parent=11 // pred_fallthru
        _
      // Predicated region
      $region17: #{encoder_forward.2} parent=11 // pred_check
        %p121 = pneg %p77
      $region18: #{encoder_forward.2} parent=11 // pred_check_branch
        %123 = sbr.rel (%p121) target = $region20
      $region19: #{encoder_forward.2} parent=11 // pred_region
        _
      $region20: #{encoder_forward.2} parent=11 // pred_fallthru
        _
    $region12: #{encoder_forward.2} parent=5 // pred_fallthru
      _
    %p124 = scmp.lt.s32.totalorder %s9, 2
    // Predicated region
    $region21: #{encoder_forward.2} parent=5 // pred_check
      %p125 = pneg %p124
    $region22: #{encoder_forward.2} parent=5 // pred_check_branch
      %127 = sbr.rel (%p125) target = $region24
    $region23: #{encoder_forward.2} parent=5 // pred_region
      // Predicated region
      $region25: #{encoder_forward.2} parent=23 // pred_check
        %p128 = pneg %p29
      $region26: #{encoder_forward.2} parent=23 // pred_check_branch
        %130 = sbr.rel (%p128) target = $region28
      $region27: #{encoder_forward.2} parent=23 // pred_region
        %s131 = smul.u32 50, %s9
        %p132 = scmp.lt.s32.totalorder %s131, 99
        %s133 = scalar_select %p132, %s131, 99
        %s134 = smul.addr %s133, 4
        %s135 = scalar_lea.vmem %s0, %s134
        %s136 = smul.u32 50, %s9
      $region28: #{encoder_forward.2} parent=23 // pred_fallthru
        _
    $region24: #{encoder_forward.2} parent=5 // pred_fallthru
      _
    %p137 = scmp.le.s32.totalorder 1, %s9
    %p138 = scmp.lt.s32.totalorder %s9, 3
    %p139 = pnand %p137, %p138
    %p140 = pneg %p139
    // Predicated region
    $region29: #{encoder_forward.2} parent=5 // pred_check
      _
    $region30: #{encoder_forward.2} parent=5 // pred_check_branch
      %142 = sbr.rel (%p139) target = $region32
    $region31: #{encoder_forward.2} parent=5 // pred_region
      %s143 = ssub.s32 %s9, 1
      %s144 = smul.u32 50, %s14
      %p145 = scmp.lt.s32.totalorder %s144, 99
      %s146 = scalar_select %p145, %s144, 99
      %s147 = smul.addr %s146, 4
      %s148 = scalar_lea.vmem %s0, %s147
      %p149 = pneg %p35
      %p150 = pneg %p32
      %p151 = pneg %p56
      %p152 = pneg %p53
      %p153 = pneg %p77
      %p154 = pneg %p74
      %p155 = pneg %p103
      %p156 = pneg %p100
      %s157 = smul.u32 50, %s14
      %p158 = scmp.lt.s32.totalorder %s157, 99
      %s159 = scalar_select %p158, %s157, 99
      %s160 = smul.addr %s159, 8
      %s161 = scalar_lea.vmem %s3, %s160
      %s162 = smul.u32 50, %s14
      %p163 = scmp.lt.s32.totalorder %s162, 99
      %s164 = scalar_select %p163, %s162, 99
      %s165 = smul.addr %s164, 4
      %s166 = scalar_lea.vmem %s0, %s165
      %s167 = smul.u32 50, %s14
      %s168 = smul.u32 50, %s14
      %p169 = scmp.lt.s32.totalorder %s168, 99
      %s170 = scalar_select %p169, %s168, 99
      %s171 = smul.addr %s170, 8
      %s172 = scalar_lea.vmem %s3, %s171
      %s173 = smul.u32 50, %s14
      %v175 = vld [vmem:[%s166] sm:$0xf]
      %v176 = vld [vmem:[%s166 + $0x4] sm:$0xf]
      %v177 = vld [vmem:[%s166 + $0x8] sm:$0xf]
      %v178 = vld [vmem:[%s166 + $0xc] sm:$0xf]
      %v179 = vld [vmem:[%s166 + $0x10] sm:$0xf]
      %v180 = vld [vmem:[%s166 + $0x14] sm:$0xf]
      %v181 = vld [vmem:[%s166 + $0x18] sm:$0xf]
      %v182 = vld [vmem:[%s166 + $0x1c] sm:$0xf]
      %v183 = vld [vmem:[%s166 + $0x20] sm:$0xf]
      %v184 = vld [vmem:[%s166 + $0x24] sm:$0xf]
      %v185 = vld [vmem:[%s166 + $0x28] sm:$0xf]
      %v186 = vld [vmem:[%s166 + $0x2c] sm:$0xf]
      %v187 = vld [vmem:[%s166 + $0x30] sm:$0xf]
      %v188 = vld [vmem:[%s166 + $0x34] sm:$0xf]
      %v189 = vld [vmem:[%s166 + $0x38] sm:$0xf]
      %v190 = vld [vmem:[%s166 + $0x3c] sm:$0xf]
      %v191 = vld [vmem:[%s166 + $0x40] sm:$0xf]
      %v192 = vld [vmem:[%s166 + $0x44] sm:$0xf]
      %v193 = vld [vmem:[%s166 + $0x48] sm:$0xf]
      %v194 = vld [vmem:[%s166 + $0x4c] sm:$0xf]
      %v195 = vld [vmem:[%s166 + $0x50] sm:$0xf]
      %v196 = vld [vmem:[%s166 + $0x54] sm:$0xf]
      %v197 = vld [vmem:[%s166 + $0x58] sm:$0xf]
      %v198 = vld [vmem:[%s166 + $0x5c] sm:$0xf]
      %v199 = vld [vmem:[%s166 + $0x60] sm:$0xf]
      %v200 = vld [vmem:[%s166 + $0x64] sm:$0xf]
      %v201 = vld [vmem:[%s166 + $0x68] sm:$0xf]
      %v202 = vld [vmem:[%s166 + $0x6c] sm:$0xf]
      %v203 = vld [vmem:[%s166 + $0x70] sm:$0xf]
      %v204 = vld [vmem:[%s166 + $0x74] sm:$0xf]
      %v205 = vld [vmem:[%s166 + $0x78] sm:$0xf]
      %v206 = vld [vmem:[%s166 + $0x7c] sm:$0xf]
      %v207 = vld [vmem:[%s166 + $0x80] sm:$0xf]
      %v208 = vld [vmem:[%s166 + $0x84] sm:$0xf]
      %v209 = vld [vmem:[%s166 + $0x88] sm:$0xf]
      %v210 = vld [vmem:[%s166 + $0x8c] sm:$0xf]
      %v211 = vld [vmem:[%s166 + $0x90] sm:$0xf]
      %v212 = vld [vmem:[%s166 + $0x94] sm:$0xf]
      %v213 = vld [vmem:[%s166 + $0x98] sm:$0xf]
      %v214 = vld [vmem:[%s166 + $0x9c] sm:$0xf]
      %v215 = vld [vmem:[%s166 + $0xa0] sm:$0xf]
      %v216 = vld [vmem:[%s166 + $0xa4] sm:$0xf]
      %v217 = vld [vmem:[%s166 + $0xa8] sm:$0xf]
      %v218 = vld [vmem:[%s166 + $0xac] sm:$0xf]
      %v219 = vld [vmem:[%s166 + $0xb0] sm:$0xf]
      %v220 = vld [vmem:[%s166 + $0xb4] sm:$0xf]
      %v221 = vld [vmem:[%s166 + $0xb8] sm:$0xf]
      %v222 = vld [vmem:[%s166 + $0xbc] sm:$0xf]
      %v223 = vld [vmem:[%s166 + $0xc0] sm:$0xf]
      %v224 = vld [vmem:[%s166 + $0xc4] sm:$0xf]
      %v225 = vld [vmem:[%s1] sm:$0xf]
      %v226 = vld [vmem:[%s1 + $0x4] sm:$0xf]
      %v227 = vld [vmem:[%s1 + $0x8] sm:$0xf]
      %v228 = vld [vmem:[%s1 + $0xc] sm:$0xf]
      %v229 = vld [vmem:[%s1 + $0x10] sm:$0xf]
      %v230 = vld [vmem:[%s1 + $0x14] sm:$0xf]
      %v231 = vld [vmem:[%s1 + $0x18] sm:$0xf]
      %v232 = vld [vmem:[%s1 + $0x1c] sm:$0xf]
      %v233 = vld [vmem:[%s1 + $0x20] sm:$0xf]
      %v234 = vld [vmem:[%s1 + $0x24] sm:$0xf]
      %v235 = vld [vmem:[%s1 + $0x28] sm:$0xf]
      %v236 = vld [vmem:[%s1 + $0x2c] sm:$0xf]
      %v237 = vld [vmem:[%s1 + $0x30] sm:$0xf]
      %v238 = vld [vmem:[%s1 + $0x34] sm:$0xf]
      %v239 = vld [vmem:[%s1 + $0x38] sm:$0xf]
      %v240 = vld [vmem:[%s1 + $0x3c] sm:$0xf]
      %v291 = vunpack.c.l.b16 %v175
      %v292 = vunpack.c.l.b16 %v176
      %v293 = vunpack.c.l.b16 %v177
      %v294 = vunpack.c.l.b16 %v178
      %v295 = vunpack.c.l.b16 %v179
      %v296 = vunpack.c.l.b16 %v180
      %v297 = vunpack.c.l.b16 %v181
      %v298 = vunpack.c.l.b16 %v182
      %v299 = vunpack.c.l.b16 %v183
      %v300 = vunpack.c.l.b16 %v184
      %v301 = vunpack.c.l.b16 %v185
      %v302 = vunpack.c.l.b16 %v186
      %v303 = vunpack.c.l.b16 %v187
      %v304 = vunpack.c.l.b16 %v188
      %v305 = vunpack.c.l.b16 %v189
      %v306 = vunpack.c.l.b16 %v190
      %v307 = vunpack.c.l.b16 %v191
      %v308 = vunpack.c.l.b16 %v192
      %v309 = vunpack.c.l.b16 %v193
      %v310 = vunpack.c.l.b16 %v194
      %v311 = vunpack.c.l.b16 %v195
      %v312 = vunpack.c.l.b16 %v196
      %v313 = vunpack.c.l.b16 %v197
      %v314 = vunpack.c.l.b16 %v198
      %v315 = vunpack.c.l.b16 %v199
      %v316 = vunpack.c.l.b16 %v200
      %v317 = vunpack.c.l.b16 %v201
      %v318 = vunpack.c.l.b16 %v202
      %v319 = vunpack.c.l.b16 %v203
      %v320 = vunpack.c.l.b16 %v204
      %v321 = vunpack.c.l.b16 %v205
      %v322 = vunpack.c.l.b16 %v206
      %v323 = vunpack.c.l.b16 %v207
      %v324 = vunpack.c.l.b16 %v208
      %v325 = vunpack.c.l.b16 %v209
      %v326 = vunpack.c.l.b16 %v210
      %v327 = vunpack.c.l.b16 %v211
      %v328 = vunpack.c.l.b16 %v212
      %v329 = vunpack.c.l.b16 %v213
      %v330 = vunpack.c.l.b16 %v214
      %v331 = vunpack.c.l.b16 %v215
      %v332 = vunpack.c.l.b16 %v216
      %v333 = vunpack.c.l.b16 %v217
      %v334 = vunpack.c.l.b16 %v218
      %v335 = vunpack.c.l.b16 %v219
      %v336 = vunpack.c.l.b16 %v220
      %v337 = vunpack.c.l.b16 %v221
      %v338 = vunpack.c.l.b16 %v222
      %v339 = vunpack.c.l.b16 %v223
      %v340 = vunpack.c.l.b16 %v224
      %v341 = vpack.c.b16 %v292, %v291
      %v342 = vpack.c.b16 %v294, %v293
      %v343 = vpack.c.b16 %v296, %v295
      %v344 = vpack.c.b16 %v298, %v297
      %v345 = vpack.c.b16 %v300, %v299
      %v346 = vpack.c.b16 %v302, %v301
      %v347 = vpack.c.b16 %v304, %v303
      %v348 = vpack.c.b16 %v306, %v305
      %v349 = vpack.c.b16 %v308, %v307
      %v350 = vpack.c.b16 %v310, %v309
      %v351 = vpack.c.b16 %v312, %v311
      %v352 = vpack.c.b16 %v314, %v313
      %v353 = vpack.c.b16 %v316, %v315
      %v354 = vpack.c.b16 %v318, %v317
      %v355 = vpack.c.b16 %v320, %v319
      %v356 = vpack.c.b16 %v322, %v321
      %v357 = vpack.c.b16 %v324, %v323
      %v358 = vpack.c.b16 %v326, %v325
      %v359 = vpack.c.b16 %v328, %v327
      %v360 = vpack.c.b16 %v330, %v329
      %v361 = vpack.c.b16 %v332, %v331
      %v362 = vpack.c.b16 %v334, %v333
      %v363 = vpack.c.b16 %v336, %v335
      %v364 = vpack.c.b16 %v338, %v337
      %v365 = vpack.c.b16 %v340, %v339
      %v407 = vunpack.c.l.b16 %v225
      %v408 = vunpack.c.l.b16 %v226
      %v409 = vunpack.c.l.b16 %v227
      %v410 = vunpack.c.l.b16 %v228
      %v411 = vunpack.c.l.b16 %v229
      %v412 = vunpack.c.l.b16 %v230
      %v413 = vunpack.c.l.b16 %v231
      %v414 = vunpack.c.l.b16 %v232
      %v415 = vunpack.c.l.b16 %v233
      %v416 = vunpack.c.l.b16 %v234
      %v417 = vunpack.c.l.b16 %v235
      %v418 = vunpack.c.l.b16 %v236
      %v419 = vunpack.c.l.b16 %v237
      %v420 = vunpack.c.l.b16 %v238
      %v421 = vunpack.c.l.b16 %v239
      %v422 = vunpack.c.l.b16 %v240
      %v423 = vpack.c.b16 %v408, %v407
      %v424 = vpack.c.b16 %v410, %v409
      %v425 = vpack.c.b16 %v412, %v411
      %v426 = vpack.c.b16 %v414, %v413
      %v427 = vpack.c.b16 %v416, %v415
      %v428 = vpack.c.b16 %v418, %v417
      %v429 = vpack.c.b16 %v420, %v419
      %v430 = vpack.c.b16 %v422, %v421
      %439 = vmatprep.subr.bf16.mxu0 0
      %440 = vmatpush1.bf16.msra.mxu0 %v423
      %441 = vmatprep.subr.bf16.mxu0 0
      %442 = vmatpush1.bf16.msra.mxu0 %v424
      %443 = vmatprep.subr.bf16.mxu0 0
      %444 = vmatpush1.bf16.msra.mxu0 %v425
      %445 = vmatprep.subr.bf16.mxu0 0
      %446 = vmatpush1.bf16.msra.mxu0 %v426
      %447 = vmatprep.subr.bf16.mxu0 0
      %448 = vmatpush1.bf16.msra.mxu0 %v427
      %449 = vmatprep.subr.bf16.mxu0 0
      %450 = vmatpush1.bf16.msra.mxu0 %v428
      %451 = vmatprep.subr.bf16.mxu0 0
      %452 = vmatpush1.bf16.msra.mxu0 %v429
      %453 = vmatprep.subr.bf16.mxu0 0
      %454 = vmatpush1.bf16.msra.mxu0 %v430
      %455 = vmatprep.subr.bf16.mxu0 0
      %456 = vmatpush1.bf16.msra.mxu0 0
      %457 = vmatprep.subr.bf16.mxu0 0
      %458 = vmatpush1.bf16.msra.mxu0 0
      %459 = vmatprep.subr.bf16.mxu0 0
      %460 = vmatpush1.bf16.msra.mxu0 0
      %461 = vmatprep.subr.bf16.mxu0 0
      %462 = vmatpush1.bf16.msra.mxu0 0
      %463 = vmatprep.subr.bf16.mxu0 0
      %464 = vmatpush1.bf16.msra.mxu0 0
      %465 = vmatprep.subr.bf16.mxu0 0
      %466 = vmatpush1.bf16.msra.mxu0 0
      %467 = vmatprep.subr.bf16.mxu0 0
      %468 = vmatpush1.bf16.msra.mxu0 0
      %469 = vmatprep.subr.bf16.mxu0 0
      %470 = vmatpush1.bf16.msra.mxu0 0
      %471 = vmatprep.mubr.bf16.mxu0 0
      %472 = vmatmul.mubr.bf16.gmra.mrb[0].mxu0 %v341
      %v473 = vpop.f32.mrb[0].mxu0
      %v474 = vadd.f32 0.0, %v473
      %v475 = vpop.f32.mrb[0].mxu0
      %v476 = vpop.f32.mrb[0].mxu0
      %v477 = vadd.f32 0.0, %v476
      %v478 = vpop.f32.mrb[0].mxu0
      %479 = vmatprep.mubr.bf16.mxu0 0
      %480 = vmatmul.mubr.bf16.gmra.mrb[0].mxu0 %v342
      %v481 = vpop.f32.mrb[0].mxu0
      %v482 = vadd.f32 0.0, %v481
      %v483 = vpop.f32.mrb[0].mxu0
      %v484 = vpop.f32.mrb[0].mxu0
      %v485 = vadd.f32 0.0, %v484
      %v486 = vpop.f32.mrb[0].mxu0
      %487 = vmatprep.mubr.bf16.mxu0 0
      %488 = vmatmul.mubr.bf16.gmra.mrb[0].mxu0 %v343
      %v489 = vpop.f32.mrb[0].mxu0
      %v490 = vadd.f32 0.0, %v489
      %v491 = vpop.f32.mrb[0].mxu0
      %v492 = vpop.f32.mrb[0].mxu0
      %v493 = vadd.f32 0.0, %v492
      %v494 = vpop.f32.mrb[0].mxu0
      %495 = vmatprep.mubr.bf16.mxu0 0
      %496 = vmatmul.mubr.bf16.gmra.mrb[0].mxu0 %v344
      %v497 = vpop.f32.mrb[0].mxu0
      %v498 = vadd.f32 0.0, %v497
      %v499 = vpop.f32.mrb[0].mxu0
      %v500 = vpop.f32.mrb[0].mxu0
      %v501 = vadd.f32 0.0, %v500
      %v502 = vpop.f32.mrb[0].mxu0
      %503 = vmatprep.mubr.bf16.mxu0 0
      %504 = vmatmul.mubr.bf16.gmra.mrb[0].mxu0 %v345
      %v505 = vpop.f32.mrb[0].mxu0
      %v506 = vadd.f32 0.0, %v505
      %v507 = vpop.f32.mrb[0].mxu0
      %v508 = vpop.f32.mrb[0].mxu0
      %v509 = vadd.f32 0.0, %v508
      %v510 = vpop.f32.mrb[0].mxu0
      %511 = vmatprep.mubr.bf16.mxu0 0
      %512 = vmatmul.mubr.bf16.gmra.mrb[0].mxu0 %v346
      %v513 = vpop.f32.mrb[0].mxu0
      %v514 = vadd.f32 0.0, %v513
      %v515 = vpop.f32.mrb[0].mxu0
      %v516 = vpop.f32.mrb[0].mxu0
      %v517 = vadd.f32 0.0, %v516
      %v518 = vpop.f32.mrb[0].mxu0
      %519 = vmatprep.mubr.bf16.mxu0 0
      %520 = vmatmul.mubr.bf16.gmra.mrb[0].mxu0 %v347
      %v521 = vpop.f32.mrb[0].mxu0
      %v522 = vadd.f32 0.0, %v521
      %v523 = vpop.f32.mrb[0].mxu0
      %v524 = vpop.f32.mrb[0].mxu0
      %v525 = vadd.f32 0.0, %v524
      %v526 = vpop.f32.mrb[0].mxu0
      %527 = vmatprep.mubr.bf16.mxu0 0
      %528 = vmatmul.mubr.bf16.gmra.mrb[0].mxu0 %v348
      %v529 = vpop.f32.mrb[0].mxu0
      %v530 = vadd.f32 0.0, %v529
      %v531 = vpop.f32.mrb[0].mxu0
      %v532 = vpop.f32.mrb[0].mxu0
      %v533 = vadd.f32 0.0, %v532
      %v534 = vpop.f32.mrb[0].mxu0
      %535 = vmatprep.mubr.bf16.mxu0 0
      %536 = vmatmul.mubr.bf16.gmra.mrb[0].mxu0 %v349
      %v537 = vpop.f32.mrb[0].mxu0
      %v538 = vadd.f32 0.0, %v537
      %v539 = vpop.f32.mrb[0].mxu0
      %v540 = vpop.f32.mrb[0].mxu0
      %v541 = vadd.f32 0.0, %v540
      %v542 = vpop.f32.mrb[0].mxu0
      %543 = vmatprep.mubr.bf16.mxu0 0
      %544 = vmatmul.mubr.bf16.gmra.mrb[0].mxu0 %v350
      %v545 = vpop.f32.mrb[0].mxu0
      %v546 = vadd.f32 0.0, %v545
      %v547 = vpop.f32.mrb[0].mxu0
      %v548 = vpop.f32.mrb[0].mxu0
      %v549 = vadd.f32 0.0, %v548
      %v550 = vpop.f32.mrb[0].mxu0
      %551 = vmatprep.mubr.bf16.mxu0 0
      %552 = vmatmul.mubr.bf16.gmra.mrb[0].mxu0 %v351
      %v553 = vpop.f32.mrb[0].mxu0
      %v554 = vadd.f32 0.0, %v553
      %v555 = vpop.f32.mrb[0].mxu0
      %v556 = vpop.f32.mrb[0].mxu0
      %v557 = vadd.f32 0.0, %v556
      %v558 = vpop.f32.mrb[0].mxu0
      %559 = vmatprep.mubr.bf16.mxu0 0
      %560 = vmatmul.mubr.bf16.gmra.mrb[0].mxu0 %v352
      %v561 = vpop.f32.mrb[0].mxu0
      %v562 = vadd.f32 0.0, %v561
      %v563 = vpop.f32.mrb[0].mxu0
      %v564 = vpop.f32.mrb[0].mxu0
      %v565 = vadd.f32 0.0, %v564
      %v566 = vpop.f32.mrb[0].mxu0
      %567 = vmatprep.mubr.bf16.mxu0 0
      %568 = vmatmul.mubr.bf16.gmra.mrb[0].mxu0 %v353
      %v569 = vpop.f32.mrb[0].mxu0
      %v570 = vadd.f32 0.0, %v569
      %v571 = vpop.f32.mrb[0].mxu0
      %v572 = vpop.f32.mrb[0].mxu0
      %v573 = vadd.f32 0.0, %v572
      %v574 = vpop.f32.mrb[0].mxu0
      %575 = vmatprep.mubr.bf16.mxu0 0
      %576 = vmatmul.mubr.bf16.gmra.mrb[0].mxu0 %v354
      %v577 = vpop.f32.mrb[0].mxu0
      %v578 = vadd.f32 0.0, %v577
      %v579 = vpop.f32.mrb[0].mxu0
      %v580 = vpop.f32.mrb[0].mxu0
      %v581 = vadd.f32 0.0, %v580
      %v582 = vpop.f32.mrb[0].mxu0
      %583 = vmatprep.mubr.bf16.mxu0 0
      %584 = vmatmul.mubr.bf16.gmra.mrb[0].mxu0 %v355
      %v585 = vpop.f32.mrb[0].mxu0
      %v586 = vadd.f32 0.0, %v585
      %v587 = vpop.f32.mrb[0].mxu0
      %v588 = vpop.f32.mrb[0].mxu0
      %v589 = vadd.f32 0.0, %v588
      %v590 = vpop.f32.mrb[0].mxu0
      %591 = vmatprep.mubr.bf16.mxu0 0
      %592 = vmatmul.mubr.bf16.gmra.mrb[0].mxu0 %v356
      %v593 = vpop.f32.mrb[0].mxu0
      %v594 = vadd.f32 0.0, %v593
      %v595 = vpop.f32.mrb[0].mxu0
      %v596 = vpop.f32.mrb[0].mxu0
      %v597 = vadd.f32 0.0, %v596
      %v598 = vpop.f32.mrb[0].mxu0
      %599 = vmatprep.mubr.bf16.mxu0 0
      %600 = vmatmul.mubr.bf16.gmra.mrb[0].mxu0 %v357
      %v601 = vpop.f32.mrb[0].mxu0
      %v602 = vadd.f32 0.0, %v601
      %v603 = vpop.f32.mrb[0].mxu0
      %v604 = vpop.f32.mrb[0].mxu0
      %v605 = vadd.f32 0.0, %v604
      %v606 = vpop.f32.mrb[0].mxu0
      %607 = vmatprep.mubr.bf16.mxu0 0
      %608 = vmatmul.mubr.bf16.gmra.mrb[0].mxu0 %v358
      %v609 = vpop.f32.mrb[0].mxu0
      %v610 = vadd.f32 0.0, %v609
      %v611 = vpop.f32.mrb[0].mxu0
      %v612 = vpop.f32.mrb[0].mxu0
      %v613 = vadd.f32 0.0, %v612
      %v614 = vpop.f32.mrb[0].mxu0
      %615 = vmatprep.mubr.bf16.mxu0 0
      %616 = vmatmul.mubr.bf16.gmra.mrb[0].mxu0 %v359
      %v617 = vpop.f32.mrb[0].mxu0
      %v618 = vadd.f32 0.0, %v617
      %v619 = vpop.f32.mrb[0].mxu0
      %v620 = vpop.f32.mrb[0].mxu0
      %v621 = vadd.f32 0.0, %v620
      %v622 = vpop.f32.mrb[0].mxu0
      %623 = vmatprep.mubr.bf16.mxu0 0
      %624 = vmatmul.mubr.bf16.gmra.mrb[0].mxu0 %v360
      %v625 = vpop.f32.mrb[0].mxu0
      %v626 = vadd.f32 0.0, %v625
      %v627 = vpop.f32.mrb[0].mxu0
      %v628 = vpop.f32.mrb[0].mxu0
      %v629 = vadd.f32 0.0, %v628
      %v630 = vpop.f32.mrb[0].mxu0
      %631 = vmatprep.mubr.bf16.mxu0 0
      %632 = vmatmul.mubr.bf16.gmra.mrb[0].mxu0 %v361
      %v633 = vpop.f32.mrb[0].mxu0
      %v634 = vadd.f32 0.0, %v633
      %v635 = vpop.f32.mrb[0].mxu0
      %v636 = vpop.f32.mrb[0].mxu0
      %v637 = vadd.f32 0.0, %v636
      %v638 = vpop.f32.mrb[0].mxu0
      %639 = vmatprep.mubr.bf16.mxu0 0
      %640 = vmatmul.mubr.bf16.gmra.mrb[0].mxu0 %v362
      %v641 = vpop.f32.mrb[0].mxu0
      %v642 = vadd.f32 0.0, %v641
      %v643 = vpop.f32.mrb[0].mxu0
      %v644 = vpop.f32.mrb[0].mxu0
      %v645 = vadd.f32 0.0, %v644
      %v646 = vpop.f32.mrb[0].mxu0
      %647 = vmatprep.mubr.bf16.mxu0 0
      %648 = vmatmul.mubr.bf16.gmra.mrb[0].mxu0 %v363
      %v649 = vpop.f32.mrb[0].mxu0
      %v650 = vadd.f32 0.0, %v649
      %v651 = vpop.f32.mrb[0].mxu0
      %v652 = vpop.f32.mrb[0].mxu0
      %v653 = vadd.f32 0.0, %v652
      %v654 = vpop.f32.mrb[0].mxu0
      %655 = vmatprep.mubr.bf16.mxu0 0
      %656 = vmatmul.mubr.bf16.gmra.mrb[0].mxu0 %v364
      %v657 = vpop.f32.mrb[0].mxu0
      %v658 = vadd.f32 0.0, %v657
      %v659 = vpop.f32.mrb[0].mxu0
      %v660 = vpop.f32.mrb[0].mxu0
      %v661 = vadd.f32 0.0, %v660
      %v662 = vpop.f32.mrb[0].mxu0
      %663 = vmatprep.mubr.bf16.mxu0 0
      %664 = vmatmul.mubr.bf16.gmra.mrb[0].mxu0 %v365
      %v665 = vpop.f32.mrb[0].mxu0
      %v666 = vadd.f32 0.0, %v665
      %v667 = vpop.f32.mrb[0].mxu0
      %v668 = vpop.f32.mrb[0].mxu0
      %v669 = vadd.f32 0.0, %v668
      %v670 = vpop.f32.mrb[0].mxu0
      %671 = vdwg.mxu0
      %v672 = vld [vmem:[%s2] sm:$0x1]
      %v673 = vlaneseq
      %v674 = vshrl.u32 %v673, 7
      %v675 = vsub.s32 0, %v674
      %v676 = vrot.slane %v672, %v675
      %v677 = vmul.f32 %v474, %v676
      %v678 = vmul.f32 %v477, %v676
      %v679 = vmul.f32 %v482, %v676
      %v680 = vmul.f32 %v485, %v676
      %v681 = vmul.f32 %v490, %v676
      %v682 = vmul.f32 %v493, %v676
      %v683 = vmul.f32 %v498, %v676
      %v684 = vmul.f32 %v501, %v676
      %v685 = vmul.f32 %v506, %v676
      %v686 = vmul.f32 %v509, %v676
      %v687 = vmul.f32 %v514, %v676
      %v688 = vmul.f32 %v517, %v676
      %v689 = vmul.f32 %v522, %v676
      %v690 = vmul.f32 %v525, %v676
      %v691 = vmul.f32 %v530, %v676
      %v692 = vmul.f32 %v533, %v676
      %v693 = vmul.f32 %v538, %v676
      %v694 = vmul.f32 %v541, %v676
      %v695 = vmul.f32 %v546, %v676
      %v696 = vmul.f32 %v549, %v676
      %v697 = vmul.f32 %v554, %v676
      %v698 = vmul.f32 %v557, %v676
      %v699 = vmul.f32 %v562, %v676
      %v700 = vmul.f32 %v565, %v676
      %v701 = vmul.f32 %v570, %v676
      %v702 = vmul.f32 %v573, %v676
      %v703 = vmul.f32 %v578, %v676
      %v704 = vmul.f32 %v581, %v676
      %v705 = vmul.f32 %v586, %v676
      %v706 = vmul.f32 %v589, %v676
      %v707 = vmul.f32 %v594, %v676
      %v708 = vmul.f32 %v597, %v676
      %v709 = vmul.f32 %v602, %v676
      %v710 = vmul.f32 %v605, %v676
      %v711 = vmul.f32 %v610, %v676
      %v712 = vmul.f32 %v613, %v676
      %v713 = vmul.f32 %v618, %v676
      %v714 = vmul.f32 %v621, %v676
      %v715 = vmul.f32 %v626, %v676
      %v716 = vmul.f32 %v629, %v676
      %v717 = vmul.f32 %v634, %v676
      %v718 = vmul.f32 %v637, %v676
      %v719 = vmul.f32 %v642, %v676
      %v720 = vmul.f32 %v645, %v676
      %v721 = vmul.f32 %v650, %v676
      %v722 = vmul.f32 %v653, %v676
      %v723 = vmul.f32 %v658, %v676
      %v724 = vmul.f32 %v661, %v676
      %v725 = vmul.f32 %v666, %v676
      %v726 = vmul.f32 %v669, %v676
      %v727 = vld [vmem:[%s2 + $0x1] sm:$0x1]
      %v728 = vlaneseq
      %v729 = vshrl.u32 %v728, 7
      %v730 = vsub.s32 0, %v729
      %v731 = vrot.slane %v727, %v730
      %v732 = vadd.f32 %v677, %v731
      %v733 = vadd.f32 %v678, %v731
      %v734 = vadd.f32 %v679, %v731
      %v735 = vadd.f32 %v680, %v731
      %v736 = vadd.f32 %v681, %v731
      %v737 = vadd.f32 %v682, %v731
      %v738 = vadd.f32 %v683, %v731
      %v739 = vadd.f32 %v684, %v731
      %v740 = vadd.f32 %v685, %v731
      %v741 = vadd.f32 %v686, %v731
      %v742 = vadd.f32 %v687, %v731
      %v743 = vadd.f32 %v688, %v731
      %v744 = vadd.f32 %v689, %v731
      %v745 = vadd.f32 %v690, %v731
      %v746 = vadd.f32 %v691, %v731
      %v747 = vadd.f32 %v692, %v731
      %v748 = vadd.f32 %v693, %v731
      %v749 = vadd.f32 %v694, %v731
      %v750 = vadd.f32 %v695, %v731
      %v751 = vadd.f32 %v696, %v731
      %v752 = vadd.f32 %v697, %v731
      %v753 = vadd.f32 %v698, %v731
      %v754 = vadd.f32 %v699, %v731
      %v755 = vadd.f32 %v700, %v731
      %v756 = vadd.f32 %v701, %v731
      %v757 = vadd.f32 %v702, %v731
      %v758 = vadd.f32 %v703, %v731
      %v759 = vadd.f32 %v704, %v731
      %v760 = vadd.f32 %v705, %v731
      %v761 = vadd.f32 %v706, %v731
      %v762 = vadd.f32 %v707, %v731
      %v763 = vadd.f32 %v708, %v731
      %v764 = vadd.f32 %v709, %v731
      %v765 = vadd.f32 %v710, %v731
      %v766 = vadd.f32 %v711, %v731
      %v767 = vadd.f32 %v712, %v731
      %v768 = vadd.f32 %v713, %v731
      %v769 = vadd.f32 %v714, %v731
      %v770 = vadd.f32 %v715, %v731
      %v771 = vadd.f32 %v716, %v731
      %v772 = vadd.f32 %v717, %v731
      %v773 = vadd.f32 %v718, %v731
      %v774 = vadd.f32 %v719, %v731
      %v775 = vadd.f32 %v720, %v731
      %v776 = vadd.f32 %v721, %v731
      %v777 = vadd.f32 %v722, %v731
      %v778 = vadd.f32 %v723, %v731
      %v779 = vadd.f32 %v724, %v731
      %v780 = vadd.f32 %v725, %v731
      %v781 = vadd.f32 %v726, %v731
      %vm782 = vcmp.ge.f32.partialorder %v732, 0.0
      %vm783 = vcmp.ge.f32.partialorder %v733, 0.0
      %vm784 = vcmp.ge.f32.partialorder %v734, 0.0
      %vm785 = vcmp.ge.f32.partialorder %v735, 0.0
      %vm786 = vcmp.ge.f32.partialorder %v736, 0.0
      %vm787 = vcmp.ge.f32.partialorder %v737, 0.0
      %vm788 = vcmp.ge.f32.partialorder %v738, 0.0
      %vm789 = vcmp.ge.f32.partialorder %v739, 0.0
      %vm790 = vcmp.ge.f32.partialorder %v740, 0.0
      %vm791 = vcmp.ge.f32.partialorder %v741, 0.0
      %vm792 = vcmp.ge.f32.partialorder %v742, 0.0
      %vm793 = vcmp.ge.f32.partialorder %v743, 0.0
      %vm794 = vcmp.ge.f32.partialorder %v744, 0.0
      %vm795 = vcmp.ge.f32.partialorder %v745, 0.0
      %vm796 = vcmp.ge.f32.partialorder %v746, 0.0
      %vm797 = vcmp.ge.f32.partialorder %v747, 0.0
      %vm798 = vcmp.ge.f32.partialorder %v748, 0.0
      %vm799 = vcmp.ge.f32.partialorder %v749, 0.0
      %vm800 = vcmp.ge.f32.partialorder %v750, 0.0
      %vm801 = vcmp.ge.f32.partialorder %v751, 0.0
      %vm802 = vcmp.ge.f32.partialorder %v752, 0.0
      %vm803 = vcmp.ge.f32.partialorder %v753, 0.0
      %vm804 = vcmp.ge.f32.partialorder %v754, 0.0
      %vm805 = vcmp.ge.f32.partialorder %v755, 0.0
      %vm806 = vcmp.ge.f32.partialorder %v756, 0.0
      %vm807 = vcmp.ge.f32.partialorder %v757, 0.0
      %vm808 = vcmp.ge.f32.partialorder %v758, 0.0
      %vm809 = vcmp.ge.f32.partialorder %v759, 0.0
      %vm810 = vcmp.ge.f32.partialorder %v760, 0.0
      %vm811 = vcmp.ge.f32.partialorder %v761, 0.0
      %vm812 = vcmp.ge.f32.partialorder %v762, 0.0
      %vm813 = vcmp.ge.f32.partialorder %v763, 0.0
      %vm814 = vcmp.ge.f32.partialorder %v764, 0.0
      %vm815 = vcmp.ge.f32.partialorder %v765, 0.0
      %vm816 = vcmp.ge.f32.partialorder %v766, 0.0
      %vm817 = vcmp.ge.f32.partialorder %v767, 0.0
      %vm818 = vcmp.ge.f32.partialorder %v768, 0.0
      %vm819 = vcmp.ge.f32.partialorder %v769, 0.0
      %vm820 = vcmp.ge.f32.partialorder %v770, 0.0
      %vm821 = vcmp.ge.f32.partialorder %v771, 0.0
      %vm822 = vcmp.ge.f32.partialorder %v772, 0.0
      %vm823 = vcmp.ge.f32.partialorder %v773, 0.0
      %vm824 = vcmp.ge.f32.partialorder %v774, 0.0
      %vm825 = vcmp.ge.f32.partialorder %v775, 0.0
      %vm826 = vcmp.ge.f32.partialorder %v776, 0.0
      %vm827 = vcmp.ge.f32.partialorder %v777, 0.0
      %vm828 = vcmp.ge.f32.partialorder %v778, 0.0
      %vm829 = vcmp.ge.f32.partialorder %v779, 0.0
      %vm830 = vcmp.ge.f32.partialorder %v780, 0.0
      %vm831 = vcmp.ge.f32.partialorder %v781, 0.0
      %v832 = vmul.f32 %v732, 0.2
      %v833 = vmul.f32 %v733, 0.2
      %v834 = vmul.f32 %v734, 0.2
      %v835 = vmul.f32 %v735, 0.2
      %v836 = vmul.f32 %v736, 0.2
      %v837 = vmul.f32 %v737, 0.2
      %v838 = vmul.f32 %v738, 0.2
      %v839 = vmul.f32 %v739, 0.2
      %v840 = vmul.f32 %v740, 0.2
      %v841 = vmul.f32 %v741, 0.2
      %v842 = vmul.f32 %v742, 0.2
      %v843 = vmul.f32 %v743, 0.2
      %v844 = vmul.f32 %v744, 0.2
      %v845 = vmul.f32 %v745, 0.2
      %v846 = vmul.f32 %v746, 0.2
      %v847 = vmul.f32 %v747, 0.2
      %v848 = vmul.f32 %v748, 0.2
      %v849 = vmul.f32 %v749, 0.2
      %v850 = vmul.f32 %v750, 0.2
      %v851 = vmul.f32 %v751, 0.2
      %v852 = vmul.f32 %v752, 0.2
      %v853 = vmul.f32 %v753, 0.2
      %v854 = vmul.f32 %v754, 0.2
      %v855 = vmul.f32 %v755, 0.2
      %v856 = vmul.f32 %v756, 0.2
      %v857 = vmul.f32 %v757, 0.2
      %v858 = vmul.f32 %v758, 0.2
      %v859 = vmul.f32 %v759, 0.2
      %v860 = vmul.f32 %v760, 0.2
      %v861 = vmul.f32 %v761, 0.2
      %v862 = vmul.f32 %v762, 0.2
      %v863 = vmul.f32 %v763, 0.2
      %v864 = vmul.f32 %v764, 0.2
      %v865 = vmul.f32 %v765, 0.2
      %v866 = vmul.f32 %v766, 0.2
      %v867 = vmul.f32 %v767, 0.2
      %v868 = vmul.f32 %v768, 0.2
      %v869 = vmul.f32 %v769, 0.2
      %v870 = vmul.f32 %v770, 0.2
      %v871 = vmul.f32 %v771, 0.2
      %v872 = vmul.f32 %v772, 0.2
      %v873 = vmul.f32 %v773, 0.2
      %v874 = vmul.f32 %v774, 0.2
      %v875 = vmul.f32 %v775, 0.2
      %v876 = vmul.f32 %v776, 0.2
      %v877 = vmul.f32 %v777, 0.2
      %v878 = vmul.f32 %v778, 0.2
      %v879 = vmul.f32 %v779, 0.2
      %v880 = vmul.f32 %v780, 0.2
      %v881 = vmul.f32 %v781, 0.2
      %v882 = vsel %vm782, %v732, %v832
      %v883 = vsel %vm783, %v733, %v833
      %v884 = vsel %vm784, %v734, %v834
      %v885 = vsel %vm785, %v735, %v835
      %v886 = vsel %vm786, %v736, %v836
      %v887 = vsel %vm787, %v737, %v837
      %v888 = vsel %vm788, %v738, %v838
      %v889 = vsel %vm789, %v739, %v839
      %v890 = vsel %vm790, %v740, %v840
      %v891 = vsel %vm791, %v741, %v841
      %v892 = vsel %vm792, %v742, %v842
      %v893 = vsel %vm793, %v743, %v843
      %v894 = vsel %vm794, %v744, %v844
      %v895 = vsel %vm795, %v745, %v845
      %v896 = vsel %vm796, %v746, %v846
      %v897 = vsel %vm797, %v747, %v847
      %v898 = vsel %vm798, %v748, %v848
      %v899 = vsel %vm799, %v749, %v849
      %v900 = vsel %vm800, %v750, %v850
      %v901 = vsel %vm801, %v751, %v851
      %v902 = vsel %vm802, %v752, %v852
      %v903 = vsel %vm803, %v753, %v853
      %v904 = vsel %vm804, %v754, %v854
      %v905 = vsel %vm805, %v755, %v855
      %v906 = vsel %vm806, %v756, %v856
      %v907 = vsel %vm807, %v757, %v857
      %v908 = vsel %vm808, %v758, %v858
      %v909 = vsel %vm809, %v759, %v859
      %v910 = vsel %vm810, %v760, %v860
      %v911 = vsel %vm811, %v761, %v861
      %v912 = vsel %vm812, %v762, %v862
      %v913 = vsel %vm813, %v763, %v863
      %v914 = vsel %vm814, %v764, %v864
      %v915 = vsel %vm815, %v765, %v865
      %v916 = vsel %vm816, %v766, %v866
      %v917 = vsel %vm817, %v767, %v867
      %v918 = vsel %vm818, %v768, %v868
      %v919 = vsel %vm819, %v769, %v869
      %v920 = vsel %vm820, %v770, %v870
      %v921 = vsel %vm821, %v771, %v871
      %v922 = vsel %vm822, %v772, %v872
      %v923 = vsel %vm823, %v773, %v873
      %v924 = vsel %vm824, %v774, %v874
      %v925 = vsel %vm825, %v775, %v875
      %v926 = vsel %vm826, %v776, %v876
      %v927 = vsel %vm827, %v777, %v877
      %v928 = vsel %vm828, %v778, %v878
      %v929 = vsel %vm829, %v779, %v879
      %v930 = vsel %vm830, %v780, %v880
      %v931 = vsel %vm831, %v781, %v881
      %932 = vst [vmem:[%s172] sm:$0xff] %v882
      %933 = vst [vmem:[%s172 + $0x8] sm:$0xff] %v883
      %934 = vst [vmem:[%s172 + $0x10] sm:$0xff] %v884
      %935 = vst [vmem:[%s172 + $0x18] sm:$0xff] %v885
      %936 = vst [vmem:[%s172 + $0x20] sm:$0xff] %v886
      %937 = vst [vmem:[%s172 + $0x28] sm:$0xff] %v887
      %938 = vst [vmem:[%s172 + $0x30] sm:$0xff] %v888
      %939 = vst [vmem:[%s172 + $0x38] sm:$0xff] %v889
      %940 = vst [vmem:[%s172 + $0x40] sm:$0xff] %v890
      %941 = vst [vmem:[%s172 + $0x48] sm:$0xff] %v891
      %942 = vst [vmem:[%s172 + $0x50] sm:$0xff] %v892
      %943 = vst [vmem:[%s172 + $0x58] sm:$0xff] %v893
      %944 = vst [vmem:[%s172 + $0x60] sm:$0xff] %v894
      %945 = vst [vmem:[%s172 + $0x68] sm:$0xff] %v895
      %946 = vst [vmem:[%s172 + $0x70] sm:$0xff] %v896
      %947 = vst [vmem:[%s172 + $0x78] sm:$0xff] %v897
      %948 = vst [vmem:[%s172 + $0x80] sm:$0xff] %v898
      %949 = vst [vmem:[%s172 + $0x88] sm:$0xff] %v899
      %950 = vst [vmem:[%s172 + $0x90] sm:$0xff] %v900
      %951 = vst [vmem:[%s172 + $0x98] sm:$0xff] %v901
      %952 = vst [vmem:[%s172 + $0xa0] sm:$0xff] %v902
      %953 = vst [vmem:[%s172 + $0xa8] sm:$0xff] %v903
      %954 = vst [vmem:[%s172 + $0xb0] sm:$0xff] %v904
      %955 = vst [vmem:[%s172 + $0xb8] sm:$0xff] %v905
      %956 = vst [vmem:[%s172 + $0xc0] sm:$0xff] %v906
      %957 = vst [vmem:[%s172 + $0xc8] sm:$0xff] %v907
      %958 = vst [vmem:[%s172 + $0xd0] sm:$0xff] %v908
      %959 = vst [vmem:[%s172 + $0xd8] sm:$0xff] %v909
      %960 = vst [vmem:[%s172 + $0xe0] sm:$0xff] %v910
      %961 = vst [vmem:[%s172 + $0xe8] sm:$0xff] %v911
      %962 = vst [vmem:[%s172 + $0xf0] sm:$0xff] %v912
      %963 = vst [vmem:[%s172 + $0xf8] sm:$0xff] %v913
      %964 = vst [vmem:[%s172 + $0x100] sm:$0xff] %v914
      %965 = vst [vmem:[%s172 + $0x108] sm:$0xff] %v915
      %966 = vst [vmem:[%s172 + $0x110] sm:$0xff] %v916
      %967 = vst [vmem:[%s172 + $0x118] sm:$0xff] %v917
      %968 = vst [vmem:[%s172 + $0x120] sm:$0xff] %v918
      %969 = vst [vmem:[%s172 + $0x128] sm:$0xff] %v919
      %970 = vst [vmem:[%s172 + $0x130] sm:$0xff] %v920
      %971 = vst [vmem:[%s172 + $0x138] sm:$0xff] %v921
      %972 = vst [vmem:[%s172 + $0x140] sm:$0xff] %v922
      %973 = vst [vmem:[%s172 + $0x148] sm:$0xff] %v923
      %974 = vst [vmem:[%s172 + $0x150] sm:$0xff] %v924
      %975 = vst [vmem:[%s172 + $0x158] sm:$0xff] %v925
      %976 = vst [vmem:[%s172 + $0x160] sm:$0xff] %v926
      %977 = vst [vmem:[%s172 + $0x168] sm:$0xff] %v927
      %978 = vst [vmem:[%s172 + $0x170] sm:$0xff] %v928
      %979 = vst [vmem:[%s172 + $0x178] sm:$0xff] %v929
      %980 = vst [vmem:[%s172 + $0x180] sm:$0xff] %v930
      %981 = vst [vmem:[%s172 + $0x188] sm:$0xff] %v931
      %s982 = smul.u32 50, %s14
      %p983 = scmp.lt.s32.totalorder %s982, 99
      %s984 = scalar_select %p983, %s982, 99
      %s985 = smul.addr %s984, 8
      %s986 = scalar_lea.vmem %s3, %s985
      // Predicated region
      $region33: #{encoder_forward.2} parent=31 // pred_check
        %p987 = pneg %p100
      $region34: #{encoder_forward.2} parent=31 // pred_check_branch
        %989 = sbr.rel (%p987) target = $region36
      $region35: #{encoder_forward.2} parent=31 // pred_region
        %s990 = smul.u32 50, %s14
      $region36: #{encoder_forward.2} parent=31 // pred_fallthru
        _
    $region32: #{encoder_forward.2} parent=5 // pred_fallthru
      _
    %p991 = scmp.le.s32.totalorder 2, %s9
    // Predicated region
    $region37: #{encoder_forward.2} parent=5 // pred_check
      %p992 = pneg %p991
    $region38: #{encoder_forward.2} parent=5 // pred_check_branch
      %994 = sbr.rel (%p992) target = $region40
    $region39: #{encoder_forward.2} parent=5 // pred_region
      %s995 = ssub.s32 %s9, 2
      // Predicated region
      $region41: #{encoder_forward.2} parent=39 // pred_check
        %p996 = pneg %p106
      $region42: #{encoder_forward.2} parent=39 // pred_check_branch
        %998 = sbr.rel (%p996) target = $region44
      $region43: #{encoder_forward.2} parent=39 // pred_region
        %s999 = smul.u32 50, %s15
        %p1000 = scmp.lt.s32.totalorder %s999, 99
        %s1001 = scalar_select %p1000, %s999, 99
        %s1002 = smul.addr %s1001, 8
        %s1003 = scalar_lea.vmem %s3, %s1002
      $region44: #{encoder_forward.2} parent=39 // pred_fallthru
        _
    $region40: #{encoder_forward.2} parent=5 // pred_fallthru
      _
  $region6: #{encoder_forward.2} parent=0 // loop_footer
    %s13 = sadd.s32 1, %s9
  $region7: #{encoder_forward.2} parent=0 // loop_footer_branch
    %8 = sbr.rel target = $region3
  $region8: #{encoder_forward.2} parent=0 // loop_exit
    _

// kernel: encoder_forward.3
$region0: #{encoder_forward.3}
  #allocation0 [shape = 'u32[]', space=smem, size = 0x4, offset = 0x4, fixed_abs, tag = 'smem constant byte address 0x4 - core index']
  #allocation1 [shape = 'u32[144,128]{1,0:T(1,128)}', space=vmem, size = 0x12000, scoped, tag = 'internal scratch']
  %s0 = inlined_call_operand.vmem [shape: bf16[128,1280], index: 0, kind: input, shape index: {}]
  %s1 = inlined_call_operand.vmem [shape: bf16[1280,128], index: 1, kind: input, shape index: {}]
  %s2 = inlined_call_operand.vmem [shape: f32[2,128], index: 2, kind: input, shape index: {}]
  %s3 = inlined_call_operand.vmem [shape: bf16[2048,256], index: 3, kind: input, shape index: {}]
  %s4 = inlined_call_operand.vmem [shape: f32[2,256], index: 4, kind: input, shape index: {}]
  %s5 = inlined_call_operand.vmem [shape: bf16[1024,128], index: 5, kind: input, shape index: {}]
  %s6 = inlined_call_operand.vmem [shape: f32[8,128], index: 6, kind: output, shape index: {}]
  %s7 = sld [smem:[#allocation0]]
  $region34: #{encoder_forward.3} parent=0
    _
  %s9 = ssub.s32 1, %s7
  %s10 = scalar_select 0, %s9, %s7
  // Predicated region
  $region2: #{encoder_forward.3} parent=0 // pred_check
    _
  $region3: #{encoder_forward.3} parent=0 // pred_check_branch
    %12 = sbr.rel (0) target = $region5
  $region4: #{encoder_forward.3} parent=0 // pred_region
    _
  $region5: #{encoder_forward.3} parent=0 // pred_fallthru
    _
  // Predicated region
  $region6: #{encoder_forward.3} parent=0 // pred_check
    _
  $region7: #{encoder_forward.3} parent=0 // pred_check_branch
    %14 = sbr.rel (0) target = $region9
  $region8: #{encoder_forward.3} parent=0 // pred_region
    _
  $region9: #{encoder_forward.3} parent=0 // pred_fallthru
    _
  // Predicated region
  $region10: #{encoder_forward.3} parent=0 // pred_check
    _
  $region11: #{encoder_forward.3} parent=0 // pred_check_branch
    %16 = sbr.rel (0) target = $region13
  $region12: #{encoder_forward.3} parent=0 // pred_region
    _
  $region13: #{encoder_forward.3} parent=0 // pred_fallthru
    _
  // Predicated region
  $region14: #{encoder_forward.3} parent=0 // pred_check
    _
  $region15: #{encoder_forward.3} parent=0 // pred_check_branch
    %18 = sbr.rel (0) target = $region17
  $region16: #{encoder_forward.3} parent=0 // pred_region
    _
  $region17: #{encoder_forward.3} parent=0 // pred_fallthru
    _
  // Predicated region
  $region18: #{encoder_forward.3} parent=0 // pred_check
    _
  $region19: #{encoder_forward.3} parent=0 // pred_check_branch
    %20 = sbr.rel (0) target = $region21
  $region20: #{encoder_forward.3} parent=0 // pred_region
    _
  $region21: #{encoder_forward.3} parent=0 // pred_fallthru
    _
  // Predicated region
  $region22: #{encoder_forward.3} parent=0 // pred_check
    _
  $region23: #{encoder_forward.3} parent=0 // pred_check_branch
    %22 = sbr.rel (0) target = $region25
  $region24: #{encoder_forward.3} parent=0 // pred_region
    _
  $region25: #{encoder_forward.3} parent=0 // pred_fallthru
    _
  %v24 = vld [vmem:[%s0] sm:$0xff]
  %v25 = vld [vmem:[%s0 + $0x8] sm:$0xff]
  %v26 = vld [vmem:[%s0 + $0x10] sm:$0xff]
  %v27 = vld [vmem:[%s0 + $0x18] sm:$0xff]
  %v28 = vld [vmem:[%s0 + $0x20] sm:$0xff]
  %v29 = vld [vmem:[%s0 + $0x28] sm:$0xff]
  %v30 = vld [vmem:[%s0 + $0x30] sm:$0xff]
  %v31 = vld [vmem:[%s0 + $0x38] sm:$0xff]
  %v32 = vld [vmem:[%s0 + $0x40] sm:$0xff]
  %v33 = vld [vmem:[%s0 + $0x48] sm:$0xff]
  %v34 = vld [vmem:[%s0 + $0x50] sm:$0xff]
  %v35 = vld [vmem:[%s0 + $0x58] sm:$0xff]
  %v36 = vld [vmem:[%s0 + $0x60] sm:$0xff]
  %v37 = vld [vmem:[%s0 + $0x68] sm:$0xff]
  %v38 = vld [vmem:[%s0 + $0x70] sm:$0xff]
  %v39 = vld [vmem:[%s0 + $0x78] sm:$0xff]
  %v40 = vld [vmem:[%s0 + $0x80] sm:$0xff]
  %v41 = vld [vmem:[%s0 + $0x88] sm:$0xff]
  %v42 = vld [vmem:[%s0 + $0x90] sm:$0xff]
  %v43 = vld [vmem:[%s0 + $0x98] sm:$0xff]
  %v44 = vld [vmem:[%s0 + $0xa0] sm:$0xff]
  %v45 = vld [vmem:[%s0 + $0xa8] sm:$0xff]
  %v46 = vld [vmem:[%s0 + $0xb0] sm:$0xff]
  %v47 = vld [vmem:[%s0 + $0xb8] sm:$0xff]
  %v48 = vld [vmem:[%s0 + $0xc0] sm:$0xff]
  %v49 = vld [vmem:[%s0 + $0xc8] sm:$0xff]
  %v50 = vld [vmem:[%s0 + $0xd0] sm:$0xff]
  %v51 = vld [vmem:[%s0 + $0xd8] sm:$0xff]
  %v52 = vld [vmem:[%s0 + $0xe0] sm:$0xff]
  %v53 = vld [vmem:[%s0 + $0xe8] sm:$0xff]
  %v54 = vld [vmem:[%s0 + $0xf0] sm:$0xff]
  %v55 = vld [vmem:[%s0 + $0xf8] sm:$0xff]
  %v56 = vld [vmem:[%s0 + $0x100] sm:$0xff]
  %v57 = vld [vmem:[%s0 + $0x108] sm:$0xff]
  %v58 = vld [vmem:[%s0 + $0x110] sm:$0xff]
  %v59 = vld [vmem:[%s0 + $0x118] sm:$0xff]
  %v60 = vld [vmem:[%s0 + $0x120] sm:$0xff]
  %v61 = vld [vmem:[%s0 + $0x128] sm:$0xff]
  %v62 = vld [vmem:[%s0 + $0x130] sm:$0xff]
  %v63 = vld [vmem:[%s0 + $0x138] sm:$0xff]
  %v64 = vld [vmem:[%s0 + $0x140] sm:$0xff]
  %v65 = vld [vmem:[%s0 + $0x148] sm:$0xff]
  %v66 = vld [vmem:[%s0 + $0x150] sm:$0xff]
  %v67 = vld [vmem:[%s0 + $0x158] sm:$0xff]
  %v68 = vld [vmem:[%s0 + $0x160] sm:$0xff]
  %v69 = vld [vmem:[%s0 + $0x168] sm:$0xff]
  %v70 = vld [vmem:[%s0 + $0x170] sm:$0xff]
  %v71 = vld [vmem:[%s0 + $0x178] sm:$0xff]
  %v72 = vld [vmem:[%s0 + $0x180] sm:$0xff]
  %v73 = vld [vmem:[%s0 + $0x188] sm:$0xff]
  %v74 = vld [vmem:[%s0 + $0x190] sm:$0xff]
  %v75 = vld [vmem:[%s0 + $0x198] sm:$0xff]
  %v76 = vld [vmem:[%s0 + $0x1a0] sm:$0xff]
  %v77 = vld [vmem:[%s0 + $0x1a8] sm:$0xff]
  %v78 = vld [vmem:[%s0 + $0x1b0] sm:$0xff]
  %v79 = vld [vmem:[%s0 + $0x1b8] sm:$0xff]
  %v80 = vld [vmem:[%s0 + $0x1c0] sm:$0xff]
  %v81 = vld [vmem:[%s0 + $0x1c8] sm:$0xff]
  %v82 = vld [vmem:[%s0 + $0x1d0] sm:$0xff]
  %v83 = vld [vmem:[%s0 + $0x1d8] sm:$0xff]
  %v84 = vld [vmem:[%s0 + $0x1e0] sm:$0xff]
  %v85 = vld [vmem:[%s0 + $0x1e8] sm:$0xff]
  %v86 = vld [vmem:[%s0 + $0x1f0] sm:$0xff]
  %v87 = vld [vmem:[%s0 + $0x1f8] sm:$0xff]
  %v88 = vld [vmem:[%s0 + $0x200] sm:$0xff]
  %v89 = vld [vmem:[%s0 + $0x208] sm:$0xff]
  %v90 = vld [vmem:[%s0 + $0x210] sm:$0xff]
  %v91 = vld [vmem:[%s0 + $0x218] sm:$0xff]
  %v92 = vld [vmem:[%s0 + $0x220] sm:$0xff]
  %v93 = vld [vmem:[%s0 + $0x228] sm:$0xff]
  %v94 = vld [vmem:[%s0 + $0x230] sm:$0xff]
  %v95 = vld [vmem:[%s0 + $0x238] sm:$0xff]
  %v96 = vld [vmem:[%s0 + $0x240] sm:$0xff]
  %v97 = vld [vmem:[%s0 + $0x248] sm:$0xff]
  %v98 = vld [vmem:[%s0 + $0x250] sm:$0xff]
  %v99 = vld [vmem:[%s0 + $0x258] sm:$0xff]
  %v100 = vld [vmem:[%s0 + $0x260] sm:$0xff]
  %v101 = vld [vmem:[%s0 + $0x268] sm:$0xff]
  %v102 = vld [vmem:[%s0 + $0x270] sm:$0xff]
  %v103 = vld [vmem:[%s0 + $0x278] sm:$0xff]
  %v104 = vld [vmem:[%s1] sm:$0xf]
  %v105 = vld [vmem:[%s1 + $0x4] sm:$0xf]
  %v106 = vld [vmem:[%s1 + $0x8] sm:$0xf]
  %v107 = vld [vmem:[%s1 + $0xc] sm:$0xf]
  %v108 = vld [vmem:[%s1 + $0x10] sm:$0xf]
  %v109 = vld [vmem:[%s1 + $0x14] sm:$0xf]
  %v110 = vld [vmem:[%s1 + $0x18] sm:$0xf]
  %v111 = vld [vmem:[%s1 + $0x1c] sm:$0xf]
  %v112 = vld [vmem:[%s1 + $0x20] sm:$0xf]
  %v113 = vld [vmem:[%s1 + $0x24] sm:$0xf]
  %v114 = vld [vmem:[%s1 + $0x28] sm:$0xf]
  %v115 = vld [vmem:[%s1 + $0x2c] sm:$0xf]
  %v116 = vld [vmem:[%s1 + $0x30] sm:$0xf]
  %v117 = vld [vmem:[%s1 + $0x34] sm:$0xf]
  %v118 = vld [vmem:[%s1 + $0x38] sm:$0xf]
  %v119 = vld [vmem:[%s1 + $0x3c] sm:$0xf]
  %v120 = vld [vmem:[%s1 + $0x40] sm:$0xf]
  %v121 = vld [vmem:[%s1 + $0x44] sm:$0xf]
  %v122 = vld [vmem:[%s1 + $0x48] sm:$0xf]
  %v123 = vld [vmem:[%s1 + $0x4c] sm:$0xf]
  %v124 = vld [vmem:[%s1 + $0x50] sm:$0xf]
  %v125 = vld [vmem:[%s1 + $0x54] sm:$0xf]
  %v126 = vld [vmem:[%s1 + $0x58] sm:$0xf]
  %v127 = vld [vmem:[%s1 + $0x5c] sm:$0xf]
  %v128 = vld [vmem:[%s1 + $0x60] sm:$0xf]
  %v129 = vld [vmem:[%s1 + $0x64] sm:$0xf]
  %v130 = vld [vmem:[%s1 + $0x68] sm:$0xf]
  %v131 = vld [vmem:[%s1 + $0x6c] sm:$0xf]
  %v132 = vld [vmem:[%s1 + $0x70] sm:$0xf]
  %v133 = vld [vmem:[%s1 + $0x74] sm:$0xf]
  %v134 = vld [vmem:[%s1 + $0x78] sm:$0xf]
  %v135 = vld [vmem:[%s1 + $0x7c] sm:$0xf]
  %v136 = vld [vmem:[%s1 + $0x80] sm:$0xf]
  %v137 = vld [vmem:[%s1 + $0x84] sm:$0xf]
  %v138 = vld [vmem:[%s1 + $0x88] sm:$0xf]
  %v139 = vld [vmem:[%s1 + $0x8c] sm:$0xf]
  %v140 = vld [vmem:[%s1 + $0x90] sm:$0xf]
  %v141 = vld [vmem:[%s1 + $0x94] sm:$0xf]
  %v142 = vld [vmem:[%s1 + $0x98] sm:$0xf]
  %v143 = vld [vmem:[%s1 + $0x9c] sm:$0xf]
  %v144 = vld [vmem:[%s1 + $0xa0] sm:$0xf]
  %v145 = vld [vmem:[%s1 + $0xa4] sm:$0xf]
  %v146 = vld [vmem:[%s1 + $0xa8] sm:$0xf]
  %v147 = vld [vmem:[%s1 + $0xac] sm:$0xf]
  %v148 = vld [vmem:[%s1 + $0xb0] sm:$0xf]
  %v149 = vld [vmem:[%s1 + $0xb4] sm:$0xf]
  %v150 = vld [vmem:[%s1 + $0xb8] sm:$0xf]
  %v151 = vld [vmem:[%s1 + $0xbc] sm:$0xf]
  %v152 = vld [vmem:[%s1 + $0xc0] sm:$0xf]
  %v153 = vld [vmem:[%s1 + $0xc4] sm:$0xf]
  %v154 = vld [vmem:[%s1 + $0xc8] sm:$0xf]
  %v155 = vld [vmem:[%s1 + $0xcc] sm:$0xf]
  %v156 = vld [vmem:[%s1 + $0xd0] sm:$0xf]
  %v157 = vld [vmem:[%s1 + $0xd4] sm:$0xf]
  %v158 = vld [vmem:[%s1 + $0xd8] sm:$0xf]
  %v159 = vld [vmem:[%s1 + $0xdc] sm:$0xf]
  %v160 = vld [vmem:[%s1 + $0xe0] sm:$0xf]
  %v161 = vld [vmem:[%s1 + $0xe4] sm:$0xf]
  %v162 = vld [vmem:[%s1 + $0xe8] sm:$0xf]
  %v163 = vld [vmem:[%s1 + $0xec] sm:$0xf]
  %v164 = vld [vmem:[%s1 + $0xf0] sm:$0xf]
  %v165 = vld [vmem:[%s1 + $0xf4] sm:$0xf]
  %v166 = vld [vmem:[%s1 + $0xf8] sm:$0xf]
  %v167 = vld [vmem:[%s1 + $0xfc] sm:$0xf]
  %v168 = vld [vmem:[%s1 + $0x100] sm:$0xf]
  %v169 = vld [vmem:[%s1 + $0x104] sm:$0xf]
  %v170 = vld [vmem:[%s1 + $0x108] sm:$0xf]
  %v171 = vld [vmem:[%s1 + $0x10c] sm:$0xf]
  %v172 = vld [vmem:[%s1 + $0x110] sm:$0xf]
  %v173 = vld [vmem:[%s1 + $0x114] sm:$0xf]
  %v174 = vld [vmem:[%s1 + $0x118] sm:$0xf]
  %v175 = vld [vmem:[%s1 + $0x11c] sm:$0xf]
  %v176 = vld [vmem:[%s1 + $0x120] sm:$0xf]
  %v177 = vld [vmem:[%s1 + $0x124] sm:$0xf]
  %v178 = vld [vmem:[%s1 + $0x128] sm:$0xf]
  %v179 = vld [vmem:[%s1 + $0x12c] sm:$0xf]
  %v180 = vld [vmem:[%s1 + $0x130] sm:$0xf]
  %v181 = vld [vmem:[%s1 + $0x134] sm:$0xf]
  %v182 = vld [vmem:[%s1 + $0x138] sm:$0xf]
  %v183 = vld [vmem:[%s1 + $0x13c] sm:$0xf]
  %v184 = vld [vmem:[%s1 + $0x140] sm:$0xf]
  %v185 = vld [vmem:[%s1 + $0x144] sm:$0xf]
  %v186 = vld [vmem:[%s1 + $0x148] sm:$0xf]
  %v187 = vld [vmem:[%s1 + $0x14c] sm:$0xf]
  %v188 = vld [vmem:[%s1 + $0x150] sm:$0xf]
  %v189 = vld [vmem:[%s1 + $0x154] sm:$0xf]
  %v190 = vld [vmem:[%s1 + $0x158] sm:$0xf]
  %v191 = vld [vmem:[%s1 + $0x15c] sm:$0xf]
  %v192 = vld [vmem:[%s1 + $0x160] sm:$0xf]
  %v193 = vld [vmem:[%s1 + $0x164] sm:$0xf]
  %v194 = vld [vmem:[%s1 + $0x168] sm:$0xf]
  %v195 = vld [vmem:[%s1 + $0x16c] sm:$0xf]
  %v196 = vld [vmem:[%s1 + $0x170] sm:$0xf]
  %v197 = vld [vmem:[%s1 + $0x174] sm:$0xf]
  %v198 = vld [vmem:[%s1 + $0x178] sm:$0xf]
  %v199 = vld [vmem:[%s1 + $0x17c] sm:$0xf]
  %v200 = vld [vmem:[%s1 + $0x180] sm:$0xf]
  %v201 = vld [vmem:[%s1 + $0x184] sm:$0xf]
  %v202 = vld [vmem:[%s1 + $0x188] sm:$0xf]
  %v203 = vld [vmem:[%s1 + $0x18c] sm:$0xf]
  %v204 = vld [vmem:[%s1 + $0x190] sm:$0xf]
  %v205 = vld [vmem:[%s1 + $0x194] sm:$0xf]
  %v206 = vld [vmem:[%s1 + $0x198] sm:$0xf]
  %v207 = vld [vmem:[%s1 + $0x19c] sm:$0xf]
  %v208 = vld [vmem:[%s1 + $0x1a0] sm:$0xf]
  %v209 = vld [vmem:[%s1 + $0x1a4] sm:$0xf]
  %v210 = vld [vmem:[%s1 + $0x1a8] sm:$0xf]
  %v211 = vld [vmem:[%s1 + $0x1ac] sm:$0xf]
  %v212 = vld [vmem:[%s1 + $0x1b0] sm:$0xf]
  %v213 = vld [vmem:[%s1 + $0x1b4] sm:$0xf]
  %v214 = vld [vmem:[%s1 + $0x1b8] sm:$0xf]
  %v215 = vld [vmem:[%s1 + $0x1bc] sm:$0xf]
  %v216 = vld [vmem:[%s1 + $0x1c0] sm:$0xf]
  %v217 = vld [vmem:[%s1 + $0x1c4] sm:$0xf]
  %v218 = vld [vmem:[%s1 + $0x1c8] sm:$0xf]
  %v219 = vld [vmem:[%s1 + $0x1cc] sm:$0xf]
  %v220 = vld [vmem:[%s1 + $0x1d0] sm:$0xf]
  %v221 = vld [vmem:[%s1 + $0x1d4] sm:$0xf]
  %v222 = vld [vmem:[%s1 + $0x1d8] sm:$0xf]
  %v223 = vld [vmem:[%s1 + $0x1dc] sm:$0xf]
  %v224 = vld [vmem:[%s1 + $0x1e0] sm:$0xf]
  %v225 = vld [vmem:[%s1 + $0x1e4] sm:$0xf]
  %v226 = vld [vmem:[%s1 + $0x1e8] sm:$0xf]
  %v227 = vld [vmem:[%s1 + $0x1ec] sm:$0xf]
  %v228 = vld [vmem:[%s1 + $0x1f0] sm:$0xf]
  %v229 = vld [vmem:[%s1 + $0x1f4] sm:$0xf]
  %v230 = vld [vmem:[%s1 + $0x1f8] sm:$0xf]
  %v231 = vld [vmem:[%s1 + $0x1fc] sm:$0xf]
  %v232 = vld [vmem:[%s1 + $0x200] sm:$0xf]
  %v233 = vld [vmem:[%s1 + $0x204] sm:$0xf]
  %v234 = vld [vmem:[%s1 + $0x208] sm:$0xf]
  %v235 = vld [vmem:[%s1 + $0x20c] sm:$0xf]
  %v236 = vld [vmem:[%s1 + $0x210] sm:$0xf]
  %v237 = vld [vmem:[%s1 + $0x214] sm:$0xf]
  %v238 = vld [vmem:[%s1 + $0x218] sm:$0xf]
  %v239 = vld [vmem:[%s1 + $0x21c] sm:$0xf]
  %v240 = vld [vmem:[%s1 + $0x220] sm:$0xf]
  %v241 = vld [vmem:[%s1 + $0x224] sm:$0xf]
  %v242 = vld [vmem:[%s1 + $0x228] sm:$0xf]
  %v243 = vld [vmem:[%s1 + $0x22c] sm:$0xf]
  %v244 = vld [vmem:[%s1 + $0x230] sm:$0xf]
  %v245 = vld [vmem:[%s1 + $0x234] sm:$0xf]
  %v246 = vld [vmem:[%s1 + $0x238] sm:$0xf]
  %v247 = vld [vmem:[%s1 + $0x23c] sm:$0xf]
  %v248 = vld [vmem:[%s1 + $0x240] sm:$0xf]
  %v249 = vld [vmem:[%s1 + $0x244] sm:$0xf]
  %v250 = vld [vmem:[%s1 + $0x248] sm:$0xf]
  %v251 = vld [vmem:[%s1 + $0x24c] sm:$0xf]
  %v252 = vld [vmem:[%s1 + $0x250] sm:$0xf]
  %v253 = vld [vmem:[%s1 + $0x254] sm:$0xf]
  %v254 = vld [vmem:[%s1 + $0x258] sm:$0xf]
  %v255 = vld [vmem:[%s1 + $0x25c] sm:$0xf]
  %v256 = vld [vmem:[%s1 + $0x260] sm:$0xf]
  %v257 = vld [vmem:[%s1 + $0x264] sm:$0xf]
  %v258 = vld [vmem:[%s1 + $0x268] sm:$0xf]
  %v259 = vld [vmem:[%s1 + $0x26c] sm:$0xf]
  %v260 = vld [vmem:[%s1 + $0x270] sm:$0xf]
  %v261 = vld [vmem:[%s1 + $0x274] sm:$0xf]
  %v262 = vld [vmem:[%s1 + $0x278] sm:$0xf]
  %v263 = vld [vmem:[%s1 + $0x27c] sm:$0xf]
  %v344 = vunpack.c.l.b16 %v24
  %v345 = vunpack.c.h.b16 %v24
  %v346 = vunpack.c.l.b16 %v25
  %v347 = vunpack.c.h.b16 %v25
  %v348 = vunpack.c.l.b16 %v26
  %v349 = vunpack.c.h.b16 %v26
  %v350 = vunpack.c.l.b16 %v27
  %v351 = vunpack.c.h.b16 %v27
  %v352 = vunpack.c.l.b16 %v28
  %v353 = vunpack.c.h.b16 %v28
  %v354 = vunpack.c.l.b16 %v29
  %v355 = vunpack.c.h.b16 %v29
  %v356 = vunpack.c.l.b16 %v30
  %v357 = vunpack.c.h.b16 %v30
  %v358 = vunpack.c.l.b16 %v31
  %v359 = vunpack.c.h.b16 %v31
  %v360 = vunpack.c.l.b16 %v32
  %v361 = vunpack.c.h.b16 %v32
  %v362 = vunpack.c.l.b16 %v33
  %v363 = vunpack.c.h.b16 %v33
  %v364 = vunpack.c.l.b16 %v34
  %v365 = vunpack.c.h.b16 %v34
  %v366 = vunpack.c.l.b16 %v35
  %v367 = vunpack.c.h.b16 %v35
  %v368 = vunpack.c.l.b16 %v36
  %v369 = vunpack.c.h.b16 %v36
  %v370 = vunpack.c.l.b16 %v37
  %v371 = vunpack.c.h.b16 %v37
  %v372 = vunpack.c.l.b16 %v38
  %v373 = vunpack.c.h.b16 %v38
  %v374 = vunpack.c.l.b16 %v39
  %v375 = vunpack.c.h.b16 %v39
  %v376 = vunpack.c.l.b16 %v40
  %v377 = vunpack.c.h.b16 %v40
  %v378 = vunpack.c.l.b16 %v41
  %v379 = vunpack.c.h.b16 %v41
  %v380 = vunpack.c.l.b16 %v42
  %v381 = vunpack.c.h.b16 %v42
  %v382 = vunpack.c.l.b16 %v43
  %v383 = vunpack.c.h.b16 %v43
  %v384 = vunpack.c.l.b16 %v44
  %v385 = vunpack.c.h.b16 %v44
  %v386 = vunpack.c.l.b16 %v45
  %v387 = vunpack.c.h.b16 %v45
  %v388 = vunpack.c.l.b16 %v46
  %v389 = vunpack.c.h.b16 %v46
  %v390 = vunpack.c.l.b16 %v47
  %v391 = vunpack.c.h.b16 %v47
  %v392 = vunpack.c.l.b16 %v48
  %v393 = vunpack.c.h.b16 %v48
  %v394 = vunpack.c.l.b16 %v49
  %v395 = vunpack.c.h.b16 %v49
  %v396 = vunpack.c.l.b16 %v50
  %v397 = vunpack.c.h.b16 %v50
  %v398 = vunpack.c.l.b16 %v51
  %v399 = vunpack.c.h.b16 %v51
  %v400 = vunpack.c.l.b16 %v52
  %v401 = vunpack.c.h.b16 %v52
  %v402 = vunpack.c.l.b16 %v53
  %v403 = vunpack.c.h.b16 %v53
  %v404 = vunpack.c.l.b16 %v54
  %v405 = vunpack.c.h.b16 %v54
  %v406 = vunpack.c.l.b16 %v55
  %v407 = vunpack.c.h.b16 %v55
  %v408 = vunpack.c.l.b16 %v56
  %v409 = vunpack.c.h.b16 %v56
  %v410 = vunpack.c.l.b16 %v57
  %v411 = vunpack.c.h.b16 %v57
  %v412 = vunpack.c.l.b16 %v58
  %v413 = vunpack.c.h.b16 %v58
  %v414 = vunpack.c.l.b16 %v59
  %v415 = vunpack.c.h.b16 %v59
  %v416 = vunpack.c.l.b16 %v60
  %v417 = vunpack.c.h.b16 %v60
  %v418 = vunpack.c.l.b16 %v61
  %v419 = vunpack.c.h.b16 %v61
  %v420 = vunpack.c.l.b16 %v62
  %v421 = vunpack.c.h.b16 %v62
  %v422 = vunpack.c.l.b16 %v63
  %v423 = vunpack.c.h.b16 %v63
  %v424 = vunpack.c.l.b16 %v64
  %v425 = vunpack.c.h.b16 %v64
  %v426 = vunpack.c.l.b16 %v65
  %v427 = vunpack.c.h.b16 %v65
  %v428 = vunpack.c.l.b16 %v66
  %v429 = vunpack.c.h.b16 %v66
  %v430 = vunpack.c.l.b16 %v67
  %v431 = vunpack.c.h.b16 %v67
  %v432 = vunpack.c.l.b16 %v68
  %v433 = vunpack.c.h.b16 %v68
  %v434 = vunpack.c.l.b16 %v69
  %v435 = vunpack.c.h.b16 %v69
  %v436 = vunpack.c.l.b16 %v70
  %v437 = vunpack.c.h.b16 %v70
  %v438 = vunpack.c.l.b16 %v71
  %v439 = vunpack.c.h.b16 %v71
  %v440 = vunpack.c.l.b16 %v72
  %v441 = vunpack.c.h.b16 %v72
  %v442 = vunpack.c.l.b16 %v73
  %v443 = vunpack.c.h.b16 %v73
  %v444 = vunpack.c.l.b16 %v74
  %v445 = vunpack.c.h.b16 %v74
  %v446 = vunpack.c.l.b16 %v75
  %v447 = vunpack.c.h.b16 %v75
  %v448 = vunpack.c.l.b16 %v76
  %v449 = vunpack.c.h.b16 %v76
  %v450 = vunpack.c.l.b16 %v77
  %v451 = vunpack.c.h.b16 %v77
  %v452 = vunpack.c.l.b16 %v78
  %v453 = vunpack.c.h.b16 %v78
  %v454 = vunpack.c.l.b16 %v79
  %v455 = vunpack.c.h.b16 %v79
  %v456 = vunpack.c.l.b16 %v80
  %v457 = vunpack.c.h.b16 %v80
  %v458 = vunpack.c.l.b16 %v81
  %v459 = vunpack.c.h.b16 %v81
  %v460 = vunpack.c.l.b16 %v82
  %v461 = vunpack.c.h.b16 %v82
  %v462 = vunpack.c.l.b16 %v83
  %v463 = vunpack.c.h.b16 %v83
  %v464 = vunpack.c.l.b16 %v84
  %v465 = vunpack.c.h.b16 %v84
  %v466 = vunpack.c.l.b16 %v85
  %v467 = vunpack.c.h.b16 %v85
  %v468 = vunpack.c.l.b16 %v86
  %v469 = vunpack.c.h.b16 %v86
  %v470 = vunpack.c.l.b16 %v87
  %v471 = vunpack.c.h.b16 %v87
  %v472 = vunpack.c.l.b16 %v88
  %v473 = vunpack.c.h.b16 %v88
  %v474 = vunpack.c.l.b16 %v89
  %v475 = vunpack.c.h.b16 %v89
  %v476 = vunpack.c.l.b16 %v90
  %v477 = vunpack.c.h.b16 %v90
  %v478 = vunpack.c.l.b16 %v91
  %v479 = vunpack.c.h.b16 %v91
  %v480 = vunpack.c.l.b16 %v92
  %v481 = vunpack.c.h.b16 %v92
  %v482 = vunpack.c.l.b16 %v93
  %v483 = vunpack.c.h.b16 %v93
  %v484 = vunpack.c.l.b16 %v94
  %v485 = vunpack.c.h.b16 %v94
  %v486 = vunpack.c.l.b16 %v95
  %v487 = vunpack.c.h.b16 %v95
  %v488 = vunpack.c.l.b16 %v96
  %v489 = vunpack.c.h.b16 %v96
  %v490 = vunpack.c.l.b16 %v97
  %v491 = vunpack.c.h.b16 %v97
  %v492 = vunpack.c.l.b16 %v98
  %v493 = vunpack.c.h.b16 %v98
  %v494 = vunpack.c.l.b16 %v99
  %v495 = vunpack.c.h.b16 %v99
  %v496 = vunpack.c.l.b16 %v100
  %v497 = vunpack.c.h.b16 %v100
  %v498 = vunpack.c.l.b16 %v101
  %v499 = vunpack.c.h.b16 %v101
  %v500 = vunpack.c.l.b16 %v102
  %v501 = vunpack.c.h.b16 %v102
  %v502 = vunpack.c.l.b16 %v103
  %v503 = vunpack.c.h.b16 %v103
  %v504 = vpack.c.b16 %v354, %v344
  %v505 = vpack.c.b16 %v355, %v345
  %v506 = vpack.c.b16 %v356, %v346
  %v507 = vpack.c.b16 %v357, %v347
  %v508 = vpack.c.b16 %v358, %v348
  %v509 = vpack.c.b16 %v359, %v349
  %v510 = vpack.c.b16 %v360, %v350
  %v511 = vpack.c.b16 %v361, %v351
  %v512 = vpack.c.b16 %v362, %v352
  %v513 = vpack.c.b16 %v363, %v353
  %v514 = vpack.c.b16 %v374, %v364
  %v515 = vpack.c.b16 %v375, %v365
  %v516 = vpack.c.b16 %v376, %v366
  %v517 = vpack.c.b16 %v377, %v367
  %v518 = vpack.c.b16 %v378, %v368
  %v519 = vpack.c.b16 %v379, %v369
  %v520 = vpack.c.b16 %v380, %v370
  %v521 = vpack.c.b16 %v381, %v371
  %v522 = vpack.c.b16 %v382, %v372
  %v523 = vpack.c.b16 %v383, %v373
  %v524 = vpack.c.b16 %v394, %v384
  %v525 = vpack.c.b16 %v395, %v385
  %v526 = vpack.c.b16 %v396, %v386
  %v527 = vpack.c.b16 %v397, %v387
  %v528 = vpack.c.b16 %v398, %v388
  %v529 = vpack.c.b16 %v399, %v389
  %v530 = vpack.c.b16 %v400, %v390
  %v531 = vpack.c.b16 %v401, %v391
  %v532 = vpack.c.b16 %v402, %v392
  %v533 = vpack.c.b16 %v403, %v393
  %v534 = vpack.c.b16 %v414, %v404
  %v535 = vpack.c.b16 %v415, %v405
  %v536 = vpack.c.b16 %v416, %v406
  %v537 = vpack.c.b16 %v417, %v407
  %v538 = vpack.c.b16 %v418, %v408
  %v539 = vpack.c.b16 %v419, %v409
  %v540 = vpack.c.b16 %v420, %v410
  %v541 = vpack.c.b16 %v421, %v411
  %v542 = vpack.c.b16 %v422, %v412
  %v543 = vpack.c.b16 %v423, %v413
  %v544 = vpack.c.b16 %v434, %v424
  %v545 = vpack.c.b16 %v435, %v425
  %v546 = vpack.c.b16 %v436, %v426
  %v547 = vpack.c.b16 %v437, %v427
  %v548 = vpack.c.b16 %v438, %v428
  %v549 = vpack.c.b16 %v439, %v429
  %v550 = vpack.c.b16 %v440, %v430
  %v551 = vpack.c.b16 %v441, %v431
  %v552 = vpack.c.b16 %v442, %v432
  %v553 = vpack.c.b16 %v443, %v433
  %v554 = vpack.c.b16 %v454, %v444
  %v555 = vpack.c.b16 %v455, %v445
  %v556 = vpack.c.b16 %v456, %v446
  %v557 = vpack.c.b16 %v457, %v447
  %v558 = vpack.c.b16 %v458, %v448
  %v559 = vpack.c.b16 %v459, %v449
  %v560 = vpack.c.b16 %v460, %v450
  %v561 = vpack.c.b16 %v461, %v451
  %v562 = vpack.c.b16 %v462, %v452
  %v563 = vpack.c.b16 %v463, %v453
  %v564 = vpack.c.b16 %v474, %v464
  %v565 = vpack.c.b16 %v475, %v465
  %v566 = vpack.c.b16 %v476, %v466
  %v567 = vpack.c.b16 %v477, %v467
  %v568 = vpack.c.b16 %v478, %v468
  %v569 = vpack.c.b16 %v479, %v469
  %v570 = vpack.c.b16 %v480, %v470
  %v571 = vpack.c.b16 %v481, %v471
  %v572 = vpack.c.b16 %v482, %v472
  %v573 = vpack.c.b16 %v483, %v473
  %v574 = vpack.c.b16 %v494, %v484
  %v575 = vpack.c.b16 %v495, %v485
  %v576 = vpack.c.b16 %v496, %v486
  %v577 = vpack.c.b16 %v497, %v487
  %v578 = vpack.c.b16 %v498, %v488
  %v579 = vpack.c.b16 %v499, %v489
  %v580 = vpack.c.b16 %v500, %v490
  %v581 = vpack.c.b16 %v501, %v491
  %v582 = vpack.c.b16 %v502, %v492
  %v583 = vpack.c.b16 %v503, %v493
  %v824 = vunpack.c.l.b16 %v104
  %v825 = vunpack.c.l.b16 %v105
  %v826 = vunpack.c.l.b16 %v106
  %v827 = vunpack.c.l.b16 %v107
  %v828 = vunpack.c.l.b16 %v108
  %v829 = vunpack.c.l.b16 %v109
  %v830 = vunpack.c.l.b16 %v110
  %v831 = vunpack.c.l.b16 %v111
  %v832 = vunpack.c.l.b16 %v112
  %v833 = vunpack.c.l.b16 %v113
  %v834 = vunpack.c.l.b16 %v114
  %v835 = vunpack.c.l.b16 %v115
  %v836 = vunpack.c.l.b16 %v116
  %v837 = vunpack.c.l.b16 %v117
  %v838 = vunpack.c.l.b16 %v118
  %v839 = vunpack.c.l.b16 %v119
  %v840 = vunpack.c.l.b16 %v120
  %v841 = vunpack.c.l.b16 %v121
  %v842 = vunpack.c.l.b16 %v122
  %v843 = vunpack.c.l.b16 %v123
  %v844 = vunpack.c.l.b16 %v124
  %v845 = vunpack.c.l.b16 %v125
  %v846 = vunpack.c.l.b16 %v126
  %v847 = vunpack.c.l.b16 %v127
  %v848 = vunpack.c.l.b16 %v128
  %v849 = vunpack.c.l.b16 %v129
  %v850 = vunpack.c.l.b16 %v130
  %v851 = vunpack.c.l.b16 %v131
  %v852 = vunpack.c.l.b16 %v132
  %v853 = vunpack.c.l.b16 %v133
  %v854 = vunpack.c.l.b16 %v134
  %v855 = vunpack.c.l.b16 %v135
  %v856 = vunpack.c.l.b16 %v136
  %v857 = vunpack.c.l.b16 %v137
  %v858 = vunpack.c.l.b16 %v138
  %v859 = vunpack.c.l.b16 %v139
  %v860 = vunpack.c.l.b16 %v140
  %v861 = vunpack.c.l.b16 %v141
  %v862 = vunpack.c.l.b16 %v142
  %v863 = vunpack.c.l.b16 %v143
  %v864 = vunpack.c.l.b16 %v144
  %v865 = vunpack.c.l.b16 %v145
  %v866 = vunpack.c.l.b16 %v146
  %v867 = vunpack.c.l.b16 %v147
  %v868 = vunpack.c.l.b16 %v148
  %v869 = vunpack.c.l.b16 %v149
  %v870 = vunpack.c.l.b16 %v150
  %v871 = vunpack.c.l.b16 %v151
  %v872 = vunpack.c.l.b16 %v152
  %v873 = vunpack.c.l.b16 %v153
  %v874 = vunpack.c.l.b16 %v154
  %v875 = vunpack.c.l.b16 %v155
  %v876 = vunpack.c.l.b16 %v156
  %v877 = vunpack.c.l.b16 %v157
  %v878 = vunpack.c.l.b16 %v158
  %v879 = vunpack.c.l.b16 %v159
  %v880 = vunpack.c.l.b16 %v160
  %v881 = vunpack.c.l.b16 %v161
  %v882 = vunpack.c.l.b16 %v162
  %v883 = vunpack.c.l.b16 %v163
  %v884 = vunpack.c.l.b16 %v164
  %v885 = vunpack.c.l.b16 %v165
  %v886 = vunpack.c.l.b16 %v166
  %v887 = vunpack.c.l.b16 %v167
  %v888 = vunpack.c.l.b16 %v168
  %v889 = vunpack.c.l.b16 %v169
  %v890 = vunpack.c.l.b16 %v170
  %v891 = vunpack.c.l.b16 %v171
  %v892 = vunpack.c.l.b16 %v172
  %v893 = vunpack.c.l.b16 %v173
  %v894 = vunpack.c.l.b16 %v174
  %v895 = vunpack.c.l.b16 %v175
  %v896 = vunpack.c.l.b16 %v176
  %v897 = vunpack.c.l.b16 %v177
  %v898 = vunpack.c.l.b16 %v178
  %v899 = vunpack.c.l.b16 %v179
  %v900 = vunpack.c.l.b16 %v180
  %v901 = vunpack.c.l.b16 %v181
  %v902 = vunpack.c.l.b16 %v182
  %v903 = vunpack.c.l.b16 %v183
  %v904 = vunpack.c.l.b16 %v184
  %v905 = vunpack.c.l.b16 %v185
  %v906 = vunpack.c.l.b16 %v186
  %v907 = vunpack.c.l.b16 %v187
  %v908 = vunpack.c.l.b16 %v188
  %v909 = vunpack.c.l.b16 %v189
  %v910 = vunpack.c.l.b16 %v190
  %v911 = vunpack.c.l.b16 %v191
  %v912 = vunpack.c.l.b16 %v192
  %v913 = vunpack.c.l.b16 %v193
  %v914 = vunpack.c.l.b16 %v194
  %v915 = vunpack.c.l.b16 %v195
  %v916 = vunpack.c.l.b16 %v196
  %v917 = vunpack.c.l.b16 %v197
  %v918 = vunpack.c.l.b16 %v198
  %v919 = vunpack.c.l.b16 %v199
  %v920 = vunpack.c.l.b16 %v200
  %v921 = vunpack.c.l.b16 %v201
  %v922 = vunpack.c.l.b16 %v202
  %v923 = vunpack.c.l.b16 %v203
  %v924 = vunpack.c.l.b16 %v204
  %v925 = vunpack.c.l.b16 %v205
  %v926 = vunpack.c.l.b16 %v206
  %v927 = vunpack.c.l.b16 %v207
  %v928 = vunpack.c.l.b16 %v208
  %v929 = vunpack.c.l.b16 %v209
  %v930 = vunpack.c.l.b16 %v210
  %v931 = vunpack.c.l.b16 %v211
  %v932 = vunpack.c.l.b16 %v212
  %v933 = vunpack.c.l.b16 %v213
  %v934 = vunpack.c.l.b16 %v214
  %v935 = vunpack.c.l.b16 %v215
  %v936 = vunpack.c.l.b16 %v216
  %v937 = vunpack.c.l.b16 %v217
  %v938 = vunpack.c.l.b16 %v218
  %v939 = vunpack.c.l.b16 %v219
  %v940 = vunpack.c.l.b16 %v220
  %v941 = vunpack.c.l.b16 %v221
  %v942 = vunpack.c.l.b16 %v222
  %v943 = vunpack.c.l.b16 %v223
  %v944 = vunpack.c.l.b16 %v224
  %v945 = vunpack.c.l.b16 %v225
  %v946 = vunpack.c.l.b16 %v226
  %v947 = vunpack.c.l.b16 %v227
  %v948 = vunpack.c.l.b16 %v228
  %v949 = vunpack.c.l.b16 %v229
  %v950 = vunpack.c.l.b16 %v230
  %v951 = vunpack.c.l.b16 %v231
  %v952 = vunpack.c.l.b16 %v232
  %v953 = vunpack.c.l.b16 %v233
  %v954 = vunpack.c.l.b16 %v234
  %v955 = vunpack.c.l.b16 %v235
  %v956 = vunpack.c.l.b16 %v236
  %v957 = vunpack.c.l.b16 %v237
  %v958 = vunpack.c.l.b16 %v238
  %v959 = vunpack.c.l.b16 %v239
  %v960 = vunpack.c.l.b16 %v240
  %v961 = vunpack.c.l.b16 %v241
  %v962 = vunpack.c.l.b16 %v242
  %v963 = vunpack.c.l.b16 %v243
  %v964 = vunpack.c.l.b16 %v244
  %v965 = vunpack.c.l.b16 %v245
  %v966 = vunpack.c.l.b16 %v246
  %v967 = vunpack.c.l.b16 %v247
  %v968 = vunpack.c.l.b16 %v248
  %v969 = vunpack.c.l.b16 %v249
  %v970 = vunpack.c.l.b16 %v250
  %v971 = vunpack.c.l.b16 %v251
  %v972 = vunpack.c.l.b16 %v252
  %v973 = vunpack.c.l.b16 %v253
  %v974 = vunpack.c.l.b16 %v254
  %v975 = vunpack.c.l.b16 %v255
  %v976 = vunpack.c.l.b16 %v256
  %v977 = vunpack.c.l.b16 %v257
  %v978 = vunpack.c.l.b16 %v258
  %v979 = vunpack.c.l.b16 %v259
  %v980 = vunpack.c.l.b16 %v260
  %v981 = vunpack.c.l.b16 %v261
  %v982 = vunpack.c.l.b16 %v262
  %v983 = vunpack.c.l.b16 %v263
  %v984 = vpack.c.b16 %v825, %v824
  %v985 = vpack.c.b16 %v827, %v826
  %v986 = vpack.c.b16 %v829, %v828
  %v987 = vpack.c.b16 %v831, %v830
  %v988 = vpack.c.b16 %v833, %v832
  %v989 = vpack.c.b16 %v835, %v834
  %v990 = vpack.c.b16 %v837, %v836
  %v991 = vpack.c.b16 %v839, %v838
  %v992 = vpack.c.b16 %v841, %v840
  %v993 = vpack.c.b16 %v843, %v842
  %v994 = vpack.c.b16 %v845, %v844
  %v995 = vpack.c.b16 %v847, %v846
  %v996 = vpack.c.b16 %v849, %v848
  %v997 = vpack.c.b16 %v851, %v850
  %v998 = vpack.c.b16 %v853, %v852
  %v999 = vpack.c.b16 %v855, %v854
  %v1000 = vpack.c.b16 %v857, %v856
  %v1001 = vpack.c.b16 %v859, %v858
  %v1002 = vpack.c.b16 %v861, %v860
  %v1003 = vpack.c.b16 %v863, %v862
  %v1004 = vpack.c.b16 %v865, %v864
  %v1005 = vpack.c.b16 %v867, %v866
  %v1006 = vpack.c.b16 %v869, %v868
  %v1007 = vpack.c.b16 %v871, %v870
  %v1008 = vpack.c.b16 %v873, %v872
  %v1009 = vpack.c.b16 %v875, %v874
  %v1010 = vpack.c.b16 %v877, %v876
  %v1011 = vpack.c.b16 %v879, %v878
  %v1012 = vpack.c.b16 %v881, %v880
  %v1013 = vpack.c.b16 %v883, %v882
  %v1014 = vpack.c.b16 %v885, %v884
  %v1015 = vpack.c.b16 %v887, %v886
  %v1016 = vpack.c.b16 %v889, %v888
  %v1017 = vpack.c.b16 %v891, %v890
  %v1018 = vpack.c.b16 %v893, %v892
  %v1019 = vpack.c.b16 %v895, %v894
  %v1020 = vpack.c.b16 %v897, %v896
  %v1021 = vpack.c.b16 %v899, %v898
  %v1022 = vpack.c.b16 %v901, %v900
  %v1023 = vpack.c.b16 %v903, %v902
  %v1024 = vpack.c.b16 %v905, %v904
  %v1025 = vpack.c.b16 %v907, %v906
  %v1026 = vpack.c.b16 %v909, %v908
  %v1027 = vpack.c.b16 %v911, %v910
  %v1028 = vpack.c.b16 %v913, %v912
  %v1029 = vpack.c.b16 %v915, %v914
  %v1030 = vpack.c.b16 %v917, %v916
  %v1031 = vpack.c.b16 %v919, %v918
  %v1032 = vpack.c.b16 %v921, %v920
  %v1033 = vpack.c.b16 %v923, %v922
  %v1034 = vpack.c.b16 %v925, %v924
  %v1035 = vpack.c.b16 %v927, %v926
  %v1036 = vpack.c.b16 %v929, %v928
  %v1037 = vpack.c.b16 %v931, %v930
  %v1038 = vpack.c.b16 %v933, %v932
  %v1039 = vpack.c.b16 %v935, %v934
  %v1040 = vpack.c.b16 %v937, %v936
  %v1041 = vpack.c.b16 %v939, %v938
  %v1042 = vpack.c.b16 %v941, %v940
  %v1043 = vpack.c.b16 %v943, %v942
  %v1044 = vpack.c.b16 %v945, %v944
  %v1045 = vpack.c.b16 %v947, %v946
  %v1046 = vpack.c.b16 %v949, %v948
  %v1047 = vpack.c.b16 %v951, %v950
  %v1048 = vpack.c.b16 %v953, %v952
  %v1049 = vpack.c.b16 %v955, %v954
  %v1050 = vpack.c.b16 %v957, %v956
  %v1051 = vpack.c.b16 %v959, %v958
  %v1052 = vpack.c.b16 %v961, %v960
  %v1053 = vpack.c.b16 %v963, %v962
  %v1054 = vpack.c.b16 %v965, %v964
  %v1055 = vpack.c.b16 %v967, %v966
  %v1056 = vpack.c.b16 %v969, %v968
  %v1057 = vpack.c.b16 %v971, %v970
  %v1058 = vpack.c.b16 %v973, %v972
  %v1059 = vpack.c.b16 %v975, %v974
  %v1060 = vpack.c.b16 %v977, %v976
  %v1061 = vpack.c.b16 %v979, %v978
  %v1062 = vpack.c.b16 %v981, %v980
  %v1063 = vpack.c.b16 %v983, %v982
  %1144 = vmatprep.subr.bf16.mxu0 0
  %1145 = vmatpush1.bf16.msra.mxu0 %v984
  %1146 = vmatprep.subr.bf16.mxu0 0
  %1147 = vmatpush1.bf16.msra.mxu0 %v985
  %1148 = vmatprep.subr.bf16.mxu0 0
  %1149 = vmatpush1.bf16.msra.mxu0 %v986
  %1150 = vmatprep.subr.bf16.mxu0 0
  %1151 = vmatpush1.bf16.msra.mxu0 %v987
  %1152 = vmatprep.subr.bf16.mxu0 0
  %1153 = vmatpush1.bf16.msra.mxu0 %v988
  %1154 = vmatprep.subr.bf16.mxu0 0
  %1155 = vmatpush1.bf16.msra.mxu0 %v989
  %1156 = vmatprep.subr.bf16.mxu0 0
  %1157 = vmatpush1.bf16.msra.mxu0 %v990
  %1158 = vmatprep.subr.bf16.mxu0 0
  %1159 = vmatpush1.bf16.msra.mxu0 %v991
  %1160 = vmatprep.subr.bf16.mxu0 0
  %1161 = vmatpush1.bf16.msra.mxu0 %v992
  %1162 = vmatprep.subr.bf16.mxu0 0
  %1163 = vmatpush1.bf16.msra.mxu0 %v993
  %1164 = vmatprep.subr.bf16.mxu0 0
  %1165 = vmatpush1.bf16.msra.mxu0 %v994
  %1166 = vmatprep.subr.bf16.mxu0 0
  %1167 = vmatpush1.bf16.msra.mxu0 %v995
  %1168 = vmatprep.subr.bf16.mxu0 0
  %1169 = vmatpush1.bf16.msra.mxu0 %v996
  %1170 = vmatprep.subr.bf16.mxu0 0
  %1171 = vmatpush1.bf16.msra.mxu0 %v997
  %1172 = vmatprep.subr.bf16.mxu0 0
  %1173 = vmatpush1.bf16.msra.mxu0 %v998
  %1174 = vmatprep.subr.bf16.mxu0 0
  %1175 = vmatpush1.bf16.msra.mxu0 %v999
  %1176 = vmatprep.mubr.bf16.mxu0 %v505
  %1177 = vmatmul.mubr.bf16.gmra.mrb[0].mxu0 %v504
  %v1178 = vpop.f32.mrb[0].mxu0
  %v1179 = vadd.f32 0.0, %v1178
  %v1180 = vpop.f32.mrb[0].mxu0
  %v1181 = vpop.f32.mrb[0].mxu0
  %v1182 = vadd.f32 0.0, %v1181
  %v1183 = vpop.f32.mrb[0].mxu0
  %1184 = vmatprep.mubr.bf16.mxu0 %v515
  %1185 = vmatmul.mubr.bf16.gmra.mrb[0].mxu0 %v514
  %v1186 = vpop.f32.mrb[0].mxu0
  %v1187 = vadd.f32 0.0, %v1186
  %v1188 = vpop.f32.mrb[0].mxu0
  %v1189 = vpop.f32.mrb[0].mxu0
  %v1190 = vadd.f32 0.0, %v1189
  %v1191 = vpop.f32.mrb[0].mxu0
  %1192 = vmatprep.mubr.bf16.mxu0 %v525
  %1193 = vmatmul.mubr.bf16.gmra.mrb[0].mxu0 %v524
  %v1194 = vpop.f32.mrb[0].mxu0
  %v1195 = vadd.f32 0.0, %v1194
  %v1196 = vpop.f32.mrb[0].mxu0
  %v1197 = vpop.f32.mrb[0].mxu0
  %v1198 = vadd.f32 0.0, %v1197
  %v1199 = vpop.f32.mrb[0].mxu0
  %1200 = vmatprep.mubr.bf16.mxu0 %v535
  %1201 = vmatmul.mubr.bf16.gmra.mrb[0].mxu0 %v534
  %v1202 = vpop.f32.mrb[0].mxu0
  %v1203 = vadd.f32 0.0, %v1202
  %v1204 = vpop.f32.mrb[0].mxu0
  %v1205 = vpop.f32.mrb[0].mxu0
  %v1206 = vadd.f32 0.0, %v1205
  %v1207 = vpop.f32.mrb[0].mxu0
  %1208 = vmatprep.mubr.bf16.mxu0 %v545
  %1209 = vmatmul.mubr.bf16.gmra.mrb[0].mxu0 %v544
  %v1210 = vpop.f32.mrb[0].mxu0
  %v1211 = vadd.f32 0.0, %v1210
  %v1212 = vpop.f32.mrb[0].mxu0
  %v1213 = vpop.f32.mrb[0].mxu0
  %v1214 = vadd.f32 0.0, %v1213
  %v1215 = vpop.f32.mrb[0].mxu0
  %1216 = vmatprep.mubr.bf16.mxu0 %v555
  %1217 = vmatmul.mubr.bf16.gmra.mrb[0].mxu0 %v554
  %v1218 = vpop.f32.mrb[0].mxu0
  %v1219 = vadd.f32 0.0, %v1218
  %v1220 = vpop.f32.mrb[0].mxu0
  %v1221 = vpop.f32.mrb[0].mxu0
  %v1222 = vadd.f32 0.0, %v1221
  %v1223 = vpop.f32.mrb[0].mxu0
  %1224 = vmatprep.mubr.bf16.mxu0 %v565
  %1225 = vmatmul.mubr.bf16.gmra.mrb[0].mxu0 %v564
  %v1226 = vpop.f32.mrb[0].mxu0
  %v1227 = vadd.f32 0.0, %v1226
  %v1228 = vpop.f32.mrb[0].mxu0
  %v1229 = vpop.f32.mrb[0].mxu0
  %v1230 = vadd.f32 0.0, %v1229
  %v1231 = vpop.f32.mrb[0].mxu0
  %1232 = vmatprep.mubr.bf16.mxu0 %v575
  %1233 = vmatmul.mubr.bf16.gmra.mrb[0].mxu0 %v574
  %v1234 = vpop.f32.mrb[0].mxu0
  %v1235 = vadd.f32 0.0, %v1234
  %v1236 = vpop.f32.mrb[0].mxu0
  %v1237 = vpop.f32.mrb[0].mxu0
  %v1238 = vadd.f32 0.0, %v1237
  %v1239 = vpop.f32.mrb[0].mxu0
  %1240 = vdwg.mxu0
  %1241 = vmatprep.subr.bf16.mxu0 0
  %1242 = vmatpush1.bf16.msra.mxu0 %v1000
  %1243 = vmatprep.subr.bf16.mxu0 0
  %1244 = vmatpush1.bf16.msra.mxu0 %v1001
  %1245 = vmatprep.subr.bf16.mxu0 0
  %1246 = vmatpush1.bf16.msra.mxu0 %v1002
  %1247 = vmatprep.subr.bf16.mxu0 0
  %1248 = vmatpush1.bf16.msra.mxu0 %v1003
  %1249 = vmatprep.subr.bf16.mxu0 0
  %1250 = vmatpush1.bf16.msra.mxu0 %v1004
  %1251 = vmatprep.subr.bf16.mxu0 0
  %1252 = vmatpush1.bf16.msra.mxu0 %v1005
  %1253 = vmatprep.subr.bf16.mxu0 0
  %1254 = vmatpush1.bf16.msra.mxu0 %v1006
  %1255 = vmatprep.subr.bf16.mxu0 0
  %1256 = vmatpush1.bf16.msra.mxu0 %v1007
  %1257 = vmatprep.subr.bf16.mxu0 0
  %1258 = vmatpush1.bf16.msra.mxu0 %v1008
  %1259 = vmatprep.subr.bf16.mxu0 0
  %1260 = vmatpush1.bf16.msra.mxu0 %v1009
  %1261 = vmatprep.subr.bf16.mxu0 0
  %1262 = vmatpush1.bf16.msra.mxu0 %v1010
  %1263 = vmatprep.subr.bf16.mxu0 0
  %1264 = vmatpush1.bf16.msra.mxu0 %v1011
  %1265 = vmatprep.subr.bf16.mxu0 0
  %1266 = vmatpush1.bf16.msra.mxu0 %v1012
  %1267 = vmatprep.subr.bf16.mxu0 0
  %1268 = vmatpush1.bf16.msra.mxu0 %v1013
  %1269 = vmatprep.subr.bf16.mxu0 0
  %1270 = vmatpush1.bf16.msra.mxu0 %v1014
  %1271 = vmatprep.subr.bf16.mxu0 0
  %1272 = vmatpush1.bf16.msra.mxu0 %v1015
  %1273 = vmatprep.mubr.bf16.mxu0 %v507
  %1274 = vmatmul.mubr.bf16.gmra.mrb[0].mxu0 %v506
  %v1275 = vpop.f32.mrb[0].mxu0
  %v1276 = vadd.f32 %v1179, %v1275
  %v1277 = vpop.f32.mrb[0].mxu0
  %v1278 = vpop.f32.mrb[0].mxu0
  %v1279 = vadd.f32 %v1182, %v1278
  %v1280 = vpop.f32.mrb[0].mxu0
  %1281 = vmatprep.mubr.bf16.mxu0 %v517
  %1282 = vmatmul.mubr.bf16.gmra.mrb[0].mxu0 %v516
  %v1283 = vpop.f32.mrb[0].mxu0
  %v1284 = vadd.f32 %v1187, %v1283
  %v1285 = vpop.f32.mrb[0].mxu0
  %v1286 = vpop.f32.mrb[0].mxu0
  %v1287 = vadd.f32 %v1190, %v1286
  %v1288 = vpop.f32.mrb[0].mxu0
  %1289 = vmatprep.mubr.bf16.mxu0 %v527
  %1290 = vmatmul.mubr.bf16.gmra.mrb[0].mxu0 %v526
  %v1291 = vpop.f32.mrb[0].mxu0
  %v1292 = vadd.f32 %v1195, %v1291
  %v1293 = vpop.f32.mrb[0].mxu0
  %v1294 = vpop.f32.mrb[0].mxu0
  %v1295 = vadd.f32 %v1198, %v1294
  %v1296 = vpop.f32.mrb[0].mxu0
  %1297 = vmatprep.mubr.bf16.mxu0 %v537
  %1298 = vmatmul.mubr.bf16.gmra.mrb[0].mxu0 %v536
  %v1299 = vpop.f32.mrb[0].mxu0
  %v1300 = vadd.f32 %v1203, %v1299
  %v1301 = vpop.f32.mrb[0].mxu0
  %v1302 = vpop.f32.mrb[0].mxu0
  %v1303 = vadd.f32 %v1206, %v1302
  %v1304 = vpop.f32.mrb[0].mxu0
  %1305 = vmatprep.mubr.bf16.mxu0 %v547
  %1306 = vmatmul.mubr.bf16.gmra.mrb[0].mxu0 %v546
  %v1307 = vpop.f32.mrb[0].mxu0
  %v1308 = vadd.f32 %v1211, %v1307
  %v1309 = vpop.f32.mrb[0].mxu0
  %v1310 = vpop.f32.mrb[0].mxu0
  %v1311 = vadd.f32 %v1214, %v1310
  %v1312 = vpop.f32.mrb[0].mxu0
  %1313 = vmatprep.mubr.bf16.mxu0 %v557
  %1314 = vmatmul.mubr.bf16.gmra.mrb[0].mxu0 %v556
  %v1315 = vpop.f32.mrb[0].mxu0
  %v1316 = vadd.f32 %v1219, %v1315
  %v1317 = vpop.f32.mrb[0].mxu0
  %v1318 = vpop.f32.mrb[0].mxu0
  %v1319 = vadd.f32 %v1222, %v1318
  %v1320 = vpop.f32.mrb[0].mxu0
  %1321 = vmatprep.mubr.bf16.mxu0 %v567
  %1322 = vmatmul.mubr.bf16.gmra.mrb[0].mxu0 %v566
  %v1323 = vpop.f32.mrb[0].mxu0
  %v1324 = vadd.f32 %v1227, %v1323
  %v1325 = vpop.f32.mrb[0].mxu0
  %v1326 = vpop.f32.mrb[0].mxu0
  %v1327 = vadd.f32 %v1230, %v1326
  %v1328 = vpop.f32.mrb[0].mxu0
  %1329 = vmatprep.mubr.bf16.mxu0 %v577
  %1330 = vmatmul.mubr.bf16.gmra.mrb[0].mxu0 %v576
  %v1331 = vpop.f32.mrb[0].mxu0
  %v1332 = vadd.f32 %v1235, %v1331
  %v1333 = vpop.f32.mrb[0].mxu0
  %v1334 = vpop.f32.mrb[0].mxu0
  %v1335 = vadd.f32 %v1238, %v1334
  %v1336 = vpop.f32.mrb[0].mxu0
  %1337 = vdwg.mxu0
  %1338 = vmatprep.subr.bf16.mxu0 0
  %1339 = vmatpush1.bf16.msra.mxu0 %v1016
  %1340 = vmatprep.subr.bf16.mxu0 0
  %1341 = vmatpush1.bf16.msra.mxu0 %v1017
  %1342 = vmatprep.subr.bf16.mxu0 0
  %1343 = vmatpush1.bf16.msra.mxu0 %v1018
  %1344 = vmatprep.subr.bf16.mxu0 0
  %1345 = vmatpush1.bf16.msra.mxu0 %v1019
  %1346 = vmatprep.subr.bf16.mxu0 0
  %1347 = vmatpush1.bf16.msra.mxu0 %v1020
  %1348 = vmatprep.subr.bf16.mxu0 0
  %1349 = vmatpush1.bf16.msra.mxu0 %v1021
  %1350 = vmatprep.subr.bf16.mxu0 0
  %1351 = vmatpush1.bf16.msra.mxu0 %v1022
  %1352 = vmatprep.subr.bf16.mxu0 0
  %1353 = vmatpush1.bf16.msra.mxu0 %v1023
  %1354 = vmatprep.subr.bf16.mxu0 0
  %1355 = vmatpush1.bf16.msra.mxu0 %v1024
  %1356 = vmatprep.subr.bf16.mxu0 0
  %1357 = vmatpush1.bf16.msra.mxu0 %v1025
  %1358 = vmatprep.subr.bf16.mxu0 0
  %1359 = vmatpush1.bf16.msra.mxu0 %v1026
  %1360 = vmatprep.subr.bf16.mxu0 0
  %1361 = vmatpush1.bf16.msra.mxu0 %v1027
  %1362 = vmatprep.subr.bf16.mxu0 0
  %1363 = vmatpush1.bf16.msra.mxu0 %v1028
  %1364 = vmatprep.subr.bf16.mxu0 0
  %1365 = vmatpush1.bf16.msra.mxu0 %v1029
  %1366 = vmatprep.subr.bf16.mxu0 0
  %1367 = vmatpush1.bf16.msra.mxu0 %v1030
  %1368 = vmatprep.subr.bf16.mxu0 0
  %1369 = vmatpush1.bf16.msra.mxu0 %v1031
  %1370 = vmatprep.mubr.bf16.mxu0 %v509
  %1371 = vmatmul.mubr.bf16.gmra.mrb[0].mxu0 %v508
  %v1372 = vpop.f32.mrb[0].mxu0
  %v1373 = vadd.f32 %v1276, %v1372
  %v1374 = vpop.f32.mrb[0].mxu0
  %v1375 = vpop.f32.mrb[0].mxu0
  %v1376 = vadd.f32 %v1279, %v1375
  %v1377 = vpop.f32.mrb[0].mxu0
  %1378 = vmatprep.mubr.bf16.mxu0 %v519
  %1379 = vmatmul.mubr.bf16.gmra.mrb[0].mxu0 %v518
  %v1380 = vpop.f32.mrb[0].mxu0
  %v1381 = vadd.f32 %v1284, %v1380
  %v1382 = vpop.f32.mrb[0].mxu0
  %v1383 = vpop.f32.mrb[0].mxu0
  %v1384 = vadd.f32 %v1287, %v1383
  %v1385 = vpop.f32.mrb[0].mxu0
  %1386 = vmatprep.mubr.bf16.mxu0 %v529
  %1387 = vmatmul.mubr.bf16.gmra.mrb[0].mxu0 %v528
  %v1388 = vpop.f32.mrb[0].mxu0
  %v1389 = vadd.f32 %v1292, %v1388
  %v1390 = vpop.f32.mrb[0].mxu0
  %v1391 = vpop.f32.mrb[0].mxu0
  %v1392 = vadd.f32 %v1295, %v1391
  %v1393 = vpop.f32.mrb[0].mxu0
  %1394 = vmatprep.mubr.bf16.mxu0 %v539
  %1395 = vmatmul.mubr.bf16.gmra.mrb[0].mxu0 %v538
  %v1396 = vpop.f32.mrb[0].mxu0
  %v1397 = vadd.f32 %v1300, %v1396
  %v1398 = vpop.f32.mrb[0].mxu0
  %v1399 = vpop.f32.mrb[0].mxu0
  %v1400 = vadd.f32 %v1303, %v1399
  %v1401 = vpop.f32.mrb[0].mxu0
  %1402 = vmatprep.mubr.bf16.mxu0 %v549
  %1403 = vmatmul.mubr.bf16.gmra.mrb[0].mxu0 %v548
  %v1404 = vpop.f32.mrb[0].mxu0
  %v1405 = vadd.f32 %v1308, %v1404
  %v1406 = vpop.f32.mrb[0].mxu0
  %v1407 = vpop.f32.mrb[0].mxu0
  %v1408 = vadd.f32 %v1311, %v1407
  %v1409 = vpop.f32.mrb[0].mxu0
  %1410 = vmatprep.mubr.bf16.mxu0 %v559
  %1411 = vmatmul.mubr.bf16.gmra.mrb[0].mxu0 %v558
  %v1412 = vpop.f32.mrb[0].mxu0
  %v1413 = vadd.f32 %v1316, %v1412
  %v1414 = vpop.f32.mrb[0].mxu0
  %v1415 = vpop.f32.mrb[0].mxu0
  %v1416 = vadd.f32 %v1319, %v1415
  %v1417 = vpop.f32.mrb[0].mxu0
  %1418 = vmatprep.mubr.bf16.mxu0 %v569
  %1419 = vmatmul.mubr.bf16.gmra.mrb[0].mxu0 %v568
  %v1420 = vpop.f32.mrb[0].mxu0
  %v1421 = vadd.f32 %v1324, %v1420
  %v1422 = vpop.f32.mrb[0].mxu0
  %v1423 = vpop.f32.mrb[0].mxu0
  %v1424 = vadd.f32 %v1327, %v1423
  %v1425 = vpop.f32.mrb[0].mxu0
  %1426 = vmatprep.mubr.bf16.mxu0 %v579
  %1427 = vmatmul.mubr.bf16.gmra.mrb[0].mxu0 %v578
  %v1428 = vpop.f32.mrb[0].mxu0
  %v1429 = vadd.f32 %v1332, %v1428
  %v1430 = vpop.f32.mrb[0].mxu0
  %v1431 = vpop.f32.mrb[0].mxu0
  %v1432 = vadd.f32 %v1335, %v1431
  %v1433 = vpop.f32.mrb[0].mxu0
  %1434 = vdwg.mxu0
  %1435 = vmatprep.subr.bf16.mxu0 0
  %1436 = vmatpush1.bf16.msra.mxu0 %v1032
  %1437 = vmatprep.subr.bf16.mxu0 0
  %1438 = vmatpush1.bf16.msra.mxu0 %v1033
  %1439 = vmatprep.subr.bf16.mxu0 0
  %1440 = vmatpush1.bf16.msra.mxu0 %v1034
  %1441 = vmatprep.subr.bf16.mxu0 0
  %1442 = vmatpush1.bf16.msra.mxu0 %v1035
  %1443 = vmatprep.subr.bf16.mxu0 0
  %1444 = vmatpush1.bf16.msra.mxu0 %v1036
  %1445 = vmatprep.subr.bf16.mxu0 0
  %1446 = vmatpush1.bf16.msra.mxu0 %v1037
  %1447 = vmatprep.subr.bf16.mxu0 0
  %1448 = vmatpush1.bf16.msra.mxu0 %v1038
  %1449 = vmatprep.subr.bf16.mxu0 0
  %1450 = vmatpush1.bf16.msra.mxu0 %v1039
  %1451 = vmatprep.subr.bf16.mxu0 0
  %1452 = vmatpush1.bf16.msra.mxu0 %v1040
  %1453 = vmatprep.subr.bf16.mxu0 0
  %1454 = vmatpush1.bf16.msra.mxu0 %v1041
  %1455 = vmatprep.subr.bf16.mxu0 0
  %1456 = vmatpush1.bf16.msra.mxu0 %v1042
  %1457 = vmatprep.subr.bf16.mxu0 0
  %1458 = vmatpush1.bf16.msra.mxu0 %v1043
  %1459 = vmatprep.subr.bf16.mxu0 0
  %1460 = vmatpush1.bf16.msra.mxu0 %v1044
  %1461 = vmatprep.subr.bf16.mxu0 0
  %1462 = vmatpush1.bf16.msra.mxu0 %v1045
  %1463 = vmatprep.subr.bf16.mxu0 0
  %1464 = vmatpush1.bf16.msra.mxu0 %v1046
  %1465 = vmatprep.subr.bf16.mxu0 0
  %1466 = vmatpush1.bf16.msra.mxu0 %v1047
  %1467 = vmatprep.mubr.bf16.mxu0 %v511
  %1468 = vmatmul.mubr.bf16.gmra.mrb[0].mxu0 %v510
  %v1469 = vpop.f32.mrb[0].mxu0
  %v1470 = vadd.f32 %v1373, %v1469
  %v1471 = vpop.f32.mrb[0].mxu0
  %v1472 = vpop.f32.mrb[0].mxu0
  %v1473 = vadd.f32 %v1376, %v1472
  %v1474 = vpop.f32.mrb[0].mxu0
  %1475 = vmatprep.mubr.bf16.mxu0 %v521
  %1476 = vmatmul.mubr.bf16.gmra.mrb[0].mxu0 %v520
  %v1477 = vpop.f32.mrb[0].mxu0
  %v1478 = vadd.f32 %v1381, %v1477
  %v1479 = vpop.f32.mrb[0].mxu0
  %v1480 = vpop.f32.mrb[0].mxu0
  %v1481 = vadd.f32 %v1384, %v1480
  %v1482 = vpop.f32.mrb[0].mxu0
  %1483 = vmatprep.mubr.bf16.mxu0 %v531
  %1484 = vmatmul.mubr.bf16.gmra.mrb[0].mxu0 %v530
  %v1485 = vpop.f32.mrb[0].mxu0
  %v1486 = vadd.f32 %v1389, %v1485
  %v1487 = vpop.f32.mrb[0].mxu0
  %v1488 = vpop.f32.mrb[0].mxu0
  %v1489 = vadd.f32 %v1392, %v1488
  %v1490 = vpop.f32.mrb[0].mxu0
  %1491 = vmatprep.mubr.bf16.mxu0 %v541
  %1492 = vmatmul.mubr.bf16.gmra.mrb[0].mxu0 %v540
  %v1493 = vpop.f32.mrb[0].mxu0
  %v1494 = vadd.f32 %v1397, %v1493
  %v1495 = vpop.f32.mrb[0].mxu0
  %v1496 = vpop.f32.mrb[0].mxu0
  %v1497 = vadd.f32 %v1400, %v1496
  %v1498 = vpop.f32.mrb[0].mxu0
  %1499 = vmatprep.mubr.bf16.mxu0 %v551
  %1500 = vmatmul.mubr.bf16.gmra.mrb[0].mxu0 %v550
  %v1501 = vpop.f32.mrb[0].mxu0
  %v1502 = vadd.f32 %v1405, %v1501
  %v1503 = vpop.f32.mrb[0].mxu0
  %v1504 = vpop.f32.mrb[0].mxu0
  %v1505 = vadd.f32 %v1408, %v1504
  %v1506 = vpop.f32.mrb[0].mxu0
  %1507 = vmatprep.mubr.bf16.mxu0 %v561
  %1508 = vmatmul.mubr.bf16.gmra.mrb[0].mxu0 %v560
  %v1509 = vpop.f32.mrb[0].mxu0
  %v1510 = vadd.f32 %v1413, %v1509
  %v1511 = vpop.f32.mrb[0].mxu0
  %v1512 = vpop.f32.mrb[0].mxu0
  %v1513 = vadd.f32 %v1416, %v1512
  %v1514 = vpop.f32.mrb[0].mxu0
  %1515 = vmatprep.mubr.bf16.mxu0 %v571
  %1516 = vmatmul.mubr.bf16.gmra.mrb[0].mxu0 %v570
  %v1517 = vpop.f32.mrb[0].mxu0
  %v1518 = vadd.f32 %v1421, %v1517
  %v1519 = vpop.f32.mrb[0].mxu0
  %v1520 = vpop.f32.mrb[0].mxu0
  %v1521 = vadd.f32 %v1424, %v1520
  %v1522 = vpop.f32.mrb[0].mxu0
  %1523 = vmatprep.mubr.bf16.mxu0 %v581
  %1524 = vmatmul.mubr.bf16.gmra.mrb[0].mxu0 %v580
  %v1525 = vpop.f32.mrb[0].mxu0
  %v1526 = vadd.f32 %v1429, %v1525
  %v1527 = vpop.f32.mrb[0].mxu0
  %v1528 = vpop.f32.mrb[0].mxu0
  %v1529 = vadd.f32 %v1432, %v1528
  %v1530 = vpop.f32.mrb[0].mxu0
  %1531 = vdwg.mxu0
  %1532 = vmatprep.subr.bf16.mxu0 0
  %1533 = vmatpush1.bf16.msra.mxu0 %v1048
  %1534 = vmatprep.subr.bf16.mxu0 0
  %1535 = vmatpush1.bf16.msra.mxu0 %v1049
  %1536 = vmatprep.subr.bf16.mxu0 0
  %1537 = vmatpush1.bf16.msra.mxu0 %v1050
  %1538 = vmatprep.subr.bf16.mxu0 0
  %1539 = vmatpush1.bf16.msra.mxu0 %v1051
  %1540 = vmatprep.subr.bf16.mxu0 0
  %1541 = vmatpush1.bf16.msra.mxu0 %v1052
  %1542 = vmatprep.subr.bf16.mxu0 0
  %1543 = vmatpush1.bf16.msra.mxu0 %v1053
  %1544 = vmatprep.subr.bf16.mxu0 0
  %1545 = vmatpush1.bf16.msra.mxu0 %v1054
  %1546 = vmatprep.subr.bf16.mxu0 0
  %1547 = vmatpush1.bf16.msra.mxu0 %v1055
  %1548 = vmatprep.subr.bf16.mxu0 0
  %1549 = vmatpush1.bf16.msra.mxu0 %v1056
  %1550 = vmatprep.subr.bf16.mxu0 0
  %1551 = vmatpush1.bf16.msra.mxu0 %v1057
  %1552 = vmatprep.subr.bf16.mxu0 0
  %1553 = vmatpush1.bf16.msra.mxu0 %v1058
  %1554 = vmatprep.subr.bf16.mxu0 0
  %1555 = vmatpush1.bf16.msra.mxu0 %v1059
  %1556 = vmatprep.subr.bf16.mxu0 0
  %1557 = vmatpush1.bf16.msra.mxu0 %v1060
  %1558 = vmatprep.subr.bf16.mxu0 0
  %1559 = vmatpush1.bf16.msra.mxu0 %v1061
  %1560 = vmatprep.subr.bf16.mxu0 0
  %1561 = vmatpush1.bf16.msra.mxu0 %v1062
  %1562 = vmatprep.subr.bf16.mxu0 0
  %1563 = vmatpush1.bf16.msra.mxu0 %v1063
  %1564 = vmatprep.mubr.bf16.mxu0 %v513
  %1565 = vmatmul.mubr.bf16.gmra.mrb[0].mxu0 %v512
  %v1566 = vpop.f32.mrb[0].mxu0
  %v1567 = vadd.f32 %v1470, %v1566
  %v1568 = vpop.f32.mrb[0].mxu0
  %v1569 = vpop.f32.mrb[0].mxu0
  %v1570 = vadd.f32 %v1473, %v1569
  %v1571 = vpop.f32.mrb[0].mxu0
  %1572 = vmatprep.mubr.bf16.mxu0 %v523
  %1573 = vmatmul.mubr.bf16.gmra.mrb[0].mxu0 %v522
  %v1574 = vpop.f32.mrb[0].mxu0
  %v1575 = vadd.f32 %v1478, %v1574
  %v1576 = vpop.f32.mrb[0].mxu0
  %v1577 = vpop.f32.mrb[0].mxu0
  %v1578 = vadd.f32 %v1481, %v1577
  %v1579 = vpop.f32.mrb[0].mxu0
  %1580 = vmatprep.mubr.bf16.mxu0 %v533
  %1581 = vmatmul.mubr.bf16.gmra.mrb[0].mxu0 %v532
  %v1582 = vpop.f32.mrb[0].mxu0
  %v1583 = vadd.f32 %v1486, %v1582
  %v1584 = vpop.f32.mrb[0].mxu0
  %v1585 = vpop.f32.mrb[0].mxu0
  %v1586 = vadd.f32 %v1489, %v1585
  %v1587 = vpop.f32.mrb[0].mxu0
  %1588 = vmatprep.mubr.bf16.mxu0 %v543
  %1589 = vmatmul.mubr.bf16.gmra.mrb[0].mxu0 %v542
  %v1590 = vpop.f32.mrb[0].mxu0
  %v1591 = vadd.f32 %v1494, %v1590
  %v1592 = vpop.f32.mrb[0].mxu0
  %v1593 = vpop.f32.mrb[0].mxu0
  %v1594 = vadd.f32 %v1497, %v1593
  %v1595 = vpop.f32.mrb[0].mxu0
  %1596 = vmatprep.mubr.bf16.mxu0 %v553
  %1597 = vmatmul.mubr.bf16.gmra.mrb[0].mxu0 %v552
  %v1598 = vpop.f32.mrb[0].mxu0
  %v1599 = vadd.f32 %v1502, %v1598
  %v1600 = vpop.f32.mrb[0].mxu0
  %v1601 = vpop.f32.mrb[0].mxu0
  %v1602 = vadd.f32 %v1505, %v1601
  %v1603 = vpop.f32.mrb[0].mxu0
  %1604 = vmatprep.mubr.bf16.mxu0 %v563
  %1605 = vmatmul.mubr.bf16.gmra.mrb[0].mxu0 %v562
  %v1606 = vpop.f32.mrb[0].mxu0
  %v1607 = vadd.f32 %v1510, %v1606
  %v1608 = vpop.f32.mrb[0].mxu0
  %v1609 = vpop.f32.mrb[0].mxu0
  %v1610 = vadd.f32 %v1513, %v1609
  %v1611 = vpop.f32.mrb[0].mxu0
  %1612 = vmatprep.mubr.bf16.mxu0 %v573
  %1613 = vmatmul.mubr.bf16.gmra.mrb[0].mxu0 %v572
  %v1614 = vpop.f32.mrb[0].mxu0
  %v1615 = vadd.f32 %v1518, %v1614
  %v1616 = vpop.f32.mrb[0].mxu0
  %v1617 = vpop.f32.mrb[0].mxu0
  %v1618 = vadd.f32 %v1521, %v1617
  %v1619 = vpop.f32.mrb[0].mxu0
  %1620 = vmatprep.mubr.bf16.mxu0 %v583
  %1621 = vmatmul.mubr.bf16.gmra.mrb[0].mxu0 %v582
  %v1622 = vpop.f32.mrb[0].mxu0
  %v1623 = vadd.f32 %v1526, %v1622
  %v1624 = vpop.f32.mrb[0].mxu0
  %v1625 = vpop.f32.mrb[0].mxu0
  %v1626 = vadd.f32 %v1529, %v1625
  %v1627 = vpop.f32.mrb[0].mxu0
  %1628 = vdwg.mxu0
  %v1629 = vld [vmem:[%s2] sm:$0x1]
  %v1630 = vlaneseq
  %v1631 = vshrl.u32 %v1630, 7
  %v1632 = vsub.s32 0, %v1631
  %v1633 = vrot.slane %v1629, %v1632
  %v1634 = vmul.f32 %v1567, %v1633
  %v1635 = vmul.f32 %v1570, %v1633
  %v1636 = vmul.f32 %v1575, %v1633
  %v1637 = vmul.f32 %v1578, %v1633
  %v1638 = vmul.f32 %v1583, %v1633
  %v1639 = vmul.f32 %v1586, %v1633
  %v1640 = vmul.f32 %v1591, %v1633
  %v1641 = vmul.f32 %v1594, %v1633
  %v1642 = vmul.f32 %v1599, %v1633
  %v1643 = vmul.f32 %v1602, %v1633
  %v1644 = vmul.f32 %v1607, %v1633
  %v1645 = vmul.f32 %v1610, %v1633
  %v1646 = vmul.f32 %v1615, %v1633
  %v1647 = vmul.f32 %v1618, %v1633
  %v1648 = vmul.f32 %v1623, %v1633
  %v1649 = vmul.f32 %v1626, %v1633
  %v1650 = vld [vmem:[%s2 + $0x1] sm:$0x1]
  %v1651 = vlaneseq
  %v1652 = vshrl.u32 %v1651, 7
  %v1653 = vsub.s32 0, %v1652
  %v1654 = vrot.slane %v1650, %v1653
  %v1655 = vadd.f32 %v1634, %v1654
  %v1656 = vadd.f32 %v1635, %v1654
  %v1657 = vadd.f32 %v1636, %v1654
  %v1658 = vadd.f32 %v1637, %v1654
  %v1659 = vadd.f32 %v1638, %v1654
  %v1660 = vadd.f32 %v1639, %v1654
  %v1661 = vadd.f32 %v1640, %v1654
  %v1662 = vadd.f32 %v1641, %v1654
  %v1663 = vadd.f32 %v1642, %v1654
  %v1664 = vadd.f32 %v1643, %v1654
  %v1665 = vadd.f32 %v1644, %v1654
  %v1666 = vadd.f32 %v1645, %v1654
  %v1667 = vadd.f32 %v1646, %v1654
  %v1668 = vadd.f32 %v1647, %v1654
  %v1669 = vadd.f32 %v1648, %v1654
  %v1670 = vadd.f32 %v1649, %v1654
  %vm1671 = vcmp.ge.f32.partialorder %v1655, 0.0
  %vm1672 = vcmp.ge.f32.partialorder %v1656, 0.0
  %vm1673 = vcmp.ge.f32.partialorder %v1657, 0.0
  %vm1674 = vcmp.ge.f32.partialorder %v1658, 0.0
  %vm1675 = vcmp.ge.f32.partialorder %v1659, 0.0
  %vm1676 = vcmp.ge.f32.partialorder %v1660, 0.0
  %vm1677 = vcmp.ge.f32.partialorder %v1661, 0.0
  %vm1678 = vcmp.ge.f32.partialorder %v1662, 0.0
  %vm1679 = vcmp.ge.f32.partialorder %v1663, 0.0
  %vm1680 = vcmp.ge.f32.partialorder %v1664, 0.0
  %vm1681 = vcmp.ge.f32.partialorder %v1665, 0.0
  %vm1682 = vcmp.ge.f32.partialorder %v1666, 0.0
  %vm1683 = vcmp.ge.f32.partialorder %v1667, 0.0
  %vm1684 = vcmp.ge.f32.partialorder %v1668, 0.0
  %vm1685 = vcmp.ge.f32.partialorder %v1669, 0.0
  %vm1686 = vcmp.ge.f32.partialorder %v1670, 0.0
  %v1687 = vmul.f32 %v1655, 0.2
  %v1688 = vmul.f32 %v1656, 0.2
  %v1689 = vmul.f32 %v1657, 0.2
  %v1690 = vmul.f32 %v1658, 0.2
  %v1691 = vmul.f32 %v1659, 0.2
  %v1692 = vmul.f32 %v1660, 0.2
  %v1693 = vmul.f32 %v1661, 0.2
  %v1694 = vmul.f32 %v1662, 0.2
  %v1695 = vmul.f32 %v1663, 0.2
  %v1696 = vmul.f32 %v1664, 0.2
  %v1697 = vmul.f32 %v1665, 0.2
  %v1698 = vmul.f32 %v1666, 0.2
  %v1699 = vmul.f32 %v1667, 0.2
  %v1700 = vmul.f32 %v1668, 0.2
  %v1701 = vmul.f32 %v1669, 0.2
  %v1702 = vmul.f32 %v1670, 0.2
  %v1703 = vsel %vm1671, %v1655, %v1687
  %v1704 = vsel %vm1672, %v1656, %v1688
  %v1705 = vsel %vm1673, %v1657, %v1689
  %v1706 = vsel %vm1674, %v1658, %v1690
  %v1707 = vsel %vm1675, %v1659, %v1691
  %v1708 = vsel %vm1676, %v1660, %v1692
  %v1709 = vsel %vm1677, %v1661, %v1693
  %v1710 = vsel %vm1678, %v1662, %v1694
  %v1711 = vsel %vm1679, %v1663, %v1695
  %v1712 = vsel %vm1680, %v1664, %v1696
  %v1713 = vsel %vm1681, %v1665, %v1697
  %v1714 = vsel %vm1682, %v1666, %v1698
  %v1715 = vsel %vm1683, %v1667, %v1699
  %v1716 = vsel %vm1684, %v1668, %v1700
  %v1717 = vsel %vm1685, %v1669, %v1701
  %v1718 = vsel %vm1686, %v1670, %v1702
  %v1719 = vpack.c.bf16 %v1703, %v1703
  %v1720 = vld [vmem:[%s3] sm:$0xff]
  %v1721 = vld [vmem:[%s3 + $0x8] sm:$0xff]
  %v1722 = vld [vmem:[%s3 + $0x10] sm:$0xff]
  %v1723 = vld [vmem:[%s3 + $0x18] sm:$0xff]
  %v1724 = vld [vmem:[%s3 + $0x20] sm:$0xff]
  %v1725 = vld [vmem:[%s3 + $0x28] sm:$0xff]
  %v1726 = vld [vmem:[%s3 + $0x30] sm:$0xff]
  %v1727 = vld [vmem:[%s3 + $0x38] sm:$0xff]
  %v1728 = vld [vmem:[%s3 + $0x40] sm:$0xff]
  %v1729 = vld [vmem:[%s3 + $0x48] sm:$0xff]
  %v1730 = vld [vmem:[%s3 + $0x50] sm:$0xff]
  %v1731 = vld [vmem:[%s3 + $0x58] sm:$0xff]
  %v1732 = vld [vmem:[%s3 + $0x60] sm:$0xff]
  %v1733 = vld [vmem:[%s3 + $0x68] sm:$0xff]
  %v1734 = vld [vmem:[%s3 + $0x70] sm:$0xff]
  %v1735 = vld [vmem:[%s3 + $0x78] sm:$0xff]
  %v1736 = vpack.c.bf16 %v1704, %v1704
  %v1737 = vld [vmem:[%s3 + $0x80] sm:$0xff]
  %v1738 = vld [vmem:[%s3 + $0x88] sm:$0xff]
  %v1739 = vld [vmem:[%s3 + $0x90] sm:$0xff]
  %v1740 = vld [vmem:[%s3 + $0x98] sm:$0xff]
  %v1741 = vld [vmem:[%s3 + $0xa0] sm:$0xff]
  %v1742 = vld [vmem:[%s3 + $0xa8] sm:$0xff]
  %v1743 = vld [vmem:[%s3 + $0xb0] sm:$0xff]
  %v1744 = vld [vmem:[%s3 + $0xb8] sm:$0xff]
  %v1745 = vld [vmem:[%s3 + $0xc0] sm:$0xff]
  %v1746 = vld [vmem:[%s3 + $0xc8] sm:$0xff]
  %v1747 = vld [vmem:[%s3 + $0xd0] sm:$0xff]
  %v1748 = vld [vmem:[%s3 + $0xd8] sm:$0xff]
  %v1749 = vld [vmem:[%s3 + $0xe0] sm:$0xff]
  %v1750 = vld [vmem:[%s3 + $0xe8] sm:$0xff]
  %v1751 = vld [vmem:[%s3 + $0xf0] sm:$0xff]
  %v1752 = vld [vmem:[%s3 + $0xf8] sm:$0xff]
  %v1769 = vunpack.c.l.b16 %v1737
  %v1770 = vunpack.c.h.b16 %v1737
  %v1771 = vunpack.c.l.b16 %v1738
  %v1772 = vunpack.c.h.b16 %v1738
  %v1773 = vunpack.c.l.b16 %v1739
  %v1774 = vunpack.c.h.b16 %v1739
  %v1775 = vunpack.c.l.b16 %v1740
  %v1776 = vunpack.c.h.b16 %v1740
  %v1777 = vunpack.c.l.b16 %v1741
  %v1778 = vunpack.c.h.b16 %v1741
  %v1779 = vunpack.c.l.b16 %v1742
  %v1780 = vunpack.c.h.b16 %v1742
  %v1781 = vunpack.c.l.b16 %v1743
  %v1782 = vunpack.c.h.b16 %v1743
  %v1783 = vunpack.c.l.b16 %v1744
  %v1784 = vunpack.c.h.b16 %v1744
  %v1785 = vunpack.c.l.b16 %v1745
  %v1786 = vunpack.c.h.b16 %v1745
  %v1787 = vunpack.c.l.b16 %v1746
  %v1788 = vunpack.c.h.b16 %v1746
  %v1789 = vunpack.c.l.b16 %v1747
  %v1790 = vunpack.c.h.b16 %v1747
  %v1791 = vunpack.c.l.b16 %v1748
  %v1792 = vunpack.c.h.b16 %v1748
  %v1793 = vunpack.c.l.b16 %v1749
  %v1794 = vunpack.c.h.b16 %v1749
  %v1795 = vunpack.c.l.b16 %v1750
  %v1796 = vunpack.c.h.b16 %v1750
  %v1797 = vunpack.c.l.b16 %v1751
  %v1798 = vunpack.c.h.b16 %v1751
  %v1799 = vunpack.c.l.b16 %v1752
  %v1800 = vunpack.c.h.b16 %v1752
  %v1801 = vpack.c.b16 %v1771, %v1769
  %v1802 = vpack.c.b16 %v1772, %v1770
  %v1803 = vpack.c.b16 %v1775, %v1773
  %v1804 = vpack.c.b16 %v1776, %v1774
  %v1805 = vpack.c.b16 %v1779, %v1777
  %v1806 = vpack.c.b16 %v1780, %v1778
  %v1807 = vpack.c.b16 %v1783, %v1781
  %v1808 = vpack.c.b16 %v1784, %v1782
  %v1809 = vpack.c.b16 %v1787, %v1785
  %v1810 = vpack.c.b16 %v1788, %v1786
  %v1811 = vpack.c.b16 %v1791, %v1789
  %v1812 = vpack.c.b16 %v1792, %v1790
  %v1813 = vpack.c.b16 %v1795, %v1793
  %v1814 = vpack.c.b16 %v1796, %v1794
  %v1815 = vpack.c.b16 %v1799, %v1797
  %v1816 = vpack.c.b16 %v1800, %v1798
  %1833 = vmatprep.subr.bf16.mxu0 %v1802
  %1834 = vmatpush1.bf16.msra.mxu0 %v1801
  %1835 = vmatprep.subr.bf16.mxu0 %v1804
  %1836 = vmatpush1.bf16.msra.mxu0 %v1803
  %1837 = vmatprep.subr.bf16.mxu0 %v1806
  %1838 = vmatpush1.bf16.msra.mxu0 %v1805
  %1839 = vmatprep.subr.bf16.mxu0 %v1808
  %1840 = vmatpush1.bf16.msra.mxu0 %v1807
  %1841 = vmatprep.subr.bf16.mxu0 %v1810
  %1842 = vmatpush1.bf16.msra.mxu0 %v1809
  %1843 = vmatprep.subr.bf16.mxu0 %v1812
  %1844 = vmatpush1.bf16.msra.mxu0 %v1811
  %1845 = vmatprep.subr.bf16.mxu0 %v1814
  %1846 = vmatpush1.bf16.msra.mxu0 %v1813
  %1847 = vmatprep.subr.bf16.mxu0 %v1816
  %1848 = vmatpush1.bf16.msra.mxu0 %v1815
  %1849 = vmatprep.subr.bf16.mxu0 0
  %1850 = vmatpush1.bf16.msra.mxu0 0
  %1851 = vmatprep.subr.bf16.mxu0 0
  %1852 = vmatpush1.bf16.msra.mxu0 0
  %1853 = vmatprep.subr.bf16.mxu0 0
  %1854 = vmatpush1.bf16.msra.mxu0 0
  %1855 = vmatprep.subr.bf16.mxu0 0
  %1856 = vmatpush1.bf16.msra.mxu0 0
  %1857 = vmatprep.subr.bf16.mxu0 0
  %1858 = vmatpush1.bf16.msra.mxu0 0
  %1859 = vmatprep.subr.bf16.mxu0 0
  %1860 = vmatpush1.bf16.msra.mxu0 0
  %1861 = vmatprep.subr.bf16.mxu0 0
  %1862 = vmatpush1.bf16.msra.mxu0 0
  %1863 = vmatprep.subr.bf16.mxu0 0
  %1864 = vmatpush1.bf16.msra.mxu0 0
  %1865 = vmatprep.mubr.bf16.mxu0 0
  %1866 = vmatmul.mubr.bf16.gmra.mrb[0].mxu0 %v1736
  %v1867 = vpop.f32.mrb[0].mxu0
  %v1868 = vadd.f32 0.0, %v1867
  %v1869 = vpop.f32.mrb[0].mxu0
  %v1870 = vadd.f32 0.0, %v1869
  %v1871 = vpop.f32.mrb[0].mxu0
  %v1872 = vpop.f32.mrb[0].mxu0
  %1873 = vdwg.mxu0
  %v1890 = vunpack.c.l.b16 %v1720
  %v1891 = vunpack.c.h.b16 %v1720
  %v1892 = vunpack.c.l.b16 %v1721
  %v1893 = vunpack.c.h.b16 %v1721
  %v1894 = vunpack.c.l.b16 %v1722
  %v1895 = vunpack.c.h.b16 %v1722
  %v1896 = vunpack.c.l.b16 %v1723
  %v1897 = vunpack.c.h.b16 %v1723
  %v1898 = vunpack.c.l.b16 %v1724
  %v1899 = vunpack.c.h.b16 %v1724
  %v1900 = vunpack.c.l.b16 %v1725
  %v1901 = vunpack.c.h.b16 %v1725
  %v1902 = vunpack.c.l.b16 %v1726
  %v1903 = vunpack.c.h.b16 %v1726
  %v1904 = vunpack.c.l.b16 %v1727
  %v1905 = vunpack.c.h.b16 %v1727
  %v1906 = vunpack.c.l.b16 %v1728
  %v1907 = vunpack.c.h.b16 %v1728
  %v1908 = vunpack.c.l.b16 %v1729
  %v1909 = vunpack.c.h.b16 %v1729
  %v1910 = vunpack.c.l.b16 %v1730
  %v1911 = vunpack.c.h.b16 %v1730
  %v1912 = vunpack.c.l.b16 %v1731
  %v1913 = vunpack.c.h.b16 %v1731
  %v1914 = vunpack.c.l.b16 %v1732
  %v1915 = vunpack.c.h.b16 %v1732
  %v1916 = vunpack.c.l.b16 %v1733
  %v1917 = vunpack.c.h.b16 %v1733
  %v1918 = vunpack.c.l.b16 %v1734
  %v1919 = vunpack.c.h.b16 %v1734
  %v1920 = vunpack.c.l.b16 %v1735
  %v1921 = vunpack.c.h.b16 %v1735
  %v1922 = vpack.c.b16 %v1892, %v1890
  %v1923 = vpack.c.b16 %v1893, %v1891
  %v1924 = vpack.c.b16 %v1896, %v1894
  %v1925 = vpack.c.b16 %v1897, %v1895
  %v1926 = vpack.c.b16 %v1900, %v1898
  %v1927 = vpack.c.b16 %v1901, %v1899
  %v1928 = vpack.c.b16 %v1904, %v1902
  %v1929 = vpack.c.b16 %v1905, %v1903
  %v1930 = vpack.c.b16 %v1908, %v1906
  %v1931 = vpack.c.b16 %v1909, %v1907
  %v1932 = vpack.c.b16 %v1912, %v1910
  %v1933 = vpack.c.b16 %v1913, %v1911
  %v1934 = vpack.c.b16 %v1916, %v1914
  %v1935 = vpack.c.b16 %v1917, %v1915
  %v1936 = vpack.c.b16 %v1920, %v1918
  %v1937 = vpack.c.b16 %v1921, %v1919
  %1954 = vmatprep.subr.bf16.mxu0 %v1923
  %1955 = vmatpush1.bf16.msra.mxu0 %v1922
  %1956 = vmatprep.subr.bf16.mxu0 %v1925
  %1957 = vmatpush1.bf16.msra.mxu0 %v1924
  %1958 = vmatprep.subr.bf16.mxu0 %v1927
  %1959 = vmatpush1.bf16.msra.mxu0 %v1926
  %1960 = vmatprep.subr.bf16.mxu0 %v1929
  %1961 = vmatpush1.bf16.msra.mxu0 %v1928
  %1962 = vmatprep.subr.bf16.mxu0 %v1931
  %1963 = vmatpush1.bf16.msra.mxu0 %v1930
  %1964 = vmatprep.subr.bf16.mxu0 %v1933
  %1965 = vmatpush1.bf16.msra.mxu0 %v1932
  %1966 = vmatprep.subr.bf16.mxu0 %v1935
  %1967 = vmatpush1.bf16.msra.mxu0 %v1934
  %1968 = vmatprep.subr.bf16.mxu0 %v1937
  %1969 = vmatpush1.bf16.msra.mxu0 %v1936
  %1970 = vmatprep.subr.bf16.mxu0 0
  %1971 = vmatpush1.bf16.msra.mxu0 0
  %1972 = vmatprep.subr.bf16.mxu0 0
  %1973 = vmatpush1.bf16.msra.mxu0 0
  %1974 = vmatprep.subr.bf16.mxu0 0
  %1975 = vmatpush1.bf16.msra.mxu0 0
  %1976 = vmatprep.subr.bf16.mxu0 0
  %1977 = vmatpush1.bf16.msra.mxu0 0
  %1978 = vmatprep.subr.bf16.mxu0 0
  %1979 = vmatpush1.bf16.msra.mxu0 0
  %1980 = vmatprep.subr.bf16.mxu0 0
  %1981 = vmatpush1.bf16.msra.mxu0 0
  %1982 = vmatprep.subr.bf16.mxu0 0
  %1983 = vmatpush1.bf16.msra.mxu0 0
  %1984 = vmatprep.subr.bf16.mxu0 0
  %1985 = vmatpush1.bf16.msra.mxu0 0
  %1986 = vmatprep.mubr.bf16.mxu0 0
  %1987 = vmatmul.mubr.bf16.gmra.mrb[0].mxu0 %v1719
  %v1988 = vpop.f32.mrb[0].mxu0
  %v1989 = vadd.f32 %v1868, %v1988
  %v1990 = vpop.f32.mrb[0].mxu0
  %v1991 = vadd.f32 %v1870, %v1990
  %v1992 = vpop.f32.mrb[0].mxu0
  %v1993 = vpop.f32.mrb[0].mxu0
  %1994 = vdwg.mxu0
  %v1995 = vpack.c.bf16 %v1705, %v1705
  %v1996 = vld [vmem:[%s3 + $0x100] sm:$0xff]
  %v1997 = vld [vmem:[%s3 + $0x108] sm:$0xff]
  %v1998 = vld [vmem:[%s3 + $0x110] sm:$0xff]
  %v1999 = vld [vmem:[%s3 + $0x118] sm:$0xff]
  %v2000 = vld [vmem:[%s3 + $0x120] sm:$0xff]
  %v2001 = vld [vmem:[%s3 + $0x128] sm:$0xff]
  %v2002 = vld [vmem:[%s3 + $0x130] sm:$0xff]
  %v2003 = vld [vmem:[%s3 + $0x138] sm:$0xff]
  %v2004 = vld [vmem:[%s3 + $0x140] sm:$0xff]
  %v2005 = vld [vmem:[%s3 + $0x148] sm:$0xff]
  %v2006 = vld [vmem:[%s3 + $0x150] sm:$0xff]
  %v2007 = vld [vmem:[%s3 + $0x158] sm:$0xff]
  %v2008 = vld [vmem:[%s3 + $0x160] sm:$0xff]
  %v2009 = vld [vmem:[%s3 + $0x168] sm:$0xff]
  %v2010 = vld [vmem:[%s3 + $0x170] sm:$0xff]
  %v2011 = vld [vmem:[%s3 + $0x178] sm:$0xff]
  %v2028 = vunpack.c.l.b16 %v1996
  %v2029 = vunpack.c.h.b16 %v1996
  %v2030 = vunpack.c.l.b16 %v1997
  %v2031 = vunpack.c.h.b16 %v1997
  %v2032 = vunpack.c.l.b16 %v1998
  %v2033 = vunpack.c.h.b16 %v1998
  %v2034 = vunpack.c.l.b16 %v1999
  %v2035 = vunpack.c.h.b16 %v1999
  %v2036 = vunpack.c.l.b16 %v2000
  %v2037 = vunpack.c.h.b16 %v2000
  %v2038 = vunpack.c.l.b16 %v2001
  %v2039 = vunpack.c.h.b16 %v2001
  %v2040 = vunpack.c.l.b16 %v2002
  %v2041 = vunpack.c.h.b16 %v2002
  %v2042 = vunpack.c.l.b16 %v2003
  %v2043 = vunpack.c.h.b16 %v2003
  %v2044 = vunpack.c.l.b16 %v2004
  %v2045 = vunpack.c.h.b16 %v2004
  %v2046 = vunpack.c.l.b16 %v2005
  %v2047 = vunpack.c.h.b16 %v2005
  %v2048 = vunpack.c.l.b16 %v2006
  %v2049 = vunpack.c.h.b16 %v2006
  %v2050 = vunpack.c.l.b16 %v2007
  %v2051 = vunpack.c.h.b16 %v2007
  %v2052 = vunpack.c.l.b16 %v2008
  %v2053 = vunpack.c.h.b16 %v2008
  %v2054 = vunpack.c.l.b16 %v2009
  %v2055 = vunpack.c.h.b16 %v2009
  %v2056 = vunpack.c.l.b16 %v2010
  %v2057 = vunpack.c.h.b16 %v2010
  %v2058 = vunpack.c.l.b16 %v2011
  %v2059 = vunpack.c.h.b16 %v2011
  %v2060 = vpack.c.b16 %v2030, %v2028
  %v2061 = vpack.c.b16 %v2031, %v2029
  %v2062 = vpack.c.b16 %v2034, %v2032
  %v2063 = vpack.c.b16 %v2035, %v2033
  %v2064 = vpack.c.b16 %v2038, %v2036
  %v2065 = vpack.c.b16 %v2039, %v2037
  %v2066 = vpack.c.b16 %v2042, %v2040
  %v2067 = vpack.c.b16 %v2043, %v2041
  %v2068 = vpack.c.b16 %v2046, %v2044
  %v2069 = vpack.c.b16 %v2047, %v2045
  %v2070 = vpack.c.b16 %v2050, %v2048
  %v2071 = vpack.c.b16 %v2051, %v2049
  %v2072 = vpack.c.b16 %v2054, %v2052
  %v2073 = vpack.c.b16 %v2055, %v2053
  %v2074 = vpack.c.b16 %v2058, %v2056
  %v2075 = vpack.c.b16 %v2059, %v2057
  %2092 = vmatprep.subr.bf16.mxu0 %v2061
  %2093 = vmatpush1.bf16.msra.mxu0 %v2060
  %2094 = vmatprep.subr.bf16.mxu0 %v2063
  %2095 = vmatpush1.bf16.msra.mxu0 %v2062
  %2096 = vmatprep.subr.bf16.mxu0 %v2065
  %2097 = vmatpush1.bf16.msra.mxu0 %v2064
  %2098 = vmatprep.subr.bf16.mxu0 %v2067
  %2099 = vmatpush1.bf16.msra.mxu0 %v2066
  %2100 = vmatprep.subr.bf16.mxu0 %v2069
  %2101 = vmatpush1.bf16.msra.mxu0 %v2068
  %2102 = vmatprep.subr.bf16.mxu0 %v2071
  %2103 = vmatpush1.bf16.msra.mxu0 %v2070
  %2104 = vmatprep.subr.bf16.mxu0 %v2073
  %2105 = vmatpush1.bf16.msra.mxu0 %v2072
  %2106 = vmatprep.subr.bf16.mxu0 %v2075
  %2107 = vmatpush1.bf16.msra.mxu0 %v2074
  %2108 = vmatprep.subr.bf16.mxu0 0
  %2109 = vmatpush1.bf16.msra.mxu0 0
  %2110 = vmatprep.subr.bf16.mxu0 0
  %2111 = vmatpush1.bf16.msra.mxu0 0
  %2112 = vmatprep.subr.bf16.mxu0 0
  %2113 = vmatpush1.bf16.msra.mxu0 0
  %2114 = vmatprep.subr.bf16.mxu0 0
  %2115 = vmatpush1.bf16.msra.mxu0 0
  %2116 = vmatprep.subr.bf16.mxu0 0
  %2117 = vmatpush1.bf16.msra.mxu0 0
  %2118 = vmatprep.subr.bf16.mxu0 0
  %2119 = vmatpush1.bf16.msra.mxu0 0
  %2120 = vmatprep.subr.bf16.mxu0 0
  %2121 = vmatpush1.bf16.msra.mxu0 0
  %2122 = vmatprep.subr.bf16.mxu0 0
  %2123 = vmatpush1.bf16.msra.mxu0 0
  %2124 = vmatprep.mubr.bf16.mxu0 0
  %2125 = vmatmul.mubr.bf16.gmra.mrb[0].mxu0 %v1995
  %v2126 = vpop.f32.mrb[0].mxu0
  %v2127 = vadd.f32 0.0, %v2126
  %v2128 = vpop.f32.mrb[0].mxu0
  %v2129 = vadd.f32 0.0, %v2128
  %v2130 = vpop.f32.mrb[0].mxu0
  %v2131 = vpop.f32.mrb[0].mxu0
  %2132 = vdwg.mxu0
  %v2133 = vadd.f32 %v1989, %v2127
  %v2134 = vadd.f32 %v1991, %v2129
  %v2135 = vpack.c.bf16 %v1706, %v1706
  %v2136 = vld [vmem:[%s3 + $0x180] sm:$0xff]
  %v2137 = vld [vmem:[%s3 + $0x188] sm:$0xff]
  %v2138 = vld [vmem:[%s3 + $0x190] sm:$0xff]
  %v2139 = vld [vmem:[%s3 + $0x198] sm:$0xff]
  %v2140 = vld [vmem:[%s3 + $0x1a0] sm:$0xff]
  %v2141 = vld [vmem:[%s3 + $0x1a8] sm:$0xff]
  %v2142 = vld [vmem:[%s3 + $0x1b0] sm:$0xff]
  %v2143 = vld [vmem:[%s3 + $0x1b8] sm:$0xff]
  %v2144 = vld [vmem:[%s3 + $0x1c0] sm:$0xff]
  %v2145 = vld [vmem:[%s3 + $0x1c8] sm:$0xff]
  %v2146 = vld [vmem:[%s3 + $0x1d0] sm:$0xff]
  %v2147 = vld [vmem:[%s3 + $0x1d8] sm:$0xff]
  %v2148 = vld [vmem:[%s3 + $0x1e0] sm:$0xff]
  %v2149 = vld [vmem:[%s3 + $0x1e8] sm:$0xff]
  %v2150 = vld [vmem:[%s3 + $0x1f0] sm:$0xff]
  %v2151 = vld [vmem:[%s3 + $0x1f8] sm:$0xff]
  %v2168 = vunpack.c.l.b16 %v2136
  %v2169 = vunpack.c.h.b16 %v2136
  %v2170 = vunpack.c.l.b16 %v2137
  %v2171 = vunpack.c.h.b16 %v2137
  %v2172 = vunpack.c.l.b16 %v2138
  %v2173 = vunpack.c.h.b16 %v2138
  %v2174 = vunpack.c.l.b16 %v2139
  %v2175 = vunpack.c.h.b16 %v2139
  %v2176 = vunpack.c.l.b16 %v2140
  %v2177 = vunpack.c.h.b16 %v2140
  %v2178 = vunpack.c.l.b16 %v2141
  %v2179 = vunpack.c.h.b16 %v2141
  %v2180 = vunpack.c.l.b16 %v2142
  %v2181 = vunpack.c.h.b16 %v2142
  %v2182 = vunpack.c.l.b16 %v2143
  %v2183 = vunpack.c.h.b16 %v2143
  %v2184 = vunpack.c.l.b16 %v2144
  %v2185 = vunpack.c.h.b16 %v2144
  %v2186 = vunpack.c.l.b16 %v2145
  %v2187 = vunpack.c.h.b16 %v2145
  %v2188 = vunpack.c.l.b16 %v2146
  %v2189 = vunpack.c.h.b16 %v2146
  %v2190 = vunpack.c.l.b16 %v2147
  %v2191 = vunpack.c.h.b16 %v2147
  %v2192 = vunpack.c.l.b16 %v2148
  %v2193 = vunpack.c.h.b16 %v2148
  %v2194 = vunpack.c.l.b16 %v2149
  %v2195 = vunpack.c.h.b16 %v2149
  %v2196 = vunpack.c.l.b16 %v2150
  %v2197 = vunpack.c.h.b16 %v2150
  %v2198 = vunpack.c.l.b16 %v2151
  %v2199 = vunpack.c.h.b16 %v2151
  %v2200 = vpack.c.b16 %v2170, %v2168
  %v2201 = vpack.c.b16 %v2171, %v2169
  %v2202 = vpack.c.b16 %v2174, %v2172
  %v2203 = vpack.c.b16 %v2175, %v2173
  %v2204 = vpack.c.b16 %v2178, %v2176
  %v2205 = vpack.c.b16 %v2179, %v2177
  %v2206 = vpack.c.b16 %v2182, %v2180
  %v2207 = vpack.c.b16 %v2183, %v2181
  %v2208 = vpack.c.b16 %v2186, %v2184
  %v2209 = vpack.c.b16 %v2187, %v2185
  %v2210 = vpack.c.b16 %v2190, %v2188
  %v2211 = vpack.c.b16 %v2191, %v2189
  %v2212 = vpack.c.b16 %v2194, %v2192
  %v2213 = vpack.c.b16 %v2195, %v2193
  %v2214 = vpack.c.b16 %v2198, %v2196
  %v2215 = vpack.c.b16 %v2199, %v2197
  %2232 = vmatprep.subr.bf16.mxu0 %v2201
  %2233 = vmatpush1.bf16.msra.mxu0 %v2200
  %2234 = vmatprep.subr.bf16.mxu0 %v2203
  %2235 = vmatpush1.bf16.msra.mxu0 %v2202
  %2236 = vmatprep.subr.bf16.mxu0 %v2205
  %2237 = vmatpush1.bf16.msra.mxu0 %v2204
  %2238 = vmatprep.subr.bf16.mxu0 %v2207
  %2239 = vmatpush1.bf16.msra.mxu0 %v2206
  %2240 = vmatprep.subr.bf16.mxu0 %v2209
  %2241 = vmatpush1.bf16.msra.mxu0 %v2208
  %2242 = vmatprep.subr.bf16.mxu0 %v2211
  %2243 = vmatpush1.bf16.msra.mxu0 %v2210
  %2244 = vmatprep.subr.bf16.mxu0 %v2213
  %2245 = vmatpush1.bf16.msra.mxu0 %v2212
  %2246 = vmatprep.subr.bf16.mxu0 %v2215
  %2247 = vmatpush1.bf16.msra.mxu0 %v2214
  %2248 = vmatprep.subr.bf16.mxu0 0
  %2249 = vmatpush1.bf16.msra.mxu0 0
  %2250 = vmatprep.subr.bf16.mxu0 0
  %2251 = vmatpush1.bf16.msra.mxu0 0
  %2252 = vmatprep.subr.bf16.mxu0 0
  %2253 = vmatpush1.bf16.msra.mxu0 0
  %2254 = vmatprep.subr.bf16.mxu0 0
  %2255 = vmatpush1.bf16.msra.mxu0 0
  %2256 = vmatprep.subr.bf16.mxu0 0
  %2257 = vmatpush1.bf16.msra.mxu0 0
  %2258 = vmatprep.subr.bf16.mxu0 0
  %2259 = vmatpush1.bf16.msra.mxu0 0
  %2260 = vmatprep.subr.bf16.mxu0 0
  %2261 = vmatpush1.bf16.msra.mxu0 0
  %2262 = vmatprep.subr.bf16.mxu0 0
  %2263 = vmatpush1.bf16.msra.mxu0 0
  %2264 = vmatprep.mubr.bf16.mxu0 0
  %2265 = vmatmul.mubr.bf16.gmra.mrb[0].mxu0 %v2135
  %v2266 = vpop.f32.mrb[0].mxu0
  %v2267 = vadd.f32 0.0, %v2266
  %v2268 = vpop.f32.mrb[0].mxu0
  %v2269 = vadd.f32 0.0, %v2268
  %v2270 = vpop.f32.mrb[0].mxu0
  %v2271 = vpop.f32.mrb[0].mxu0
  %2272 = vdwg.mxu0
  %v2273 = vadd.f32 %v2133, %v2267
  %v2274 = vadd.f32 %v2134, %v2269
  %v2275 = vpack.c.bf16 %v1707, %v1707
  %v2276 = vld [vmem:[%s3 + $0x200] sm:$0xff]
  %v2277 = vld [vmem:[%s3 + $0x208] sm:$0xff]
  %v2278 = vld [vmem:[%s3 + $0x210] sm:$0xff]
  %v2279 = vld [vmem:[%s3 + $0x218] sm:$0xff]
  %v2280 = vld [vmem:[%s3 + $0x220] sm:$0xff]
  %v2281 = vld [vmem:[%s3 + $0x228] sm:$0xff]
  %v2282 = vld [vmem:[%s3 + $0x230] sm:$0xff]
  %v2283 = vld [vmem:[%s3 + $0x238] sm:$0xff]
  %v2284 = vld [vmem:[%s3 + $0x240] sm:$0xff]
  %v2285 = vld [vmem:[%s3 + $0x248] sm:$0xff]
  %v2286 = vld [vmem:[%s3 + $0x250] sm:$0xff]
  %v2287 = vld [vmem:[%s3 + $0x258] sm:$0xff]
  %v2288 = vld [vmem:[%s3 + $0x260] sm:$0xff]
  %v2289 = vld [vmem:[%s3 + $0x268] sm:$0xff]
  %v2290 = vld [vmem:[%s3 + $0x270] sm:$0xff]
  %v2291 = vld [vmem:[%s3 + $0x278] sm:$0xff]
  %v2308 = vunpack.c.l.b16 %v2276
  %v2309 = vunpack.c.h.b16 %v2276
  %v2310 = vunpack.c.l.b16 %v2277
  %v2311 = vunpack.c.h.b16 %v2277
  %v2312 = vunpack.c.l.b16 %v2278
  %v2313 = vunpack.c.h.b16 %v2278
  %v2314 = vunpack.c.l.b16 %v2279
  %v2315 = vunpack.c.h.b16 %v2279
  %v2316 = vunpack.c.l.b16 %v2280
  %v2317 = vunpack.c.h.b16 %v2280
  %v2318 = vunpack.c.l.b16 %v2281
  %v2319 = vunpack.c.h.b16 %v2281
  %v2320 = vunpack.c.l.b16 %v2282
  %v2321 = vunpack.c.h.b16 %v2282
  %v2322 = vunpack.c.l.b16 %v2283
  %v2323 = vunpack.c.h.b16 %v2283
  %v2324 = vunpack.c.l.b16 %v2284
  %v2325 = vunpack.c.h.b16 %v2284
  %v2326 = vunpack.c.l.b16 %v2285
  %v2327 = vunpack.c.h.b16 %v2285
  %v2328 = vunpack.c.l.b16 %v2286
  %v2329 = vunpack.c.h.b16 %v2286
  %v2330 = vunpack.c.l.b16 %v2287
  %v2331 = vunpack.c.h.b16 %v2287
  %v2332 = vunpack.c.l.b16 %v2288
  %v2333 = vunpack.c.h.b16 %v2288
  %v2334 = vunpack.c.l.b16 %v2289
  %v2335 = vunpack.c.h.b16 %v2289
  %v2336 = vunpack.c.l.b16 %v2290
  %v2337 = vunpack.c.h.b16 %v2290
  %v2338 = vunpack.c.l.b16 %v2291
  %v2339 = vunpack.c.h.b16 %v2291
  %v2340 = vpack.c.b16 %v2310, %v2308
  %v2341 = vpack.c.b16 %v2311, %v2309
  %v2342 = vpack.c.b16 %v2314, %v2312
  %v2343 = vpack.c.b16 %v2315, %v2313
  %v2344 = vpack.c.b16 %v2318, %v2316
  %v2345 = vpack.c.b16 %v2319, %v2317
  %v2346 = vpack.c.b16 %v2322, %v2320
  %v2347 = vpack.c.b16 %v2323, %v2321
  %v2348 = vpack.c.b16 %v2326, %v2324
  %v2349 = vpack.c.b16 %v2327, %v2325
  %v2350 = vpack.c.b16 %v2330, %v2328
  %v2351 = vpack.c.b16 %v2331, %v2329
  %v2352 = vpack.c.b16 %v2334, %v2332
  %v2353 = vpack.c.b16 %v2335, %v2333
  %v2354 = vpack.c.b16 %v2338, %v2336
  %v2355 = vpack.c.b16 %v2339, %v2337
  %2372 = vmatprep.subr.bf16.mxu0 %v2341
  %2373 = vmatpush1.bf16.msra.mxu0 %v2340
  %2374 = vmatprep.subr.bf16.mxu0 %v2343
  %2375 = vmatpush1.bf16.msra.mxu0 %v2342
  %2376 = vmatprep.subr.bf16.mxu0 %v2345
  %2377 = vmatpush1.bf16.msra.mxu0 %v2344
  %2378 = vmatprep.subr.bf16.mxu0 %v2347
  %2379 = vmatpush1.bf16.msra.mxu0 %v2346
  %2380 = vmatprep.subr.bf16.mxu0 %v2349
  %2381 = vmatpush1.bf16.msra.mxu0 %v2348
  %2382 = vmatprep.subr.bf16.mxu0 %v2351
  %2383 = vmatpush1.bf16.msra.mxu0 %v2350
  %2384 = vmatprep.subr.bf16.mxu0 %v2353
  %2385 = vmatpush1.bf16.msra.mxu0 %v2352
  %2386 = vmatprep.subr.bf16.mxu0 %v2355
  %2387 = vmatpush1.bf16.msra.mxu0 %v2354
  %2388 = vmatprep.subr.bf16.mxu0 0
  %2389 = vmatpush1.bf16.msra.mxu0 0
  %2390 = vmatprep.subr.bf16.mxu0 0
  %2391 = vmatpush1.bf16.msra.mxu0 0
  %2392 = vmatprep.subr.bf16.mxu0 0
  %2393 = vmatpush1.bf16.msra.mxu0 0
  %2394 = vmatprep.subr.bf16.mxu0 0
  %2395 = vmatpush1.bf16.msra.mxu0 0
  %2396 = vmatprep.subr.bf16.mxu0 0
  %2397 = vmatpush1.bf16.msra.mxu0 0
  %2398 = vmatprep.subr.bf16.mxu0 0
  %2399 = vmatpush1.bf16.msra.mxu0 0
  %2400 = vmatprep.subr.bf16.mxu0 0
  %2401 = vmatpush1.bf16.msra.mxu0 0
  %2402 = vmatprep.subr.bf16.mxu0 0
  %2403 = vmatpush1.bf16.msra.mxu0 0
  %2404 = vmatprep.mubr.bf16.mxu0 0
  %2405 = vmatmul.mubr.bf16.gmra.mrb[0].mxu0 %v2275
  %v2406 = vpop.f32.mrb[0].mxu0
  %v2407 = vadd.f32 0.0, %v2406
  %v2408 = vpop.f32.mrb[0].mxu0
  %v2409 = vadd.f32 0.0, %v2408
  %v2410 = vpop.f32.mrb[0].mxu0
  %v2411 = vpop.f32.mrb[0].mxu0
  %2412 = vdwg.mxu0
  %v2413 = vadd.f32 %v2273, %v2407
  %v2414 = vadd.f32 %v2274, %v2409
  %v2415 = vpack.c.bf16 %v1708, %v1708
  %v2416 = vld [vmem:[%s3 + $0x280] sm:$0xff]
  %v2417 = vld [vmem:[%s3 + $0x288] sm:$0xff]
  %v2418 = vld [vmem:[%s3 + $0x290] sm:$0xff]
  %v2419 = vld [vmem:[%s3 + $0x298] sm:$0xff]
  %v2420 = vld [vmem:[%s3 + $0x2a0] sm:$0xff]
  %v2421 = vld [vmem:[%s3 + $0x2a8] sm:$0xff]
  %v2422 = vld [vmem:[%s3 + $0x2b0] sm:$0xff]
  %v2423 = vld [vmem:[%s3 + $0x2b8] sm:$0xff]
  %v2424 = vld [vmem:[%s3 + $0x2c0] sm:$0xff]
  %v2425 = vld [vmem:[%s3 + $0x2c8] sm:$0xff]
  %v2426 = vld [vmem:[%s3 + $0x2d0] sm:$0xff]
  %v2427 = vld [vmem:[%s3 + $0x2d8] sm:$0xff]
  %v2428 = vld [vmem:[%s3 + $0x2e0] sm:$0xff]
  %v2429 = vld [vmem:[%s3 + $0x2e8] sm:$0xff]
  %v2430 = vld [vmem:[%s3 + $0x2f0] sm:$0xff]
  %v2431 = vld [vmem:[%s3 + $0x2f8] sm:$0xff]
  %v2448 = vunpack.c.l.b16 %v2416
  %v2449 = vunpack.c.h.b16 %v2416
  %v2450 = vunpack.c.l.b16 %v2417
  %v2451 = vunpack.c.h.b16 %v2417
  %v2452 = vunpack.c.l.b16 %v2418
  %v2453 = vunpack.c.h.b16 %v2418
  %v2454 = vunpack.c.l.b16 %v2419
  %v2455 = vunpack.c.h.b16 %v2419
  %v2456 = vunpack.c.l.b16 %v2420
  %v2457 = vunpack.c.h.b16 %v2420
  %v2458 = vunpack.c.l.b16 %v2421
  %v2459 = vunpack.c.h.b16 %v2421
  %v2460 = vunpack.c.l.b16 %v2422
  %v2461 = vunpack.c.h.b16 %v2422
  %v2462 = vunpack.c.l.b16 %v2423
  %v2463 = vunpack.c.h.b16 %v2423
  %v2464 = vunpack.c.l.b16 %v2424
  %v2465 = vunpack.c.h.b16 %v2424
  %v2466 = vunpack.c.l.b16 %v2425
  %v2467 = vunpack.c.h.b16 %v2425
  %v2468 = vunpack.c.l.b16 %v2426
  %v2469 = vunpack.c.h.b16 %v2426
  %v2470 = vunpack.c.l.b16 %v2427
  %v2471 = vunpack.c.h.b16 %v2427
  %v2472 = vunpack.c.l.b16 %v2428
  %v2473 = vunpack.c.h.b16 %v2428
  %v2474 = vunpack.c.l.b16 %v2429
  %v2475 = vunpack.c.h.b16 %v2429
  %v2476 = vunpack.c.l.b16 %v2430
  %v2477 = vunpack.c.h.b16 %v2430
  %v2478 = vunpack.c.l.b16 %v2431
  %v2479 = vunpack.c.h.b16 %v2431
  %v2480 = vpack.c.b16 %v2450, %v2448
  %v2481 = vpack.c.b16 %v2451, %v2449
  %v2482 = vpack.c.b16 %v2454, %v2452
  %v2483 = vpack.c.b16 %v2455, %v2453
  %v2484 = vpack.c.b16 %v2458, %v2456
  %v2485 = vpack.c.b16 %v2459, %v2457
  %v2486 = vpack.c.b16 %v2462, %v2460
  %v2487 = vpack.c.b16 %v2463, %v2461
  %v2488 = vpack.c.b16 %v2466, %v2464
  %v2489 = vpack.c.b16 %v2467, %v2465
  %v2490 = vpack.c.b16 %v2470, %v2468
  %v2491 = vpack.c.b16 %v2471, %v2469
  %v2492 = vpack.c.b16 %v2474, %v2472
  %v2493 = vpack.c.b16 %v2475, %v2473
  %v2494 = vpack.c.b16 %v2478, %v2476
  %v2495 = vpack.c.b16 %v2479, %v2477
  %2512 = vmatprep.subr.bf16.mxu0 %v2481
  %2513 = vmatpush1.bf16.msra.mxu0 %v2480
  %2514 = vmatprep.subr.bf16.mxu0 %v2483
  %2515 = vmatpush1.bf16.msra.mxu0 %v2482
  %2516 = vmatprep.subr.bf16.mxu0 %v2485
  %2517 = vmatpush1.bf16.msra.mxu0 %v2484
  %2518 = vmatprep.subr.bf16.mxu0 %v2487
  %2519 = vmatpush1.bf16.msra.mxu0 %v2486
  %2520 = vmatprep.subr.bf16.mxu0 %v2489
  %2521 = vmatpush1.bf16.msra.mxu0 %v2488
  %2522 = vmatprep.subr.bf16.mxu0 %v2491
  %2523 = vmatpush1.bf16.msra.mxu0 %v2490
  %2524 = vmatprep.subr.bf16.mxu0 %v2493
  %2525 = vmatpush1.bf16.msra.mxu0 %v2492
  %2526 = vmatprep.subr.bf16.mxu0 %v2495
  %2527 = vmatpush1.bf16.msra.mxu0 %v2494
  %2528 = vmatprep.subr.bf16.mxu0 0
  %2529 = vmatpush1.bf16.msra.mxu0 0
  %2530 = vmatprep.subr.bf16.mxu0 0
  %2531 = vmatpush1.bf16.msra.mxu0 0
  %2532 = vmatprep.subr.bf16.mxu0 0
  %2533 = vmatpush1.bf16.msra.mxu0 0
  %2534 = vmatprep.subr.bf16.mxu0 0
  %2535 = vmatpush1.bf16.msra.mxu0 0
  %2536 = vmatprep.subr.bf16.mxu0 0
  %2537 = vmatpush1.bf16.msra.mxu0 0
  %2538 = vmatprep.subr.bf16.mxu0 0
  %2539 = vmatpush1.bf16.msra.mxu0 0
  %2540 = vmatprep.subr.bf16.mxu0 0
  %2541 = vmatpush1.bf16.msra.mxu0 0
  %2542 = vmatprep.subr.bf16.mxu0 0
  %2543 = vmatpush1.bf16.msra.mxu0 0
  %2544 = vmatprep.mubr.bf16.mxu0 0
  %2545 = vmatmul.mubr.bf16.gmra.mrb[0].mxu0 %v2415
  %v2546 = vpop.f32.mrb[0].mxu0
  %v2547 = vadd.f32 0.0, %v2546
  %v2548 = vpop.f32.mrb[0].mxu0
  %v2549 = vadd.f32 0.0, %v2548
  %v2550 = vpop.f32.mrb[0].mxu0
  %v2551 = vpop.f32.mrb[0].mxu0
  %2552 = vdwg.mxu0
  %v2553 = vadd.f32 %v2413, %v2547
  %v2554 = vadd.f32 %v2414, %v2549
  %v2555 = vpack.c.bf16 %v1709, %v1709
  %v2556 = vld [vmem:[%s3 + $0x300] sm:$0xff]
  %v2557 = vld [vmem:[%s3 + $0x308] sm:$0xff]
  %v2558 = vld [vmem:[%s3 + $0x310] sm:$0xff]
  %v2559 = vld [vmem:[%s3 + $0x318] sm:$0xff]
  %v2560 = vld [vmem:[%s3 + $0x320] sm:$0xff]
  %v2561 = vld [vmem:[%s3 + $0x328] sm:$0xff]
  %v2562 = vld [vmem:[%s3 + $0x330] sm:$0xff]
  %v2563 = vld [vmem:[%s3 + $0x338] sm:$0xff]
  %v2564 = vld [vmem:[%s3 + $0x340] sm:$0xff]
  %v2565 = vld [vmem:[%s3 + $0x348] sm:$0xff]
  %v2566 = vld [vmem:[%s3 + $0x350] sm:$0xff]
  %v2567 = vld [vmem:[%s3 + $0x358] sm:$0xff]
  %v2568 = vld [vmem:[%s3 + $0x360] sm:$0xff]
  %v2569 = vld [vmem:[%s3 + $0x368] sm:$0xff]
  %v2570 = vld [vmem:[%s3 + $0x370] sm:$0xff]
  %v2571 = vld [vmem:[%s3 + $0x378] sm:$0xff]
  %v2588 = vunpack.c.l.b16 %v2556
  %v2589 = vunpack.c.h.b16 %v2556
  %v2590 = vunpack.c.l.b16 %v2557
  %v2591 = vunpack.c.h.b16 %v2557
  %v2592 = vunpack.c.l.b16 %v2558
  %v2593 = vunpack.c.h.b16 %v2558
  %v2594 = vunpack.c.l.b16 %v2559
  %v2595 = vunpack.c.h.b16 %v2559
  %v2596 = vunpack.c.l.b16 %v2560
  %v2597 = vunpack.c.h.b16 %v2560
  %v2598 = vunpack.c.l.b16 %v2561
  %v2599 = vunpack.c.h.b16 %v2561
  %v2600 = vunpack.c.l.b16 %v2562
  %v2601 = vunpack.c.h.b16 %v2562
  %v2602 = vunpack.c.l.b16 %v2563
  %v2603 = vunpack.c.h.b16 %v2563
  %v2604 = vunpack.c.l.b16 %v2564
  %v2605 = vunpack.c.h.b16 %v2564
  %v2606 = vunpack.c.l.b16 %v2565
  %v2607 = vunpack.c.h.b16 %v2565
  %v2608 = vunpack.c.l.b16 %v2566
  %v2609 = vunpack.c.h.b16 %v2566
  %v2610 = vunpack.c.l.b16 %v2567
  %v2611 = vunpack.c.h.b16 %v2567
  %v2612 = vunpack.c.l.b16 %v2568
  %v2613 = vunpack.c.h.b16 %v2568
  %v2614 = vunpack.c.l.b16 %v2569
  %v2615 = vunpack.c.h.b16 %v2569
  %v2616 = vunpack.c.l.b16 %v2570
  %v2617 = vunpack.c.h.b16 %v2570
  %v2618 = vunpack.c.l.b16 %v2571
  %v2619 = vunpack.c.h.b16 %v2571
  %v2620 = vpack.c.b16 %v2590, %v2588
  %v2621 = vpack.c.b16 %v2591, %v2589
  %v2622 = vpack.c.b16 %v2594, %v2592
  %v2623 = vpack.c.b16 %v2595, %v2593
  %v2624 = vpack.c.b16 %v2598, %v2596
  %v2625 = vpack.c.b16 %v2599, %v2597
  %v2626 = vpack.c.b16 %v2602, %v2600
  %v2627 = vpack.c.b16 %v2603, %v2601
  %v2628 = vpack.c.b16 %v2606, %v2604
  %v2629 = vpack.c.b16 %v2607, %v2605
  %v2630 = vpack.c.b16 %v2610, %v2608
  %v2631 = vpack.c.b16 %v2611, %v2609
  %v2632 = vpack.c.b16 %v2614, %v2612
  %v2633 = vpack.c.b16 %v2615, %v2613
  %v2634 = vpack.c.b16 %v2618, %v2616
  %v2635 = vpack.c.b16 %v2619, %v2617
  %2652 = vmatprep.subr.bf16.mxu0 %v2621
  %2653 = vmatpush1.bf16.msra.mxu0 %v2620
  %2654 = vmatprep.subr.bf16.mxu0 %v2623
  %2655 = vmatpush1.bf16.msra.mxu0 %v2622
  %2656 = vmatprep.subr.bf16.mxu0 %v2625
  %2657 = vmatpush1.bf16.msra.mxu0 %v2624
  %2658 = vmatprep.subr.bf16.mxu0 %v2627
  %2659 = vmatpush1.bf16.msra.mxu0 %v2626
  %2660 = vmatprep.subr.bf16.mxu0 %v2629
  %2661 = vmatpush1.bf16.msra.mxu0 %v2628
  %2662 = vmatprep.subr.bf16.mxu0 %v2631
  %2663 = vmatpush1.bf16.msra.mxu0 %v2630
  %2664 = vmatprep.subr.bf16.mxu0 %v2633
  %2665 = vmatpush1.bf16.msra.mxu0 %v2632
  %2666 = vmatprep.subr.bf16.mxu0 %v2635
  %2667 = vmatpush1.bf16.msra.mxu0 %v2634
  %2668 = vmatprep.subr.bf16.mxu0 0
  %2669 = vmatpush1.bf16.msra.mxu0 0
  %2670 = vmatprep.subr.bf16.mxu0 0
  %2671 = vmatpush1.bf16.msra.mxu0 0
  %2672 = vmatprep.subr.bf16.mxu0 0
  %2673 = vmatpush1.bf16.msra.mxu0 0
  %2674 = vmatprep.subr.bf16.mxu0 0
  %2675 = vmatpush1.bf16.msra.mxu0 0
  %2676 = vmatprep.subr.bf16.mxu0 0
  %2677 = vmatpush1.bf16.msra.mxu0 0
  %2678 = vmatprep.subr.bf16.mxu0 0
  %2679 = vmatpush1.bf16.msra.mxu0 0
  %2680 = vmatprep.subr.bf16.mxu0 0
  %2681 = vmatpush1.bf16.msra.mxu0 0
  %2682 = vmatprep.subr.bf16.mxu0 0
  %2683 = vmatpush1.bf16.msra.mxu0 0
  %2684 = vmatprep.mubr.bf16.mxu0 0
  %2685 = vmatmul.mubr.bf16.gmra.mrb[0].mxu0 %v2555
  %v2686 = vpop.f32.mrb[0].mxu0
  %v2687 = vadd.f32 0.0, %v2686
  %v2688 = vpop.f32.mrb[0].mxu0
  %v2689 = vadd.f32 0.0, %v2688
  %v2690 = vpop.f32.mrb[0].mxu0
  %v2691 = vpop.f32.mrb[0].mxu0
  %2692 = vdwg.mxu0
  %v2693 = vadd.f32 %v2553, %v2687
  %v2694 = vadd.f32 %v2554, %v2689
  %v2695 = vpack.c.bf16 %v1710, %v1710
  %v2696 = vld [vmem:[%s3 + $0x380] sm:$0xff]
  %v2697 = vld [vmem:[%s3 + $0x388] sm:$0xff]
  %v2698 = vld [vmem:[%s3 + $0x390] sm:$0xff]
  %v2699 = vld [vmem:[%s3 + $0x398] sm:$0xff]
  %v2700 = vld [vmem:[%s3 + $0x3a0] sm:$0xff]
  %v2701 = vld [vmem:[%s3 + $0x3a8] sm:$0xff]
  %v2702 = vld [vmem:[%s3 + $0x3b0] sm:$0xff]
  %v2703 = vld [vmem:[%s3 + $0x3b8] sm:$0xff]
  %v2704 = vld [vmem:[%s3 + $0x3c0] sm:$0xff]
  %v2705 = vld [vmem:[%s3 + $0x3c8] sm:$0xff]
  %v2706 = vld [vmem:[%s3 + $0x3d0] sm:$0xff]
  %v2707 = vld [vmem:[%s3 + $0x3d8] sm:$0xff]
  %v2708 = vld [vmem:[%s3 + $0x3e0] sm:$0xff]
  %v2709 = vld [vmem:[%s3 + $0x3e8] sm:$0xff]
  %v2710 = vld [vmem:[%s3 + $0x3f0] sm:$0xff]
  %v2711 = vld [vmem:[%s3 + $0x3f8] sm:$0xff]
  %v2728 = vunpack.c.l.b16 %v2696
  %v2729 = vunpack.c.h.b16 %v2696
  %v2730 = vunpack.c.l.b16 %v2697
  %v2731 = vunpack.c.h.b16 %v2697
  %v2732 = vunpack.c.l.b16 %v2698
  %v2733 = vunpack.c.h.b16 %v2698
  %v2734 = vunpack.c.l.b16 %v2699
  %v2735 = vunpack.c.h.b16 %v2699
  %v2736 = vunpack.c.l.b16 %v2700
  %v2737 = vunpack.c.h.b16 %v2700
  %v2738 = vunpack.c.l.b16 %v2701
  %v2739 = vunpack.c.h.b16 %v2701
  %v2740 = vunpack.c.l.b16 %v2702
  %v2741 = vunpack.c.h.b16 %v2702
  %v2742 = vunpack.c.l.b16 %v2703
  %v2743 = vunpack.c.h.b16 %v2703
  %v2744 = vunpack.c.l.b16 %v2704
  %v2745 = vunpack.c.h.b16 %v2704
  %v2746 = vunpack.c.l.b16 %v2705
  %v2747 = vunpack.c.h.b16 %v2705
  %v2748 = vunpack.c.l.b16 %v2706
  %v2749 = vunpack.c.h.b16 %v2706
  %v2750 = vunpack.c.l.b16 %v2707
  %v2751 = vunpack.c.h.b16 %v2707
  %v2752 = vunpack.c.l.b16 %v2708
  %v2753 = vunpack.c.h.b16 %v2708
  %v2754 = vunpack.c.l.b16 %v2709
  %v2755 = vunpack.c.h.b16 %v2709
  %v2756 = vunpack.c.l.b16 %v2710
  %v2757 = vunpack.c.h.b16 %v2710
  %v2758 = vunpack.c.l.b16 %v2711
  %v2759 = vunpack.c.h.b16 %v2711
  %v2760 = vpack.c.b16 %v2730, %v2728
  %v2761 = vpack.c.b16 %v2731, %v2729
  %v2762 = vpack.c.b16 %v2734, %v2732
  %v2763 = vpack.c.b16 %v2735, %v2733
  %v2764 = vpack.c.b16 %v2738, %v2736
  %v2765 = vpack.c.b16 %v2739, %v2737
  %v2766 = vpack.c.b16 %v2742, %v2740
  %v2767 = vpack.c.b16 %v2743, %v2741
  %v2768 = vpack.c.b16 %v2746, %v2744
  %v2769 = vpack.c.b16 %v2747, %v2745
  %v2770 = vpack.c.b16 %v2750, %v2748
  %v2771 = vpack.c.b16 %v2751, %v2749
  %v2772 = vpack.c.b16 %v2754, %v2752
  %v2773 = vpack.c.b16 %v2755, %v2753
  %v2774 = vpack.c.b16 %v2758, %v2756
  %v2775 = vpack.c.b16 %v2759, %v2757
  %2792 = vmatprep.subr.bf16.mxu0 %v2761
  %2793 = vmatpush1.bf16.msra.mxu0 %v2760
  %2794 = vmatprep.subr.bf16.mxu0 %v2763
  %2795 = vmatpush1.bf16.msra.mxu0 %v2762
  %2796 = vmatprep.subr.bf16.mxu0 %v2765
  %2797 = vmatpush1.bf16.msra.mxu0 %v2764
  %2798 = vmatprep.subr.bf16.mxu0 %v2767
  %2799 = vmatpush1.bf16.msra.mxu0 %v2766
  %2800 = vmatprep.subr.bf16.mxu0 %v2769
  %2801 = vmatpush1.bf16.msra.mxu0 %v2768
  %2802 = vmatprep.subr.bf16.mxu0 %v2771
  %2803 = vmatpush1.bf16.msra.mxu0 %v2770
  %2804 = vmatprep.subr.bf16.mxu0 %v2773
  %2805 = vmatpush1.bf16.msra.mxu0 %v2772
  %2806 = vmatprep.subr.bf16.mxu0 %v2775
  %2807 = vmatpush1.bf16.msra.mxu0 %v2774
  %2808 = vmatprep.subr.bf16.mxu0 0
  %2809 = vmatpush1.bf16.msra.mxu0 0
  %2810 = vmatprep.subr.bf16.mxu0 0
  %2811 = vmatpush1.bf16.msra.mxu0 0
  %2812 = vmatprep.subr.bf16.mxu0 0
  %2813 = vmatpush1.bf16.msra.mxu0 0
  %2814 = vmatprep.subr.bf16.mxu0 0
  %2815 = vmatpush1.bf16.msra.mxu0 0
  %2816 = vmatprep.subr.bf16.mxu0 0
  %2817 = vmatpush1.bf16.msra.mxu0 0
  %2818 = vmatprep.subr.bf16.mxu0 0
  %2819 = vmatpush1.bf16.msra.mxu0 0
  %2820 = vmatprep.subr.bf16.mxu0 0
  %2821 = vmatpush1.bf16.msra.mxu0 0
  %2822 = vmatprep.subr.bf16.mxu0 0
  %2823 = vmatpush1.bf16.msra.mxu0 0
  %2824 = vmatprep.mubr.bf16.mxu0 0
  %2825 = vmatmul.mubr.bf16.gmra.mrb[0].mxu0 %v2695
  %v2826 = vpop.f32.mrb[0].mxu0
  %v2827 = vadd.f32 0.0, %v2826
  %v2828 = vpop.f32.mrb[0].mxu0
  %v2829 = vadd.f32 0.0, %v2828
  %v2830 = vpop.f32.mrb[0].mxu0
  %v2831 = vpop.f32.mrb[0].mxu0
  %2832 = vdwg.mxu0
  %v2833 = vadd.f32 %v2693, %v2827
  %v2834 = vadd.f32 %v2694, %v2829
  %v2835 = vpack.c.bf16 %v1711, %v1711
  %v2836 = vld [vmem:[%s3 + $0x400] sm:$0xff]
  %v2837 = vld [vmem:[%s3 + $0x408] sm:$0xff]
  %v2838 = vld [vmem:[%s3 + $0x410] sm:$0xff]
  %v2839 = vld [vmem:[%s3 + $0x418] sm:$0xff]
  %v2840 = vld [vmem:[%s3 + $0x420] sm:$0xff]
  %v2841 = vld [vmem:[%s3 + $0x428] sm:$0xff]
  %v2842 = vld [vmem:[%s3 + $0x430] sm:$0xff]
  %v2843 = vld [vmem:[%s3 + $0x438] sm:$0xff]
  %v2844 = vld [vmem:[%s3 + $0x440] sm:$0xff]
  %v2845 = vld [vmem:[%s3 + $0x448] sm:$0xff]
  %v2846 = vld [vmem:[%s3 + $0x450] sm:$0xff]
  %v2847 = vld [vmem:[%s3 + $0x458] sm:$0xff]
  %v2848 = vld [vmem:[%s3 + $0x460] sm:$0xff]
  %v2849 = vld [vmem:[%s3 + $0x468] sm:$0xff]
  %v2850 = vld [vmem:[%s3 + $0x470] sm:$0xff]
  %v2851 = vld [vmem:[%s3 + $0x478] sm:$0xff]
  %v2868 = vunpack.c.l.b16 %v2836
  %v2869 = vunpack.c.h.b16 %v2836
  %v2870 = vunpack.c.l.b16 %v2837
  %v2871 = vunpack.c.h.b16 %v2837
  %v2872 = vunpack.c.l.b16 %v2838
  %v2873 = vunpack.c.h.b16 %v2838
  %v2874 = vunpack.c.l.b16 %v2839
  %v2875 = vunpack.c.h.b16 %v2839
  %v2876 = vunpack.c.l.b16 %v2840
  %v2877 = vunpack.c.h.b16 %v2840
  %v2878 = vunpack.c.l.b16 %v2841
  %v2879 = vunpack.c.h.b16 %v2841
  %v2880 = vunpack.c.l.b16 %v2842
  %v2881 = vunpack.c.h.b16 %v2842
  %v2882 = vunpack.c.l.b16 %v2843
  %v2883 = vunpack.c.h.b16 %v2843
  %v2884 = vunpack.c.l.b16 %v2844
  %v2885 = vunpack.c.h.b16 %v2844
  %v2886 = vunpack.c.l.b16 %v2845
  %v2887 = vunpack.c.h.b16 %v2845
  %v2888 = vunpack.c.l.b16 %v2846
  %v2889 = vunpack.c.h.b16 %v2846
  %v2890 = vunpack.c.l.b16 %v2847
  %v2891 = vunpack.c.h.b16 %v2847
  %v2892 = vunpack.c.l.b16 %v2848
  %v2893 = vunpack.c.h.b16 %v2848
  %v2894 = vunpack.c.l.b16 %v2849
  %v2895 = vunpack.c.h.b16 %v2849
  %v2896 = vunpack.c.l.b16 %v2850
  %v2897 = vunpack.c.h.b16 %v2850
  %v2898 = vunpack.c.l.b16 %v2851
  %v2899 = vunpack.c.h.b16 %v2851
  %v2900 = vpack.c.b16 %v2870, %v2868
  %v2901 = vpack.c.b16 %v2871, %v2869
  %v2902 = vpack.c.b16 %v2874, %v2872
  %v2903 = vpack.c.b16 %v2875, %v2873
  %v2904 = vpack.c.b16 %v2878, %v2876
  %v2905 = vpack.c.b16 %v2879, %v2877
  %v2906 = vpack.c.b16 %v2882, %v2880
  %v2907 = vpack.c.b16 %v2883, %v2881
  %v2908 = vpack.c.b16 %v2886, %v2884
  %v2909 = vpack.c.b16 %v2887, %v2885
  %v2910 = vpack.c.b16 %v2890, %v2888
  %v2911 = vpack.c.b16 %v2891, %v2889
  %v2912 = vpack.c.b16 %v2894, %v2892
  %v2913 = vpack.c.b16 %v2895, %v2893
  %v2914 = vpack.c.b16 %v2898, %v2896
  %v2915 = vpack.c.b16 %v2899, %v2897
  %2932 = vmatprep.subr.bf16.mxu0 %v2901
  %2933 = vmatpush1.bf16.msra.mxu0 %v2900
  %2934 = vmatprep.subr.bf16.mxu0 %v2903
  %2935 = vmatpush1.bf16.msra.mxu0 %v2902
  %2936 = vmatprep.subr.bf16.mxu0 %v2905
  %2937 = vmatpush1.bf16.msra.mxu0 %v2904
  %2938 = vmatprep.subr.bf16.mxu0 %v2907
  %2939 = vmatpush1.bf16.msra.mxu0 %v2906
  %2940 = vmatprep.subr.bf16.mxu0 %v2909
  %2941 = vmatpush1.bf16.msra.mxu0 %v2908
  %2942 = vmatprep.subr.bf16.mxu0 %v2911
  %2943 = vmatpush1.bf16.msra.mxu0 %v2910
  %2944 = vmatprep.subr.bf16.mxu0 %v2913
  %2945 = vmatpush1.bf16.msra.mxu0 %v2912
  %2946 = vmatprep.subr.bf16.mxu0 %v2915
  %2947 = vmatpush1.bf16.msra.mxu0 %v2914
  %2948 = vmatprep.subr.bf16.mxu0 0
  %2949 = vmatpush1.bf16.msra.mxu0 0
  %2950 = vmatprep.subr.bf16.mxu0 0
  %2951 = vmatpush1.bf16.msra.mxu0 0
  %2952 = vmatprep.subr.bf16.mxu0 0
  %2953 = vmatpush1.bf16.msra.mxu0 0
  %2954 = vmatprep.subr.bf16.mxu0 0
  %2955 = vmatpush1.bf16.msra.mxu0 0
  %2956 = vmatprep.subr.bf16.mxu0 0
  %2957 = vmatpush1.bf16.msra.mxu0 0
  %2958 = vmatprep.subr.bf16.mxu0 0
  %2959 = vmatpush1.bf16.msra.mxu0 0
  %2960 = vmatprep.subr.bf16.mxu0 0
  %2961 = vmatpush1.bf16.msra.mxu0 0
  %2962 = vmatprep.subr.bf16.mxu0 0
  %2963 = vmatpush1.bf16.msra.mxu0 0
  %2964 = vmatprep.mubr.bf16.mxu0 0
  %2965 = vmatmul.mubr.bf16.gmra.mrb[0].mxu0 %v2835
  %v2966 = vpop.f32.mrb[0].mxu0
  %v2967 = vadd.f32 0.0, %v2966
  %v2968 = vpop.f32.mrb[0].mxu0
  %v2969 = vadd.f32 0.0, %v2968
  %v2970 = vpop.f32.mrb[0].mxu0
  %v2971 = vpop.f32.mrb[0].mxu0
  %2972 = vdwg.mxu0
  %v2973 = vadd.f32 %v2833, %v2967
  %v2974 = vadd.f32 %v2834, %v2969
  %v2975 = vpack.c.bf16 %v1712, %v1712
  %v2976 = vld [vmem:[%s3 + $0x480] sm:$0xff]
  %v2977 = vld [vmem:[%s3 + $0x488] sm:$0xff]
  %v2978 = vld [vmem:[%s3 + $0x490] sm:$0xff]
  %v2979 = vld [vmem:[%s3 + $0x498] sm:$0xff]
  %v2980 = vld [vmem:[%s3 + $0x4a0] sm:$0xff]
  %v2981 = vld [vmem:[%s3 + $0x4a8] sm:$0xff]
  %v2982 = vld [vmem:[%s3 + $0x4b0] sm:$0xff]
  %v2983 = vld [vmem:[%s3 + $0x4b8] sm:$0xff]
  %v2984 = vld [vmem:[%s3 + $0x4c0] sm:$0xff]
  %v2985 = vld [vmem:[%s3 + $0x4c8] sm:$0xff]
  %v2986 = vld [vmem:[%s3 + $0x4d0] sm:$0xff]
  %v2987 = vld [vmem:[%s3 + $0x4d8] sm:$0xff]
  %v2988 = vld [vmem:[%s3 + $0x4e0] sm:$0xff]
  %v2989 = vld [vmem:[%s3 + $0x4e8] sm:$0xff]
  %v2990 = vld [vmem:[%s3 + $0x4f0] sm:$0xff]
  %v2991 = vld [vmem:[%s3 + $0x4f8] sm:$0xff]
  %v3008 = vunpack.c.l.b16 %v2976
  %v3009 = vunpack.c.h.b16 %v2976
  %v3010 = vunpack.c.l.b16 %v2977
  %v3011 = vunpack.c.h.b16 %v2977
  %v3012 = vunpack.c.l.b16 %v2978
  %v3013 = vunpack.c.h.b16 %v2978
  %v3014 = vunpack.c.l.b16 %v2979
  %v3015 = vunpack.c.h.b16 %v2979
  %v3016 = vunpack.c.l.b16 %v2980
  %v3017 = vunpack.c.h.b16 %v2980
  %v3018 = vunpack.c.l.b16 %v2981
  %v3019 = vunpack.c.h.b16 %v2981
  %v3020 = vunpack.c.l.b16 %v2982
  %v3021 = vunpack.c.h.b16 %v2982
  %v3022 = vunpack.c.l.b16 %v2983
  %v3023 = vunpack.c.h.b16 %v2983
  %v3024 = vunpack.c.l.b16 %v2984
  %v3025 = vunpack.c.h.b16 %v2984
  %v3026 = vunpack.c.l.b16 %v2985
  %v3027 = vunpack.c.h.b16 %v2985
  %v3028 = vunpack.c.l.b16 %v2986
  %v3029 = vunpack.c.h.b16 %v2986
  %v3030 = vunpack.c.l.b16 %v2987
  %v3031 = vunpack.c.h.b16 %v2987
  %v3032 = vunpack.c.l.b16 %v2988
  %v3033 = vunpack.c.h.b16 %v2988
  %v3034 = vunpack.c.l.b16 %v2989
  %v3035 = vunpack.c.h.b16 %v2989
  %v3036 = vunpack.c.l.b16 %v2990
  %v3037 = vunpack.c.h.b16 %v2990
  %v3038 = vunpack.c.l.b16 %v2991
  %v3039 = vunpack.c.h.b16 %v2991
  %v3040 = vpack.c.b16 %v3010, %v3008
  %v3041 = vpack.c.b16 %v3011, %v3009
  %v3042 = vpack.c.b16 %v3014, %v3012
  %v3043 = vpack.c.b16 %v3015, %v3013
  %v3044 = vpack.c.b16 %v3018, %v3016
  %v3045 = vpack.c.b16 %v3019, %v3017
  %v3046 = vpack.c.b16 %v3022, %v3020
  %v3047 = vpack.c.b16 %v3023, %v3021
  %v3048 = vpack.c.b16 %v3026, %v3024
  %v3049 = vpack.c.b16 %v3027, %v3025
  %v3050 = vpack.c.b16 %v3030, %v3028
  %v3051 = vpack.c.b16 %v3031, %v3029
  %v3052 = vpack.c.b16 %v3034, %v3032
  %v3053 = vpack.c.b16 %v3035, %v3033
  %v3054 = vpack.c.b16 %v3038, %v3036
  %v3055 = vpack.c.b16 %v3039, %v3037
  %3072 = vmatprep.subr.bf16.mxu0 %v3041
  %3073 = vmatpush1.bf16.msra.mxu0 %v3040
  %3074 = vmatprep.subr.bf16.mxu0 %v3043
  %3075 = vmatpush1.bf16.msra.mxu0 %v3042
  %3076 = vmatprep.subr.bf16.mxu0 %v3045
  %3077 = vmatpush1.bf16.msra.mxu0 %v3044
  %3078 = vmatprep.subr.bf16.mxu0 %v3047
  %3079 = vmatpush1.bf16.msra.mxu0 %v3046
  %3080 = vmatprep.subr.bf16.mxu0 %v3049
  %3081 = vmatpush1.bf16.msra.mxu0 %v3048
  %3082 = vmatprep.subr.bf16.mxu0 %v3051
  %3083 = vmatpush1.bf16.msra.mxu0 %v3050
  %3084 = vmatprep.subr.bf16.mxu0 %v3053
  %3085 = vmatpush1.bf16.msra.mxu0 %v3052
  %3086 = vmatprep.subr.bf16.mxu0 %v3055
  %3087 = vmatpush1.bf16.msra.mxu0 %v3054
  %3088 = vmatprep.subr.bf16.mxu0 0
  %3089 = vmatpush1.bf16.msra.mxu0 0
  %3090 = vmatprep.subr.bf16.mxu0 0
  %3091 = vmatpush1.bf16.msra.mxu0 0
  %3092 = vmatprep.subr.bf16.mxu0 0
  %3093 = vmatpush1.bf16.msra.mxu0 0
  %3094 = vmatprep.subr.bf16.mxu0 0
  %3095 = vmatpush1.bf16.msra.mxu0 0
  %3096 = vmatprep.subr.bf16.mxu0 0
  %3097 = vmatpush1.bf16.msra.mxu0 0
  %3098 = vmatprep.subr.bf16.mxu0 0
  %3099 = vmatpush1.bf16.msra.mxu0 0
  %3100 = vmatprep.subr.bf16.mxu0 0
  %3101 = vmatpush1.bf16.msra.mxu0 0
  %3102 = vmatprep.subr.bf16.mxu0 0
  %3103 = vmatpush1.bf16.msra.mxu0 0
  %3104 = vmatprep.mubr.bf16.mxu0 0
  %3105 = vmatmul.mubr.bf16.gmra.mrb[0].mxu0 %v2975
  %v3106 = vpop.f32.mrb[0].mxu0
  %v3107 = vadd.f32 0.0, %v3106
  %v3108 = vpop.f32.mrb[0].mxu0
  %v3109 = vadd.f32 0.0, %v3108
  %v3110 = vpop.f32.mrb[0].mxu0
  %v3111 = vpop.f32.mrb[0].mxu0
  %3112 = vdwg.mxu0
  %v3113 = vadd.f32 %v2973, %v3107
  %v3114 = vadd.f32 %v2974, %v3109
  %v3115 = vpack.c.bf16 %v1713, %v1713
  %v3116 = vld [vmem:[%s3 + $0x500] sm:$0xff]
  %v3117 = vld [vmem:[%s3 + $0x508] sm:$0xff]
  %v3118 = vld [vmem:[%s3 + $0x510] sm:$0xff]
  %v3119 = vld [vmem:[%s3 + $0x518] sm:$0xff]
  %v3120 = vld [vmem:[%s3 + $0x520] sm:$0xff]
  %v3121 = vld [vmem:[%s3 + $0x528] sm:$0xff]
  %v3122 = vld [vmem:[%s3 + $0x530] sm:$0xff]
  %v3123 = vld [vmem:[%s3 + $0x538] sm:$0xff]
  %v3124 = vld [vmem:[%s3 + $0x540] sm:$0xff]
  %v3125 = vld [vmem:[%s3 + $0x548] sm:$0xff]
  %v3126 = vld [vmem:[%s3 + $0x550] sm:$0xff]
  %v3127 = vld [vmem:[%s3 + $0x558] sm:$0xff]
  %v3128 = vld [vmem:[%s3 + $0x560] sm:$0xff]
  %v3129 = vld [vmem:[%s3 + $0x568] sm:$0xff]
  %v3130 = vld [vmem:[%s3 + $0x570] sm:$0xff]
  %v3131 = vld [vmem:[%s3 + $0x578] sm:$0xff]
  %v3148 = vunpack.c.l.b16 %v3116
  %v3149 = vunpack.c.h.b16 %v3116
  %v3150 = vunpack.c.l.b16 %v3117
  %v3151 = vunpack.c.h.b16 %v3117
  %v3152 = vunpack.c.l.b16 %v3118
  %v3153 = vunpack.c.h.b16 %v3118
  %v3154 = vunpack.c.l.b16 %v3119
  %v3155 = vunpack.c.h.b16 %v3119
  %v3156 = vunpack.c.l.b16 %v3120
  %v3157 = vunpack.c.h.b16 %v3120
  %v3158 = vunpack.c.l.b16 %v3121
  %v3159 = vunpack.c.h.b16 %v3121
  %v3160 = vunpack.c.l.b16 %v3122
  %v3161 = vunpack.c.h.b16 %v3122
  %v3162 = vunpack.c.l.b16 %v3123
  %v3163 = vunpack.c.h.b16 %v3123
  %v3164 = vunpack.c.l.b16 %v3124
  %v3165 = vunpack.c.h.b16 %v3124
  %v3166 = vunpack.c.l.b16 %v3125
  %v3167 = vunpack.c.h.b16 %v3125
  %v3168 = vunpack.c.l.b16 %v3126
  %v3169 = vunpack.c.h.b16 %v3126
  %v3170 = vunpack.c.l.b16 %v3127
  %v3171 = vunpack.c.h.b16 %v3127
  %v3172 = vunpack.c.l.b16 %v3128
  %v3173 = vunpack.c.h.b16 %v3128
  %v3174 = vunpack.c.l.b16 %v3129
  %v3175 = vunpack.c.h.b16 %v3129
  %v3176 = vunpack.c.l.b16 %v3130
  %v3177 = vunpack.c.h.b16 %v3130
  %v3178 = vunpack.c.l.b16 %v3131
  %v3179 = vunpack.c.h.b16 %v3131
  %v3180 = vpack.c.b16 %v3150, %v3148
  %v3181 = vpack.c.b16 %v3151, %v3149
  %v3182 = vpack.c.b16 %v3154, %v3152
  %v3183 = vpack.c.b16 %v3155, %v3153
  %v3184 = vpack.c.b16 %v3158, %v3156
  %v3185 = vpack.c.b16 %v3159, %v3157
  %v3186 = vpack.c.b16 %v3162, %v3160
  %v3187 = vpack.c.b16 %v3163, %v3161
  %v3188 = vpack.c.b16 %v3166, %v3164
  %v3189 = vpack.c.b16 %v3167, %v3165
  %v3190 = vpack.c.b16 %v3170, %v3168
  %v3191 = vpack.c.b16 %v3171, %v3169
  %v3192 = vpack.c.b16 %v3174, %v3172
  %v3193 = vpack.c.b16 %v3175, %v3173
  %v3194 = vpack.c.b16 %v3178, %v3176
  %v3195 = vpack.c.b16 %v3179, %v3177
  %3212 = vmatprep.subr.bf16.mxu0 %v3181
  %3213 = vmatpush1.bf16.msra.mxu0 %v3180
  %3214 = vmatprep.subr.bf16.mxu0 %v3183
  %3215 = vmatpush1.bf16.msra.mxu0 %v3182
  %3216 = vmatprep.subr.bf16.mxu0 %v3185
  %3217 = vmatpush1.bf16.msra.mxu0 %v3184
  %3218 = vmatprep.subr.bf16.mxu0 %v3187
  %3219 = vmatpush1.bf16.msra.mxu0 %v3186
  %3220 = vmatprep.subr.bf16.mxu0 %v3189
  %3221 = vmatpush1.bf16.msra.mxu0 %v3188
  %3222 = vmatprep.subr.bf16.mxu0 %v3191
  %3223 = vmatpush1.bf16.msra.mxu0 %v3190
  %3224 = vmatprep.subr.bf16.mxu0 %v3193
  %3225 = vmatpush1.bf16.msra.mxu0 %v3192
  %3226 = vmatprep.subr.bf16.mxu0 %v3195
  %3227 = vmatpush1.bf16.msra.mxu0 %v3194
  %3228 = vmatprep.subr.bf16.mxu0 0
  %3229 = vmatpush1.bf16.msra.mxu0 0
  %3230 = vmatprep.subr.bf16.mxu0 0
  %3231 = vmatpush1.bf16.msra.mxu0 0
  %3232 = vmatprep.subr.bf16.mxu0 0
  %3233 = vmatpush1.bf16.msra.mxu0 0
  %3234 = vmatprep.subr.bf16.mxu0 0
  %3235 = vmatpush1.bf16.msra.mxu0 0
  %3236 = vmatprep.subr.bf16.mxu0 0
  %3237 = vmatpush1.bf16.msra.mxu0 0
  %3238 = vmatprep.subr.bf16.mxu0 0
  %3239 = vmatpush1.bf16.msra.mxu0 0
  %3240 = vmatprep.subr.bf16.mxu0 0
  %3241 = vmatpush1.bf16.msra.mxu0 0
  %3242 = vmatprep.subr.bf16.mxu0 0
  %3243 = vmatpush1.bf16.msra.mxu0 0
  %3244 = vmatprep.mubr.bf16.mxu0 0
  %3245 = vmatmul.mubr.bf16.gmra.mrb[0].mxu0 %v3115
  %v3246 = vpop.f32.mrb[0].mxu0
  %v3247 = vadd.f32 0.0, %v3246
  %v3248 = vpop.f32.mrb[0].mxu0
  %v3249 = vadd.f32 0.0, %v3248
  %v3250 = vpop.f32.mrb[0].mxu0
  %v3251 = vpop.f32.mrb[0].mxu0
  %3252 = vdwg.mxu0
  %v3253 = vadd.f32 %v3113, %v3247
  %v3254 = vadd.f32 %v3114, %v3249
  %v3255 = vpack.c.bf16 %v1714, %v1714
  %v3256 = vld [vmem:[%s3 + $0x580] sm:$0xff]
  %v3257 = vld [vmem:[%s3 + $0x588] sm:$0xff]
  %v3258 = vld [vmem:[%s3 + $0x590] sm:$0xff]
  %v3259 = vld [vmem:[%s3 + $0x598] sm:$0xff]
  %v3260 = vld [vmem:[%s3 + $0x5a0] sm:$0xff]
  %v3261 = vld [vmem:[%s3 + $0x5a8] sm:$0xff]
  %v3262 = vld [vmem:[%s3 + $0x5b0] sm:$0xff]
  %v3263 = vld [vmem:[%s3 + $0x5b8] sm:$0xff]
  %v3264 = vld [vmem:[%s3 + $0x5c0] sm:$0xff]
  %v3265 = vld [vmem:[%s3 + $0x5c8] sm:$0xff]
  %v3266 = vld [vmem:[%s3 + $0x5d0] sm:$0xff]
  %v3267 = vld [vmem:[%s3 + $0x5d8] sm:$0xff]
  %v3268 = vld [vmem:[%s3 + $0x5e0] sm:$0xff]
  %v3269 = vld [vmem:[%s3 + $0x5e8] sm:$0xff]
  %v3270 = vld [vmem:[%s3 + $0x5f0] sm:$0xff]
  %v3271 = vld [vmem:[%s3 + $0x5f8] sm:$0xff]
  %v3288 = vunpack.c.l.b16 %v3256
  %v3289 = vunpack.c.h.b16 %v3256
  %v3290 = vunpack.c.l.b16 %v3257
  %v3291 = vunpack.c.h.b16 %v3257
  %v3292 = vunpack.c.l.b16 %v3258
  %v3293 = vunpack.c.h.b16 %v3258
  %v3294 = vunpack.c.l.b16 %v3259
  %v3295 = vunpack.c.h.b16 %v3259
  %v3296 = vunpack.c.l.b16 %v3260
  %v3297 = vunpack.c.h.b16 %v3260
  %v3298 = vunpack.c.l.b16 %v3261
  %v3299 = vunpack.c.h.b16 %v3261
  %v3300 = vunpack.c.l.b16 %v3262
  %v3301 = vunpack.c.h.b16 %v3262
  %v3302 = vunpack.c.l.b16 %v3263
  %v3303 = vunpack.c.h.b16 %v3263
  %v3304 = vunpack.c.l.b16 %v3264
  %v3305 = vunpack.c.h.b16 %v3264
  %v3306 = vunpack.c.l.b16 %v3265
  %v3307 = vunpack.c.h.b16 %v3265
  %v3308 = vunpack.c.l.b16 %v3266
  %v3309 = vunpack.c.h.b16 %v3266
  %v3310 = vunpack.c.l.b16 %v3267
  %v3311 = vunpack.c.h.b16 %v3267
  %v3312 = vunpack.c.l.b16 %v3268
  %v3313 = vunpack.c.h.b16 %v3268
  %v3314 = vunpack.c.l.b16 %v3269
  %v3315 = vunpack.c.h.b16 %v3269
  %v3316 = vunpack.c.l.b16 %v3270
  %v3317 = vunpack.c.h.b16 %v3270
  %v3318 = vunpack.c.l.b16 %v3271
  %v3319 = vunpack.c.h.b16 %v3271
  %v3320 = vpack.c.b16 %v3290, %v3288
  %v3321 = vpack.c.b16 %v3291, %v3289
  %v3322 = vpack.c.b16 %v3294, %v3292
  %v3323 = vpack.c.b16 %v3295, %v3293
  %v3324 = vpack.c.b16 %v3298, %v3296
  %v3325 = vpack.c.b16 %v3299, %v3297
  %v3326 = vpack.c.b16 %v3302, %v3300
  %v3327 = vpack.c.b16 %v3303, %v3301
  %v3328 = vpack.c.b16 %v3306, %v3304
  %v3329 = vpack.c.b16 %v3307, %v3305
  %v3330 = vpack.c.b16 %v3310, %v3308
  %v3331 = vpack.c.b16 %v3311, %v3309
  %v3332 = vpack.c.b16 %v3314, %v3312
  %v3333 = vpack.c.b16 %v3315, %v3313
  %v3334 = vpack.c.b16 %v3318, %v3316
  %v3335 = vpack.c.b16 %v3319, %v3317
  %3352 = vmatprep.subr.bf16.mxu0 %v3321
  %3353 = vmatpush1.bf16.msra.mxu0 %v3320
  %3354 = vmatprep.subr.bf16.mxu0 %v3323
  %3355 = vmatpush1.bf16.msra.mxu0 %v3322
  %3356 = vmatprep.subr.bf16.mxu0 %v3325
  %3357 = vmatpush1.bf16.msra.mxu0 %v3324
  %3358 = vmatprep.subr.bf16.mxu0 %v3327
  %3359 = vmatpush1.bf16.msra.mxu0 %v3326
  %3360 = vmatprep.subr.bf16.mxu0 %v3329
  %3361 = vmatpush1.bf16.msra.mxu0 %v3328
  %3362 = vmatprep.subr.bf16.mxu0 %v3331
  %3363 = vmatpush1.bf16.msra.mxu0 %v3330
  %3364 = vmatprep.subr.bf16.mxu0 %v3333
  %3365 = vmatpush1.bf16.msra.mxu0 %v3332
  %3366 = vmatprep.subr.bf16.mxu0 %v3335
  %3367 = vmatpush1.bf16.msra.mxu0 %v3334
  %3368 = vmatprep.subr.bf16.mxu0 0
  %3369 = vmatpush1.bf16.msra.mxu0 0
  %3370 = vmatprep.subr.bf16.mxu0 0
  %3371 = vmatpush1.bf16.msra.mxu0 0
  %3372 = vmatprep.subr.bf16.mxu0 0
  %3373 = vmatpush1.bf16.msra.mxu0 0
  %3374 = vmatprep.subr.bf16.mxu0 0
  %3375 = vmatpush1.bf16.msra.mxu0 0
  %3376 = vmatprep.subr.bf16.mxu0 0
  %3377 = vmatpush1.bf16.msra.mxu0 0
  %3378 = vmatprep.subr.bf16.mxu0 0
  %3379 = vmatpush1.bf16.msra.mxu0 0
  %3380 = vmatprep.subr.bf16.mxu0 0
  %3381 = vmatpush1.bf16.msra.mxu0 0
  %3382 = vmatprep.subr.bf16.mxu0 0
  %3383 = vmatpush1.bf16.msra.mxu0 0
  %3384 = vmatprep.mubr.bf16.mxu0 0
  %3385 = vmatmul.mubr.bf16.gmra.mrb[0].mxu0 %v3255
  %v3386 = vpop.f32.mrb[0].mxu0
  %v3387 = vadd.f32 0.0, %v3386
  %v3388 = vpop.f32.mrb[0].mxu0
  %v3389 = vadd.f32 0.0, %v3388
  %v3390 = vpop.f32.mrb[0].mxu0
  %v3391 = vpop.f32.mrb[0].mxu0
  %3392 = vdwg.mxu0
  %v3393 = vadd.f32 %v3253, %v3387
  %v3394 = vadd.f32 %v3254, %v3389
  %v3395 = vpack.c.bf16 %v1715, %v1715
  %v3396 = vld [vmem:[%s3 + $0x600] sm:$0xff]
  %v3397 = vld [vmem:[%s3 + $0x608] sm:$0xff]
  %v3398 = vld [vmem:[%s3 + $0x610] sm:$0xff]
  %v3399 = vld [vmem:[%s3 + $0x618] sm:$0xff]
  %v3400 = vld [vmem:[%s3 + $0x620] sm:$0xff]
  %v3401 = vld [vmem:[%s3 + $0x628] sm:$0xff]
  %v3402 = vld [vmem:[%s3 + $0x630] sm:$0xff]
  %v3403 = vld [vmem:[%s3 + $0x638] sm:$0xff]
  %v3404 = vld [vmem:[%s3 + $0x640] sm:$0xff]
  %v3405 = vld [vmem:[%s3 + $0x648] sm:$0xff]
  %v3406 = vld [vmem:[%s3 + $0x650] sm:$0xff]
  %v3407 = vld [vmem:[%s3 + $0x658] sm:$0xff]
  %v3408 = vld [vmem:[%s3 + $0x660] sm:$0xff]
  %v3409 = vld [vmem:[%s3 + $0x668] sm:$0xff]
  %v3410 = vld [vmem:[%s3 + $0x670] sm:$0xff]
  %v3411 = vld [vmem:[%s3 + $0x678] sm:$0xff]
  %v3428 = vunpack.c.l.b16 %v3396
  %v3429 = vunpack.c.h.b16 %v3396
  %v3430 = vunpack.c.l.b16 %v3397
  %v3431 = vunpack.c.h.b16 %v3397
  %v3432 = vunpack.c.l.b16 %v3398
  %v3433 = vunpack.c.h.b16 %v3398
  %v3434 = vunpack.c.l.b16 %v3399
  %v3435 = vunpack.c.h.b16 %v3399
  %v3436 = vunpack.c.l.b16 %v3400
  %v3437 = vunpack.c.h.b16 %v3400
  %v3438 = vunpack.c.l.b16 %v3401
  %v3439 = vunpack.c.h.b16 %v3401
  %v3440 = vunpack.c.l.b16 %v3402
  %v3441 = vunpack.c.h.b16 %v3402
  %v3442 = vunpack.c.l.b16 %v3403
  %v3443 = vunpack.c.h.b16 %v3403
  %v3444 = vunpack.c.l.b16 %v3404
  %v3445 = vunpack.c.h.b16 %v3404
  %v3446 = vunpack.c.l.b16 %v3405
  %v3447 = vunpack.c.h.b16 %v3405
  %v3448 = vunpack.c.l.b16 %v3406
  %v3449 = vunpack.c.h.b16 %v3406
  %v3450 = vunpack.c.l.b16 %v3407
  %v3451 = vunpack.c.h.b16 %v3407
  %v3452 = vunpack.c.l.b16 %v3408
  %v3453 = vunpack.c.h.b16 %v3408
  %v3454 = vunpack.c.l.b16 %v3409
  %v3455 = vunpack.c.h.b16 %v3409
  %v3456 = vunpack.c.l.b16 %v3410
  %v3457 = vunpack.c.h.b16 %v3410
  %v3458 = vunpack.c.l.b16 %v3411
  %v3459 = vunpack.c.h.b16 %v3411
  %v3460 = vpack.c.b16 %v3430, %v3428
  %v3461 = vpack.c.b16 %v3431, %v3429
  %v3462 = vpack.c.b16 %v3434, %v3432
  %v3463 = vpack.c.b16 %v3435, %v3433
  %v3464 = vpack.c.b16 %v3438, %v3436
  %v3465 = vpack.c.b16 %v3439, %v3437
  %v3466 = vpack.c.b16 %v3442, %v3440
  %v3467 = vpack.c.b16 %v3443, %v3441
  %v3468 = vpack.c.b16 %v3446, %v3444
  %v3469 = vpack.c.b16 %v3447, %v3445
  %v3470 = vpack.c.b16 %v3450, %v3448
  %v3471 = vpack.c.b16 %v3451, %v3449
  %v3472 = vpack.c.b16 %v3454, %v3452
  %v3473 = vpack.c.b16 %v3455, %v3453
  %v3474 = vpack.c.b16 %v3458, %v3456
  %v3475 = vpack.c.b16 %v3459, %v3457
  %3492 = vmatprep.subr.bf16.mxu0 %v3461
  %3493 = vmatpush1.bf16.msra.mxu0 %v3460
  %3494 = vmatprep.subr.bf16.mxu0 %v3463
  %3495 = vmatpush1.bf16.msra.mxu0 %v3462
  %3496 = vmatprep.subr.bf16.mxu0 %v3465
  %3497 = vmatpush1.bf16.msra.mxu0 %v3464
  %3498 = vmatprep.subr.bf16.mxu0 %v3467
  %3499 = vmatpush1.bf16.msra.mxu0 %v3466
  %3500 = vmatprep.subr.bf16.mxu0 %v3469
  %3501 = vmatpush1.bf16.msra.mxu0 %v3468
  %3502 = vmatprep.subr.bf16.mxu0 %v3471
  %3503 = vmatpush1.bf16.msra.mxu0 %v3470
  %3504 = vmatprep.subr.bf16.mxu0 %v3473
  %3505 = vmatpush1.bf16.msra.mxu0 %v3472
  %3506 = vmatprep.subr.bf16.mxu0 %v3475
  %3507 = vmatpush1.bf16.msra.mxu0 %v3474
  %3508 = vmatprep.subr.bf16.mxu0 0
  %3509 = vmatpush1.bf16.msra.mxu0 0
  %3510 = vmatprep.subr.bf16.mxu0 0
  %3511 = vmatpush1.bf16.msra.mxu0 0
  %3512 = vmatprep.subr.bf16.mxu0 0
  %3513 = vmatpush1.bf16.msra.mxu0 0
  %3514 = vmatprep.subr.bf16.mxu0 0
  %3515 = vmatpush1.bf16.msra.mxu0 0
  %3516 = vmatprep.subr.bf16.mxu0 0
  %3517 = vmatpush1.bf16.msra.mxu0 0
  %3518 = vmatprep.subr.bf16.mxu0 0
  %3519 = vmatpush1.bf16.msra.mxu0 0
  %3520 = vmatprep.subr.bf16.mxu0 0
  %3521 = vmatpush1.bf16.msra.mxu0 0
  %3522 = vmatprep.subr.bf16.mxu0 0
  %3523 = vmatpush1.bf16.msra.mxu0 0
  %3524 = vmatprep.mubr.bf16.mxu0 0
  %3525 = vmatmul.mubr.bf16.gmra.mrb[0].mxu0 %v3395
  %v3526 = vpop.f32.mrb[0].mxu0
  %v3527 = vadd.f32 0.0, %v3526
  %v3528 = vpop.f32.mrb[0].mxu0
  %v3529 = vadd.f32 0.0, %v3528
  %v3530 = vpop.f32.mrb[0].mxu0
  %v3531 = vpop.f32.mrb[0].mxu0
  %3532 = vdwg.mxu0
  %v3533 = vadd.f32 %v3393, %v3527
  %v3534 = vadd.f32 %v3394, %v3529
  %v3535 = vpack.c.bf16 %v1716, %v1716
  %v3536 = vld [vmem:[%s3 + $0x680] sm:$0xff]
  %v3537 = vld [vmem:[%s3 + $0x688] sm:$0xff]
  %v3538 = vld [vmem:[%s3 + $0x690] sm:$0xff]
  %v3539 = vld [vmem:[%s3 + $0x698] sm:$0xff]
  %v3540 = vld [vmem:[%s3 + $0x6a0] sm:$0xff]
  %v3541 = vld [vmem:[%s3 + $0x6a8] sm:$0xff]
  %v3542 = vld [vmem:[%s3 + $0x6b0] sm:$0xff]
  %v3543 = vld [vmem:[%s3 + $0x6b8] sm:$0xff]
  %v3544 = vld [vmem:[%s3 + $0x6c0] sm:$0xff]
  %v3545 = vld [vmem:[%s3 + $0x6c8] sm:$0xff]
  %v3546 = vld [vmem:[%s3 + $0x6d0] sm:$0xff]
  %v3547 = vld [vmem:[%s3 + $0x6d8] sm:$0xff]
  %v3548 = vld [vmem:[%s3 + $0x6e0] sm:$0xff]
  %v3549 = vld [vmem:[%s3 + $0x6e8] sm:$0xff]
  %v3550 = vld [vmem:[%s3 + $0x6f0] sm:$0xff]
  %v3551 = vld [vmem:[%s3 + $0x6f8] sm:$0xff]
  %v3568 = vunpack.c.l.b16 %v3536
  %v3569 = vunpack.c.h.b16 %v3536
  %v3570 = vunpack.c.l.b16 %v3537
  %v3571 = vunpack.c.h.b16 %v3537
  %v3572 = vunpack.c.l.b16 %v3538
  %v3573 = vunpack.c.h.b16 %v3538
  %v3574 = vunpack.c.l.b16 %v3539
  %v3575 = vunpack.c.h.b16 %v3539
  %v3576 = vunpack.c.l.b16 %v3540
  %v3577 = vunpack.c.h.b16 %v3540
  %v3578 = vunpack.c.l.b16 %v3541
  %v3579 = vunpack.c.h.b16 %v3541
  %v3580 = vunpack.c.l.b16 %v3542
  %v3581 = vunpack.c.h.b16 %v3542
  %v3582 = vunpack.c.l.b16 %v3543
  %v3583 = vunpack.c.h.b16 %v3543
  %v3584 = vunpack.c.l.b16 %v3544
  %v3585 = vunpack.c.h.b16 %v3544
  %v3586 = vunpack.c.l.b16 %v3545
  %v3587 = vunpack.c.h.b16 %v3545
  %v3588 = vunpack.c.l.b16 %v3546
  %v3589 = vunpack.c.h.b16 %v3546
  %v3590 = vunpack.c.l.b16 %v3547
  %v3591 = vunpack.c.h.b16 %v3547
  %v3592 = vunpack.c.l.b16 %v3548
  %v3593 = vunpack.c.h.b16 %v3548
  %v3594 = vunpack.c.l.b16 %v3549
  %v3595 = vunpack.c.h.b16 %v3549
  %v3596 = vunpack.c.l.b16 %v3550
  %v3597 = vunpack.c.h.b16 %v3550
  %v3598 = vunpack.c.l.b16 %v3551
  %v3599 = vunpack.c.h.b16 %v3551
  %v3600 = vpack.c.b16 %v3570, %v3568
  %v3601 = vpack.c.b16 %v3571, %v3569
  %v3602 = vpack.c.b16 %v3574, %v3572
  %v3603 = vpack.c.b16 %v3575, %v3573
  %v3604 = vpack.c.b16 %v3578, %v3576
  %v3605 = vpack.c.b16 %v3579, %v3577
  %v3606 = vpack.c.b16 %v3582, %v3580
  %v3607 = vpack.c.b16 %v3583, %v3581
  %v3608 = vpack.c.b16 %v3586, %v3584
  %v3609 = vpack.c.b16 %v3587, %v3585
  %v3610 = vpack.c.b16 %v3590, %v3588
  %v3611 = vpack.c.b16 %v3591, %v3589
  %v3612 = vpack.c.b16 %v3594, %v3592
  %v3613 = vpack.c.b16 %v3595, %v3593
  %v3614 = vpack.c.b16 %v3598, %v3596
  %v3615 = vpack.c.b16 %v3599, %v3597
  %3632 = vmatprep.subr.bf16.mxu0 %v3601
  %3633 = vmatpush1.bf16.msra.mxu0 %v3600
  %3634 = vmatprep.subr.bf16.mxu0 %v3603
  %3635 = vmatpush1.bf16.msra.mxu0 %v3602
  %3636 = vmatprep.subr.bf16.mxu0 %v3605
  %3637 = vmatpush1.bf16.msra.mxu0 %v3604
  %3638 = vmatprep.subr.bf16.mxu0 %v3607
  %3639 = vmatpush1.bf16.msra.mxu0 %v3606
  %3640 = vmatprep.subr.bf16.mxu0 %v3609
  %3641 = vmatpush1.bf16.msra.mxu0 %v3608
  %3642 = vmatprep.subr.bf16.mxu0 %v3611
  %3643 = vmatpush1.bf16.msra.mxu0 %v3610
  %3644 = vmatprep.subr.bf16.mxu0 %v3613
  %3645 = vmatpush1.bf16.msra.mxu0 %v3612
  %3646 = vmatprep.subr.bf16.mxu0 %v3615
  %3647 = vmatpush1.bf16.msra.mxu0 %v3614
  %3648 = vmatprep.subr.bf16.mxu0 0
  %3649 = vmatpush1.bf16.msra.mxu0 0
  %3650 = vmatprep.subr.bf16.mxu0 0
  %3651 = vmatpush1.bf16.msra.mxu0 0
  %3652 = vmatprep.subr.bf16.mxu0 0
  %3653 = vmatpush1.bf16.msra.mxu0 0
  %3654 = vmatprep.subr.bf16.mxu0 0
  %3655 = vmatpush1.bf16.msra.mxu0 0
  %3656 = vmatprep.subr.bf16.mxu0 0
  %3657 = vmatpush1.bf16.msra.mxu0 0
  %3658 = vmatprep.subr.bf16.mxu0 0
  %3659 = vmatpush1.bf16.msra.mxu0 0
  %3660 = vmatprep.subr.bf16.mxu0 0
  %3661 = vmatpush1.bf16.msra.mxu0 0
  %3662 = vmatprep.subr.bf16.mxu0 0
  %3663 = vmatpush1.bf16.msra.mxu0 0
  %3664 = vmatprep.mubr.bf16.mxu0 0
  %3665 = vmatmul.mubr.bf16.gmra.mrb[0].mxu0 %v3535
  %v3666 = vpop.f32.mrb[0].mxu0
  %v3667 = vadd.f32 0.0, %v3666
  %v3668 = vpop.f32.mrb[0].mxu0
  %v3669 = vadd.f32 0.0, %v3668
  %v3670 = vpop.f32.mrb[0].mxu0
  %v3671 = vpop.f32.mrb[0].mxu0
  %3672 = vdwg.mxu0
  %v3673 = vadd.f32 %v3533, %v3667
  %v3674 = vadd.f32 %v3534, %v3669
  %v3675 = vpack.c.bf16 %v1717, %v1717
  %v3676 = vld [vmem:[%s3 + $0x700] sm:$0xff]
  %v3677 = vld [vmem:[%s3 + $0x708] sm:$0xff]
  %v3678 = vld [vmem:[%s3 + $0x710] sm:$0xff]
  %v3679 = vld [vmem:[%s3 + $0x718] sm:$0xff]
  %v3680 = vld [vmem:[%s3 + $0x720] sm:$0xff]
  %v3681 = vld [vmem:[%s3 + $0x728] sm:$0xff]
  %v3682 = vld [vmem:[%s3 + $0x730] sm:$0xff]
  %v3683 = vld [vmem:[%s3 + $0x738] sm:$0xff]
  %v3684 = vld [vmem:[%s3 + $0x740] sm:$0xff]
  %v3685 = vld [vmem:[%s3 + $0x748] sm:$0xff]
  %v3686 = vld [vmem:[%s3 + $0x750] sm:$0xff]
  %v3687 = vld [vmem:[%s3 + $0x758] sm:$0xff]
  %v3688 = vld [vmem:[%s3 + $0x760] sm:$0xff]
  %v3689 = vld [vmem:[%s3 + $0x768] sm:$0xff]
  %v3690 = vld [vmem:[%s3 + $0x770] sm:$0xff]
  %v3691 = vld [vmem:[%s3 + $0x778] sm:$0xff]
  %v3708 = vunpack.c.l.b16 %v3676
  %v3709 = vunpack.c.h.b16 %v3676
  %v3710 = vunpack.c.l.b16 %v3677
  %v3711 = vunpack.c.h.b16 %v3677
  %v3712 = vunpack.c.l.b16 %v3678
  %v3713 = vunpack.c.h.b16 %v3678
  %v3714 = vunpack.c.l.b16 %v3679
  %v3715 = vunpack.c.h.b16 %v3679
  %v3716 = vunpack.c.l.b16 %v3680
  %v3717 = vunpack.c.h.b16 %v3680
  %v3718 = vunpack.c.l.b16 %v3681
  %v3719 = vunpack.c.h.b16 %v3681
  %v3720 = vunpack.c.l.b16 %v3682
  %v3721 = vunpack.c.h.b16 %v3682
  %v3722 = vunpack.c.l.b16 %v3683
  %v3723 = vunpack.c.h.b16 %v3683
  %v3724 = vunpack.c.l.b16 %v3684
  %v3725 = vunpack.c.h.b16 %v3684
  %v3726 = vunpack.c.l.b16 %v3685
  %v3727 = vunpack.c.h.b16 %v3685
  %v3728 = vunpack.c.l.b16 %v3686
  %v3729 = vunpack.c.h.b16 %v3686
  %v3730 = vunpack.c.l.b16 %v3687
  %v3731 = vunpack.c.h.b16 %v3687
  %v3732 = vunpack.c.l.b16 %v3688
  %v3733 = vunpack.c.h.b16 %v3688
  %v3734 = vunpack.c.l.b16 %v3689
  %v3735 = vunpack.c.h.b16 %v3689
  %v3736 = vunpack.c.l.b16 %v3690
  %v3737 = vunpack.c.h.b16 %v3690
  %v3738 = vunpack.c.l.b16 %v3691
  %v3739 = vunpack.c.h.b16 %v3691
  %v3740 = vpack.c.b16 %v3710, %v3708
  %v3741 = vpack.c.b16 %v3711, %v3709
  %v3742 = vpack.c.b16 %v3714, %v3712
  %v3743 = vpack.c.b16 %v3715, %v3713
  %v3744 = vpack.c.b16 %v3718, %v3716
  %v3745 = vpack.c.b16 %v3719, %v3717
  %v3746 = vpack.c.b16 %v3722, %v3720
  %v3747 = vpack.c.b16 %v3723, %v3721
  %v3748 = vpack.c.b16 %v3726, %v3724
  %v3749 = vpack.c.b16 %v3727, %v3725
  %v3750 = vpack.c.b16 %v3730, %v3728
  %v3751 = vpack.c.b16 %v3731, %v3729
  %v3752 = vpack.c.b16 %v3734, %v3732
  %v3753 = vpack.c.b16 %v3735, %v3733
  %v3754 = vpack.c.b16 %v3738, %v3736
  %v3755 = vpack.c.b16 %v3739, %v3737
  %3772 = vmatprep.subr.bf16.mxu0 %v3741
  %3773 = vmatpush1.bf16.msra.mxu0 %v3740
  %3774 = vmatprep.subr.bf16.mxu0 %v3743
  %3775 = vmatpush1.bf16.msra.mxu0 %v3742
  %3776 = vmatprep.subr.bf16.mxu0 %v3745
  %3777 = vmatpush1.bf16.msra.mxu0 %v3744
  %3778 = vmatprep.subr.bf16.mxu0 %v3747
  %3779 = vmatpush1.bf16.msra.mxu0 %v3746
  %3780 = vmatprep.subr.bf16.mxu0 %v3749
  %3781 = vmatpush1.bf16.msra.mxu0 %v3748
  %3782 = vmatprep.subr.bf16.mxu0 %v3751
  %3783 = vmatpush1.bf16.msra.mxu0 %v3750
  %3784 = vmatprep.subr.bf16.mxu0 %v3753
  %3785 = vmatpush1.bf16.msra.mxu0 %v3752
  %3786 = vmatprep.subr.bf16.mxu0 %v3755
  %3787 = vmatpush1.bf16.msra.mxu0 %v3754
  %3788 = vmatprep.subr.bf16.mxu0 0
  %3789 = vmatpush1.bf16.msra.mxu0 0
  %3790 = vmatprep.subr.bf16.mxu0 0
  %3791 = vmatpush1.bf16.msra.mxu0 0
  %3792 = vmatprep.subr.bf16.mxu0 0
  %3793 = vmatpush1.bf16.msra.mxu0 0
  %3794 = vmatprep.subr.bf16.mxu0 0
  %3795 = vmatpush1.bf16.msra.mxu0 0
  %3796 = vmatprep.subr.bf16.mxu0 0
  %3797 = vmatpush1.bf16.msra.mxu0 0
  %3798 = vmatprep.subr.bf16.mxu0 0
  %3799 = vmatpush1.bf16.msra.mxu0 0
  %3800 = vmatprep.subr.bf16.mxu0 0
  %3801 = vmatpush1.bf16.msra.mxu0 0
  %3802 = vmatprep.subr.bf16.mxu0 0
  %3803 = vmatpush1.bf16.msra.mxu0 0
  %3804 = vmatprep.mubr.bf16.mxu0 0
  %3805 = vmatmul.mubr.bf16.gmra.mrb[0].mxu0 %v3675
  %v3806 = vpop.f32.mrb[0].mxu0
  %v3807 = vadd.f32 0.0, %v3806
  %v3808 = vpop.f32.mrb[0].mxu0
  %v3809 = vadd.f32 0.0, %v3808
  %v3810 = vpop.f32.mrb[0].mxu0
  %v3811 = vpop.f32.mrb[0].mxu0
  %3812 = vdwg.mxu0
  %v3813 = vadd.f32 %v3673, %v3807
  %v3814 = vadd.f32 %v3674, %v3809
  %v3815 = vpack.c.bf16 %v1718, %v1718
  %v3816 = vld [vmem:[%s3 + $0x780] sm:$0xff]
  %v3817 = vld [vmem:[%s3 + $0x788] sm:$0xff]
  %v3818 = vld [vmem:[%s3 + $0x790] sm:$0xff]
  %v3819 = vld [vmem:[%s3 + $0x798] sm:$0xff]
  %v3820 = vld [vmem:[%s3 + $0x7a0] sm:$0xff]
  %v3821 = vld [vmem:[%s3 + $0x7a8] sm:$0xff]
  %v3822 = vld [vmem:[%s3 + $0x7b0] sm:$0xff]
  %v3823 = vld [vmem:[%s3 + $0x7b8] sm:$0xff]
  %v3824 = vld [vmem:[%s3 + $0x7c0] sm:$0xff]
  %v3825 = vld [vmem:[%s3 + $0x7c8] sm:$0xff]
  %v3826 = vld [vmem:[%s3 + $0x7d0] sm:$0xff]
  %v3827 = vld [vmem:[%s3 + $0x7d8] sm:$0xff]
  %v3828 = vld [vmem:[%s3 + $0x7e0] sm:$0xff]
  %v3829 = vld [vmem:[%s3 + $0x7e8] sm:$0xff]
  %v3830 = vld [vmem:[%s3 + $0x7f0] sm:$0xff]
  %v3831 = vld [vmem:[%s3 + $0x7f8] sm:$0xff]
  %v3848 = vunpack.c.l.b16 %v3816
  %v3849 = vunpack.c.h.b16 %v3816
  %v3850 = vunpack.c.l.b16 %v3817
  %v3851 = vunpack.c.h.b16 %v3817
  %v3852 = vunpack.c.l.b16 %v3818
  %v3853 = vunpack.c.h.b16 %v3818
  %v3854 = vunpack.c.l.b16 %v3819
  %v3855 = vunpack.c.h.b16 %v3819
  %v3856 = vunpack.c.l.b16 %v3820
  %v3857 = vunpack.c.h.b16 %v3820
  %v3858 = vunpack.c.l.b16 %v3821
  %v3859 = vunpack.c.h.b16 %v3821
  %v3860 = vunpack.c.l.b16 %v3822
  %v3861 = vunpack.c.h.b16 %v3822
  %v3862 = vunpack.c.l.b16 %v3823
  %v3863 = vunpack.c.h.b16 %v3823
  %v3864 = vunpack.c.l.b16 %v3824
  %v3865 = vunpack.c.h.b16 %v3824
  %v3866 = vunpack.c.l.b16 %v3825
  %v3867 = vunpack.c.h.b16 %v3825
  %v3868 = vunpack.c.l.b16 %v3826
  %v3869 = vunpack.c.h.b16 %v3826
  %v3870 = vunpack.c.l.b16 %v3827
  %v3871 = vunpack.c.h.b16 %v3827
  %v3872 = vunpack.c.l.b16 %v3828
  %v3873 = vunpack.c.h.b16 %v3828
  %v3874 = vunpack.c.l.b16 %v3829
  %v3875 = vunpack.c.h.b16 %v3829
  %v3876 = vunpack.c.l.b16 %v3830
  %v3877 = vunpack.c.h.b16 %v3830
  %v3878 = vunpack.c.l.b16 %v3831
  %v3879 = vunpack.c.h.b16 %v3831
  %v3880 = vpack.c.b16 %v3850, %v3848
  %v3881 = vpack.c.b16 %v3851, %v3849
  %v3882 = vpack.c.b16 %v3854, %v3852
  %v3883 = vpack.c.b16 %v3855, %v3853
  %v3884 = vpack.c.b16 %v3858, %v3856
  %v3885 = vpack.c.b16 %v3859, %v3857
  %v3886 = vpack.c.b16 %v3862, %v3860
  %v3887 = vpack.c.b16 %v3863, %v3861
  %v3888 = vpack.c.b16 %v3866, %v3864
  %v3889 = vpack.c.b16 %v3867, %v3865
  %v3890 = vpack.c.b16 %v3870, %v3868
  %v3891 = vpack.c.b16 %v3871, %v3869
  %v3892 = vpack.c.b16 %v3874, %v3872
  %v3893 = vpack.c.b16 %v3875, %v3873
  %v3894 = vpack.c.b16 %v3878, %v3876
  %v3895 = vpack.c.b16 %v3879, %v3877
  %3912 = vmatprep.subr.bf16.mxu0 %v3881
  %3913 = vmatpush1.bf16.msra.mxu0 %v3880
  %3914 = vmatprep.subr.bf16.mxu0 %v3883
  %3915 = vmatpush1.bf16.msra.mxu0 %v3882
  %3916 = vmatprep.subr.bf16.mxu0 %v3885
  %3917 = vmatpush1.bf16.msra.mxu0 %v3884
  %3918 = vmatprep.subr.bf16.mxu0 %v3887
  %3919 = vmatpush1.bf16.msra.mxu0 %v3886
  %3920 = vmatprep.subr.bf16.mxu0 %v3889
  %3921 = vmatpush1.bf16.msra.mxu0 %v3888
  %3922 = vmatprep.subr.bf16.mxu0 %v3891
  %3923 = vmatpush1.bf16.msra.mxu0 %v3890
  %3924 = vmatprep.subr.bf16.mxu0 %v3893
  %3925 = vmatpush1.bf16.msra.mxu0 %v3892
  %3926 = vmatprep.subr.bf16.mxu0 %v3895
  %3927 = vmatpush1.bf16.msra.mxu0 %v3894
  %3928 = vmatprep.subr.bf16.mxu0 0
  %3929 = vmatpush1.bf16.msra.mxu0 0
  %3930 = vmatprep.subr.bf16.mxu0 0
  %3931 = vmatpush1.bf16.msra.mxu0 0
  %3932 = vmatprep.subr.bf16.mxu0 0
  %3933 = vmatpush1.bf16.msra.mxu0 0
  %3934 = vmatprep.subr.bf16.mxu0 0
  %3935 = vmatpush1.bf16.msra.mxu0 0
  %3936 = vmatprep.subr.bf16.mxu0 0
  %3937 = vmatpush1.bf16.msra.mxu0 0
  %3938 = vmatprep.subr.bf16.mxu0 0
  %3939 = vmatpush1.bf16.msra.mxu0 0
  %3940 = vmatprep.subr.bf16.mxu0 0
  %3941 = vmatpush1.bf16.msra.mxu0 0
  %3942 = vmatprep.subr.bf16.mxu0 0
  %3943 = vmatpush1.bf16.msra.mxu0 0
  %3944 = vmatprep.mubr.bf16.mxu0 0
  %3945 = vmatmul.mubr.bf16.gmra.mrb[0].mxu0 %v3815
  %v3946 = vpop.f32.mrb[0].mxu0
  %v3947 = vadd.f32 0.0, %v3946
  %v3948 = vpop.f32.mrb[0].mxu0
  %v3949 = vadd.f32 0.0, %v3948
  %v3950 = vpop.f32.mrb[0].mxu0
  %v3951 = vpop.f32.mrb[0].mxu0
  %3952 = vdwg.mxu0
  %v3953 = vadd.f32 %v3813, %v3947
  %v3954 = vadd.f32 %v3814, %v3949
  %v3955 = vld [vmem:[%s4] ss:$2 sm:$0x3]
  %v3957 = vlaneseq
  %v3958 = vshrl.u32 %v3957, 7
  %v3959 = vsub.s32 0, %v3958
  %v3960 = vrot.slane %v3955, %v3959
  %v3961 = vlaneseq
  %v3962 = vshrl.u32 %v3961, 7
  %v3963 = vsub.s32 1, %v3962
  %v3964 = vrot.slane %v3955, %v3963
  %v3967 = vmul.f32 %v3953, %v3960
  %v3968 = vmul.f32 %v3954, %v3964
  %s3969 = scalar_lea.vmem %s4, 1
  %v3970 = vld [vmem:[%s3969] ss:$2 sm:$0x3]
  %v3972 = vlaneseq
  %v3973 = vshrl.u32 %v3972, 7
  %v3974 = vsub.s32 0, %v3973
  %v3975 = vrot.slane %v3970, %v3974
  %v3976 = vlaneseq
  %v3977 = vshrl.u32 %v3976, 7
  %v3978 = vsub.s32 1, %v3977
  %v3979 = vrot.slane %v3970, %v3978
  %v3982 = vadd.f32 %v3967, %v3975
  %v3983 = vadd.f32 %v3968, %v3979
  %vm3984 = vcmp.ge.f32.partialorder %v3982, 0.0
  %vm3985 = vcmp.ge.f32.partialorder %v3983, 0.0
  %v3986 = vmul.f32 %v3982, 0.2
  %v3987 = vmul.f32 %v3983, 0.2
  %v3988 = vsel %vm3984, %v3982, %v3986
  %v3989 = vsel %vm3985, %v3983, %v3987
  %v3990 = vlaneseq
  %v3991 = vshrl.u32 %v3990, 7
  %v3992 = vlaneseq
  %v3993 = vand.u32 %v3992, 127
  %vm3994 = vcmp.eq.s32.totalorder %v3993, %v3991
  %vm3995 = vcmp.lt.s32.totalorder %v3991, 2
  %vm3996 = vmand %vm3994, %vm3995
  %v3997 = vsel %vm3996, 1, 0
  %v3998 = vcvt.s32.f32 %v3997
  %vm3999 = vcmask 64512
  %v4001 = vsel %vm3999, %v3998, 0
  %4003 = vmatprep.subr.mxu0 %v3989
  %4004 = vmatpush1.msra.mxu0 %v3988
  %4005 = vmatprep.subr.mxu0 0.0
  %4006 = vmatpush1.msra.mxu0 0.0
  %4007 = vmatprep.subr.mxu0 0.0
  %4008 = vmatpush1.msra.mxu0 0.0
  %4009 = vmatprep.subr.mxu0 0.0
  %4010 = vmatpush1.msra.mxu0 0.0
  %4011 = vmatprep.subr.mxu0 0.0
  %4012 = vmatpush1.msra.mxu0 0.0
  %4013 = vmatprep.subr.mxu0 0.0
  %4014 = vmatpush1.msra.mxu0 0.0
  %4015 = vmatprep.subr.mxu0 0.0
  %4016 = vmatpush1.msra.mxu0 0.0
  %4017 = vmatprep.subr.mxu0 0.0
  %4018 = vmatpush1.msra.mxu0 0.0
  %4019 = vmatprep.subr.mxu0 0.0
  %4020 = vmatpush1.msra.mxu0 0.0
  %4021 = vmatprep.subr.mxu0 0.0
  %4022 = vmatpush1.msra.mxu0 0.0
  %4023 = vmatprep.subr.mxu0 0.0
  %4024 = vmatpush1.msra.mxu0 0.0
  %4025 = vmatprep.subr.mxu0 0.0
  %4026 = vmatpush1.msra.mxu0 0.0
  %4027 = vmatprep.subr.mxu0 0.0
  %4028 = vmatpush1.msra.mxu0 0.0
  %4029 = vmatprep.subr.mxu0 0.0
  %4030 = vmatpush1.msra.mxu0 0.0
  %4031 = vmatprep.subr.mxu0 0.0
  %4032 = vmatpush1.msra.mxu0 0.0
  %4033 = vmatprep.subr.mxu0 0.0
  %4034 = vmatpush1.msra.mxu0 0.0
  %4035 = vmatprep.subr.mxu0 0.0
  %4036 = vmatpush1.msra.mxu0 0.0
  %4037 = vmatprep.subr.mxu0 0.0
  %4038 = vmatpush1.msra.mxu0 0.0
  %4039 = vmatprep.subr.mxu0 0.0
  %4040 = vmatpush1.msra.mxu0 0.0
  %4041 = vmatprep.subr.mxu0 0.0
  %4042 = vmatpush1.msra.mxu0 0.0
  %4043 = vmatprep.subr.mxu0 0.0
  %4044 = vmatpush1.msra.mxu0 0.0
  %4045 = vmatprep.subr.mxu0 0.0
  %4046 = vmatpush1.msra.mxu0 0.0
  %4047 = vmatprep.subr.mxu0 0.0
  %4048 = vmatpush1.msra.mxu0 0.0
  %4049 = vmatprep.subr.mxu0 0.0
  %4050 = vmatpush1.msra.mxu0 0.0
  %4051 = vmatprep.subr.mxu0 0.0
  %4052 = vmatpush1.msra.mxu0 0.0
  %4053 = vmatprep.subr.mxu0 0.0
  %4054 = vmatpush1.msra.mxu0 0.0
  %4055 = vmatprep.subr.mxu0 0.0
  %4056 = vmatpush1.msra.mxu0 0.0
  %4057 = vmatprep.subr.mxu0 0.0
  %4058 = vmatpush1.msra.mxu0 0.0
  %4059 = vmatprep.subr.mxu0 0.0
  %4060 = vmatpush1.msra.mxu0 0.0
  %4061 = vmatprep.subr.mxu0 0.0
  %4062 = vmatpush1.msra.mxu0 0.0
  %4063 = vmatprep.subr.mxu0 0.0
  %4064 = vmatpush1.msra.mxu0 0.0
  %4065 = vmatprep.subr.mxu0 0.0
  %4066 = vmatpush1.msra.mxu0 0.0
  %4067 = vmatprep.mubr.f32.mxu0 0.0
  %4068 = vmatmul.mubr.f32.gmra.mrb[0].mxu0 %v4001
  %v4069 = vpop.f32.mrb[0].mxu0
  %v4070 = vadd.f32 0.0, %v4069
  %v4071 = vpop.f32.mrb[0].mxu0
  %v4072 = vadd.f32 0.0, %v4071
  %4073 = vdwg.mxu0
  %v4074 = vld [vmem:[%s5] sm:$0xf]
  %v4075 = vld [vmem:[%s5 + $0x4] sm:$0xf]
  %v4076 = vld [vmem:[%s5 + $0x8] sm:$0xf]
  %v4077 = vld [vmem:[%s5 + $0xc] sm:$0xf]
  %v4078 = vld [vmem:[%s5 + $0x10] sm:$0xf]
  %v4079 = vld [vmem:[%s5 + $0x14] sm:$0xf]
  %v4080 = vld [vmem:[%s5 + $0x18] sm:$0xf]
  %v4081 = vld [vmem:[%s5 + $0x1c] sm:$0xf]
  %v4082 = vld [vmem:[%s5 + $0x20] sm:$0xf]
  %v4083 = vld [vmem:[%s5 + $0x24] sm:$0xf]
  %v4084 = vld [vmem:[%s5 + $0x28] sm:$0xf]
  %v4085 = vld [vmem:[%s5 + $0x2c] sm:$0xf]
  %v4086 = vld [vmem:[%s5 + $0x30] sm:$0xf]
  %v4087 = vld [vmem:[%s5 + $0x34] sm:$0xf]
  %v4088 = vld [vmem:[%s5 + $0x38] sm:$0xf]
  %v4089 = vld [vmem:[%s5 + $0x3c] sm:$0xf]
  %v4090 = vld [vmem:[%s5 + $0x40] sm:$0xf]
  %v4091 = vld [vmem:[%s5 + $0x44] sm:$0xf]
  %v4092 = vld [vmem:[%s5 + $0x48] sm:$0xf]
  %v4093 = vld [vmem:[%s5 + $0x4c] sm:$0xf]
  %v4094 = vld [vmem:[%s5 + $0x50] sm:$0xf]
  %v4095 = vld [vmem:[%s5 + $0x54] sm:$0xf]
  %v4096 = vld [vmem:[%s5 + $0x58] sm:$0xf]
  %v4097 = vld [vmem:[%s5 + $0x5c] sm:$0xf]
  %v4098 = vld [vmem:[%s5 + $0x60] sm:$0xf]
  %v4099 = vld [vmem:[%s5 + $0x64] sm:$0xf]
  %v4100 = vld [vmem:[%s5 + $0x68] sm:$0xf]
  %v4101 = vld [vmem:[%s5 + $0x6c] sm:$0xf]
  %v4102 = vld [vmem:[%s5 + $0x70] sm:$0xf]
  %v4103 = vld [vmem:[%s5 + $0x74] sm:$0xf]
  %v4104 = vld [vmem:[%s5 + $0x78] sm:$0xf]
  %v4105 = vld [vmem:[%s5 + $0x7c] sm:$0xf]
  %v4106 = vpack.c.bf16 %v4070, %v4070
  %v4107 = vpack.c.bf16 %v4072, %v4072
  %v4108 = vadd.s32 %v3991, 2
  %vm4109 = vcmp.eq.s32.totalorder %v3993, %v4108
  %vm4110 = vmand %vm4109, %vm3995
  %v4111 = vsel %vm4110, 1, 0
  %v4112 = vcvt.s32.f32 %v4111
  %v4114 = vsel %vm3999, %v4112, 0
  %4116 = vmatprep.subr.mxu0 %v3989
  %4117 = vmatpush1.msra.mxu0 %v3988
  %4118 = vmatprep.subr.mxu0 0.0
  %4119 = vmatpush1.msra.mxu0 0.0
  %4120 = vmatprep.subr.mxu0 0.0
  %4121 = vmatpush1.msra.mxu0 0.0
  %4122 = vmatprep.subr.mxu0 0.0
  %4123 = vmatpush1.msra.mxu0 0.0
  %4124 = vmatprep.subr.mxu0 0.0
  %4125 = vmatpush1.msra.mxu0 0.0
  %4126 = vmatprep.subr.mxu0 0.0
  %4127 = vmatpush1.msra.mxu0 0.0
  %4128 = vmatprep.subr.mxu0 0.0
  %4129 = vmatpush1.msra.mxu0 0.0
  %4130 = vmatprep.subr.mxu0 0.0
  %4131 = vmatpush1.msra.mxu0 0.0
  %4132 = vmatprep.subr.mxu0 0.0
  %4133 = vmatpush1.msra.mxu0 0.0
  %4134 = vmatprep.subr.mxu0 0.0
  %4135 = vmatpush1.msra.mxu0 0.0
  %4136 = vmatprep.subr.mxu0 0.0
  %4137 = vmatpush1.msra.mxu0 0.0
  %4138 = vmatprep.subr.mxu0 0.0
  %4139 = vmatpush1.msra.mxu0 0.0
  %4140 = vmatprep.subr.mxu0 0.0
  %4141 = vmatpush1.msra.mxu0 0.0
  %4142 = vmatprep.subr.mxu0 0.0
  %4143 = vmatpush1.msra.mxu0 0.0
  %4144 = vmatprep.subr.mxu0 0.0
  %4145 = vmatpush1.msra.mxu0 0.0
  %4146 = vmatprep.subr.mxu0 0.0
  %4147 = vmatpush1.msra.mxu0 0.0
  %4148 = vmatprep.subr.mxu0 0.0
  %4149 = vmatpush1.msra.mxu0 0.0
  %4150 = vmatprep.subr.mxu0 0.0
  %4151 = vmatpush1.msra.mxu0 0.0
  %4152 = vmatprep.subr.mxu0 0.0
  %4153 = vmatpush1.msra.mxu0 0.0
  %4154 = vmatprep.subr.mxu0 0.0
  %4155 = vmatpush1.msra.mxu0 0.0
  %4156 = vmatprep.subr.mxu0 0.0
  %4157 = vmatpush1.msra.mxu0 0.0
  %4158 = vmatprep.subr.mxu0 0.0
  %4159 = vmatpush1.msra.mxu0 0.0
  %4160 = vmatprep.subr.mxu0 0.0
  %4161 = vmatpush1.msra.mxu0 0.0
  %4162 = vmatprep.subr.mxu0 0.0
  %4163 = vmatpush1.msra.mxu0 0.0
  %4164 = vmatprep.subr.mxu0 0.0
  %4165 = vmatpush1.msra.mxu0 0.0
  %4166 = vmatprep.subr.mxu0 0.0
  %4167 = vmatpush1.msra.mxu0 0.0
  %4168 = vmatprep.subr.mxu0 0.0
  %4169 = vmatpush1.msra.mxu0 0.0
  %4170 = vmatprep.subr.mxu0 0.0
  %4171 = vmatpush1.msra.mxu0 0.0
  %4172 = vmatprep.subr.mxu0 0.0
  %4173 = vmatpush1.msra.mxu0 0.0
  %4174 = vmatprep.subr.mxu0 0.0
  %4175 = vmatpush1.msra.mxu0 0.0
  %4176 = vmatprep.subr.mxu0 0.0
  %4177 = vmatpush1.msra.mxu0 0.0
  %4178 = vmatprep.subr.mxu0 0.0
  %4179 = vmatpush1.msra.mxu0 0.0
  %4180 = vmatprep.mubr.f32.mxu0 0.0
  %4181 = vmatmul.mubr.f32.gmra.mrb[0].mxu0 %v4114
  %v4182 = vpop.f32.mrb[0].mxu0
  %v4183 = vadd.f32 0.0, %v4182
  %v4184 = vpop.f32.mrb[0].mxu0
  %v4185 = vadd.f32 0.0, %v4184
  %4186 = vdwg.mxu0
  %v4187 = vld [vmem:[%s5 + $0x80] sm:$0xf]
  %v4188 = vld [vmem:[%s5 + $0x84] sm:$0xf]
  %v4189 = vld [vmem:[%s5 + $0x88] sm:$0xf]
  %v4190 = vld [vmem:[%s5 + $0x8c] sm:$0xf]
  %v4191 = vld [vmem:[%s5 + $0x90] sm:$0xf]
  %v4192 = vld [vmem:[%s5 + $0x94] sm:$0xf]
  %v4193 = vld [vmem:[%s5 + $0x98] sm:$0xf]
  %v4194 = vld [vmem:[%s5 + $0x9c] sm:$0xf]
  %v4195 = vld [vmem:[%s5 + $0xa0] sm:$0xf]
  %v4196 = vld [vmem:[%s5 + $0xa4] sm:$0xf]
  %v4197 = vld [vmem:[%s5 + $0xa8] sm:$0xf]
  %v4198 = vld [vmem:[%s5 + $0xac] sm:$0xf]
  %v4199 = vld [vmem:[%s5 + $0xb0] sm:$0xf]
  %v4200 = vld [vmem:[%s5 + $0xb4] sm:$0xf]
  %v4201 = vld [vmem:[%s5 + $0xb8] sm:$0xf]
  %v4202 = vld [vmem:[%s5 + $0xbc] sm:$0xf]
  %v4203 = vld [vmem:[%s5 + $0xc0] sm:$0xf]
  %v4204 = vld [vmem:[%s5 + $0xc4] sm:$0xf]
  %v4205 = vld [vmem:[%s5 + $0xc8] sm:$0xf]
  %v4206 = vld [vmem:[%s5 + $0xcc] sm:$0xf]
  %v4207 = vld [vmem:[%s5 + $0xd0] sm:$0xf]
  %v4208 = vld [vmem:[%s5 + $0xd4] sm:$0xf]
  %v4209 = vld [vmem:[%s5 + $0xd8] sm:$0xf]
  %v4210 = vld [vmem:[%s5 + $0xdc] sm:$0xf]
  %v4211 = vld [vmem:[%s5 + $0xe0] sm:$0xf]
  %v4212 = vld [vmem:[%s5 + $0xe4] sm:$0xf]
  %v4213 = vld [vmem:[%s5 + $0xe8] sm:$0xf]
  %v4214 = vld [vmem:[%s5 + $0xec] sm:$0xf]
  %v4215 = vld [vmem:[%s5 + $0xf0] sm:$0xf]
  %v4216 = vld [vmem:[%s5 + $0xf4] sm:$0xf]
  %v4217 = vld [vmem:[%s5 + $0xf8] sm:$0xf]
  %v4218 = vld [vmem:[%s5 + $0xfc] sm:$0xf]
  %v4219 = vpack.c.bf16 %v4183, %v4183
  %v4220 = vpack.c.bf16 %v4185, %v4185
  %v4253 = vunpack.c.l.b16 %v4187
  %v4254 = vunpack.c.l.b16 %v4188
  %v4255 = vunpack.c.l.b16 %v4189
  %v4256 = vunpack.c.l.b16 %v4190
  %v4257 = vunpack.c.l.b16 %v4191
  %v4258 = vunpack.c.l.b16 %v4192
  %v4259 = vunpack.c.l.b16 %v4193
  %v4260 = vunpack.c.l.b16 %v4194
  %v4261 = vunpack.c.l.b16 %v4195
  %v4262 = vunpack.c.l.b16 %v4196
  %v4263 = vunpack.c.l.b16 %v4197
  %v4264 = vunpack.c.l.b16 %v4198
  %v4265 = vunpack.c.l.b16 %v4199
  %v4266 = vunpack.c.l.b16 %v4200
  %v4267 = vunpack.c.l.b16 %v4201
  %v4268 = vunpack.c.l.b16 %v4202
  %v4269 = vunpack.c.l.b16 %v4203
  %v4270 = vunpack.c.l.b16 %v4204
  %v4271 = vunpack.c.l.b16 %v4205
  %v4272 = vunpack.c.l.b16 %v4206
  %v4273 = vunpack.c.l.b16 %v4207
  %v4274 = vunpack.c.l.b16 %v4208
  %v4275 = vunpack.c.l.b16 %v4209
  %v4276 = vunpack.c.l.b16 %v4210
  %v4277 = vunpack.c.l.b16 %v4211
  %v4278 = vunpack.c.l.b16 %v4212
  %v4279 = vunpack.c.l.b16 %v4213
  %v4280 = vunpack.c.l.b16 %v4214
  %v4281 = vunpack.c.l.b16 %v4215
  %v4282 = vunpack.c.l.b16 %v4216
  %v4283 = vunpack.c.l.b16 %v4217
  %v4284 = vunpack.c.l.b16 %v4218
  %v4285 = vpack.c.b16 %v4254, %v4253
  %v4286 = vpack.c.b16 %v4256, %v4255
  %v4287 = vpack.c.b16 %v4258, %v4257
  %v4288 = vpack.c.b16 %v4260, %v4259
  %v4289 = vpack.c.b16 %v4262, %v4261
  %v4290 = vpack.c.b16 %v4264, %v4263
  %v4291 = vpack.c.b16 %v4266, %v4265
  %v4292 = vpack.c.b16 %v4268, %v4267
  %v4293 = vpack.c.b16 %v4270, %v4269
  %v4294 = vpack.c.b16 %v4272, %v4271
  %v4295 = vpack.c.b16 %v4274, %v4273
  %v4296 = vpack.c.b16 %v4276, %v4275
  %v4297 = vpack.c.b16 %v4278, %v4277
  %v4298 = vpack.c.b16 %v4280, %v4279
  %v4299 = vpack.c.b16 %v4282, %v4281
  %v4300 = vpack.c.b16 %v4284, %v4283
  %4317 = vmatprep.subr.bf16.mxu0 0
  %4318 = vmatpush1.bf16.msra.mxu0 %v4285
  %4319 = vmatprep.subr.bf16.mxu0 0
  %4320 = vmatpush1.bf16.msra.mxu0 %v4286
  %4321 = vmatprep.subr.bf16.mxu0 0
  %4322 = vmatpush1.bf16.msra.mxu0 %v4287
  %4323 = vmatprep.subr.bf16.mxu0 0
  %4324 = vmatpush1.bf16.msra.mxu0 %v4288
  %4325 = vmatprep.subr.bf16.mxu0 0
  %4326 = vmatpush1.bf16.msra.mxu0 %v4289
  %4327 = vmatprep.subr.bf16.mxu0 0
  %4328 = vmatpush1.bf16.msra.mxu0 %v4290
  %4329 = vmatprep.subr.bf16.mxu0 0
  %4330 = vmatpush1.bf16.msra.mxu0 %v4291
  %4331 = vmatprep.subr.bf16.mxu0 0
  %4332 = vmatpush1.bf16.msra.mxu0 %v4292
  %4333 = vmatprep.subr.bf16.mxu0 0
  %4334 = vmatpush1.bf16.msra.mxu0 %v4293
  %4335 = vmatprep.subr.bf16.mxu0 0
  %4336 = vmatpush1.bf16.msra.mxu0 %v4294
  %4337 = vmatprep.subr.bf16.mxu0 0
  %4338 = vmatpush1.bf16.msra.mxu0 %v4295
  %4339 = vmatprep.subr.bf16.mxu0 0
  %4340 = vmatpush1.bf16.msra.mxu0 %v4296
  %4341 = vmatprep.subr.bf16.mxu0 0
  %4342 = vmatpush1.bf16.msra.mxu0 %v4297
  %4343 = vmatprep.subr.bf16.mxu0 0
  %4344 = vmatpush1.bf16.msra.mxu0 %v4298
  %4345 = vmatprep.subr.bf16.mxu0 0
  %4346 = vmatpush1.bf16.msra.mxu0 %v4299
  %4347 = vmatprep.subr.bf16.mxu0 0
  %4348 = vmatpush1.bf16.msra.mxu0 %v4300
  %4349 = vmatprep.mubr.bf16.mxu0 %v4220
  %4350 = vmatmul.mubr.bf16.gmra.mrb[0].mxu0 %v4219
  %v4351 = vpop.f32.mrb[0].mxu0
  %v4352 = vadd.f32 0.0, %v4351
  %v4353 = vpop.f32.mrb[0].mxu0
  %v4354 = vpop.f32.mrb[0].mxu0
  %v4355 = vpop.f32.mrb[0].mxu0
  %4356 = vdwg.mxu0
  %v4389 = vunpack.c.l.b16 %v4074
  %v4390 = vunpack.c.l.b16 %v4075
  %v4391 = vunpack.c.l.b16 %v4076
  %v4392 = vunpack.c.l.b16 %v4077
  %v4393 = vunpack.c.l.b16 %v4078
  %v4394 = vunpack.c.l.b16 %v4079
  %v4395 = vunpack.c.l.b16 %v4080
  %v4396 = vunpack.c.l.b16 %v4081
  %v4397 = vunpack.c.l.b16 %v4082
  %v4398 = vunpack.c.l.b16 %v4083
  %v4399 = vunpack.c.l.b16 %v4084
  %v4400 = vunpack.c.l.b16 %v4085
  %v4401 = vunpack.c.l.b16 %v4086
  %v4402 = vunpack.c.l.b16 %v4087
  %v4403 = vunpack.c.l.b16 %v4088
  %v4404 = vunpack.c.l.b16 %v4089
  %v4405 = vunpack.c.l.b16 %v4090
  %v4406 = vunpack.c.l.b16 %v4091
  %v4407 = vunpack.c.l.b16 %v4092
  %v4408 = vunpack.c.l.b16 %v4093
  %v4409 = vunpack.c.l.b16 %v4094
  %v4410 = vunpack.c.l.b16 %v4095
  %v4411 = vunpack.c.l.b16 %v4096
  %v4412 = vunpack.c.l.b16 %v4097
  %v4413 = vunpack.c.l.b16 %v4098
  %v4414 = vunpack.c.l.b16 %v4099
  %v4415 = vunpack.c.l.b16 %v4100
  %v4416 = vunpack.c.l.b16 %v4101
  %v4417 = vunpack.c.l.b16 %v4102
  %v4418 = vunpack.c.l.b16 %v4103
  %v4419 = vunpack.c.l.b16 %v4104
  %v4420 = vunpack.c.l.b16 %v4105
  %v4421 = vpack.c.b16 %v4390, %v4389
  %v4422 = vpack.c.b16 %v4392, %v4391
  %v4423 = vpack.c.b16 %v4394, %v4393
  %v4424 = vpack.c.b16 %v4396, %v4395
  %v4425 = vpack.c.b16 %v4398, %v4397
  %v4426 = vpack.c.b16 %v4400, %v4399
  %v4427 = vpack.c.b16 %v4402, %v4401
  %v4428 = vpack.c.b16 %v4404, %v4403
  %v4429 = vpack.c.b16 %v4406, %v4405
  %v4430 = vpack.c.b16 %v4408, %v4407
  %v4431 = vpack.c.b16 %v4410, %v4409
  %v4432 = vpack.c.b16 %v4412, %v4411
  %v4433 = vpack.c.b16 %v4414, %v4413
  %v4434 = vpack.c.b16 %v4416, %v4415
  %v4435 = vpack.c.b16 %v4418, %v4417
  %v4436 = vpack.c.b16 %v4420, %v4419
  %4453 = vmatprep.subr.bf16.mxu0 0
  %4454 = vmatpush1.bf16.msra.mxu0 %v4421
  %4455 = vmatprep.subr.bf16.mxu0 0
  %4456 = vmatpush1.bf16.msra.mxu0 %v4422
  %4457 = vmatprep.subr.bf16.mxu0 0
  %4458 = vmatpush1.bf16.msra.mxu0 %v4423
  %4459 = vmatprep.subr.bf16.mxu0 0
  %4460 = vmatpush1.bf16.msra.mxu0 %v4424
  %4461 = vmatprep.subr.bf16.mxu0 0
  %4462 = vmatpush1.bf16.msra.mxu0 %v4425
  %4463 = vmatprep.subr.bf16.mxu0 0
  %4464 = vmatpush1.bf16.msra.mxu0 %v4426
  %4465 = vmatprep.subr.bf16.mxu0 0
  %4466 = vmatpush1.bf16.msra.mxu0 %v4427
  %4467 = vmatprep.subr.bf16.mxu0 0
  %4468 = vmatpush1.bf16.msra.mxu0 %v4428
  %4469 = vmatprep.subr.bf16.mxu0 0
  %4470 = vmatpush1.bf16.msra.mxu0 %v4429
  %4471 = vmatprep.subr.bf16.mxu0 0
  %4472 = vmatpush1.bf16.msra.mxu0 %v4430
  %4473 = vmatprep.subr.bf16.mxu0 0
  %4474 = vmatpush1.bf16.msra.mxu0 %v4431
  %4475 = vmatprep.subr.bf16.mxu0 0
  %4476 = vmatpush1.bf16.msra.mxu0 %v4432
  %4477 = vmatprep.subr.bf16.mxu0 0
  %4478 = vmatpush1.bf16.msra.mxu0 %v4433
  %4479 = vmatprep.subr.bf16.mxu0 0
  %4480 = vmatpush1.bf16.msra.mxu0 %v4434
  %4481 = vmatprep.subr.bf16.mxu0 0
  %4482 = vmatpush1.bf16.msra.mxu0 %v4435
  %4483 = vmatprep.subr.bf16.mxu0 0
  %4484 = vmatpush1.bf16.msra.mxu0 %v4436
  %4485 = vmatprep.mubr.bf16.mxu0 %v4107
  %4486 = vmatmul.mubr.bf16.gmra.mrb[0].mxu0 %v4106
  %v4487 = vpop.f32.mrb[0].mxu0
  %v4488 = vadd.f32 %v4352, %v4487
  %v4489 = vpop.f32.mrb[0].mxu0
  %v4490 = vpop.f32.mrb[0].mxu0
  %v4491 = vpop.f32.mrb[0].mxu0
  %4492 = vdwg.mxu0
  %v4493 = vadd.s32 %v3991, 4
  %vm4494 = vcmp.eq.s32.totalorder %v3993, %v4493
  %vm4495 = vmand %vm4494, %vm3995
  %v4496 = vsel %vm4495, 1, 0
  %v4497 = vcvt.s32.f32 %v4496
  %v4499 = vsel %vm3999, %v4497, 0
  %4501 = vmatprep.subr.mxu0 %v3989
  %4502 = vmatpush1.msra.mxu0 %v3988
  %4503 = vmatprep.subr.mxu0 0.0
  %4504 = vmatpush1.msra.mxu0 0.0
  %4505 = vmatprep.subr.mxu0 0.0
  %4506 = vmatpush1.msra.mxu0 0.0
  %4507 = vmatprep.subr.mxu0 0.0
  %4508 = vmatpush1.msra.mxu0 0.0
  %4509 = vmatprep.subr.mxu0 0.0
  %4510 = vmatpush1.msra.mxu0 0.0
  %4511 = vmatprep.subr.mxu0 0.0
  %4512 = vmatpush1.msra.mxu0 0.0
  %4513 = vmatprep.subr.mxu0 0.0
  %4514 = vmatpush1.msra.mxu0 0.0
  %4515 = vmatprep.subr.mxu0 0.0
  %4516 = vmatpush1.msra.mxu0 0.0
  %4517 = vmatprep.subr.mxu0 0.0
  %4518 = vmatpush1.msra.mxu0 0.0
  %4519 = vmatprep.subr.mxu0 0.0
  %4520 = vmatpush1.msra.mxu0 0.0
  %4521 = vmatprep.subr.mxu0 0.0
  %4522 = vmatpush1.msra.mxu0 0.0
  %4523 = vmatprep.subr.mxu0 0.0
  %4524 = vmatpush1.msra.mxu0 0.0
  %4525 = vmatprep.subr.mxu0 0.0
  %4526 = vmatpush1.msra.mxu0 0.0
  %4527 = vmatprep.subr.mxu0 0.0
  %4528 = vmatpush1.msra.mxu0 0.0
  %4529 = vmatprep.subr.mxu0 0.0
  %4530 = vmatpush1.msra.mxu0 0.0
  %4531 = vmatprep.subr.mxu0 0.0
  %4532 = vmatpush1.msra.mxu0 0.0
  %4533 = vmatprep.subr.mxu0 0.0
  %4534 = vmatpush1.msra.mxu0 0.0
  %4535 = vmatprep.subr.mxu0 0.0
  %4536 = vmatpush1.msra.mxu0 0.0
  %4537 = vmatprep.subr.mxu0 0.0
  %4538 = vmatpush1.msra.mxu0 0.0
  %4539 = vmatprep.subr.mxu0 0.0
  %4540 = vmatpush1.msra.mxu0 0.0
  %4541 = vmatprep.subr.mxu0 0.0
  %4542 = vmatpush1.msra.mxu0 0.0
  %4543 = vmatprep.subr.mxu0 0.0
  %4544 = vmatpush1.msra.mxu0 0.0
  %4545 = vmatprep.subr.mxu0 0.0
  %4546 = vmatpush1.msra.mxu0 0.0
  %4547 = vmatprep.subr.mxu0 0.0
  %4548 = vmatpush1.msra.mxu0 0.0
  %4549 = vmatprep.subr.mxu0 0.0
  %4550 = vmatpush1.msra.mxu0 0.0
  %4551 = vmatprep.subr.mxu0 0.0
  %4552 = vmatpush1.msra.mxu0 0.0
  %4553 = vmatprep.subr.mxu0 0.0
  %4554 = vmatpush1.msra.mxu0 0.0
  %4555 = vmatprep.subr.mxu0 0.0
  %4556 = vmatpush1.msra.mxu0 0.0
  %4557 = vmatprep.subr.mxu0 0.0
  %4558 = vmatpush1.msra.mxu0 0.0
  %4559 = vmatprep.subr.mxu0 0.0
  %4560 = vmatpush1.msra.mxu0 0.0
  %4561 = vmatprep.subr.mxu0 0.0
  %4562 = vmatpush1.msra.mxu0 0.0
  %4563 = vmatprep.subr.mxu0 0.0
  %4564 = vmatpush1.msra.mxu0 0.0
  %4565 = vmatprep.mubr.f32.mxu0 0.0
  %4566 = vmatmul.mubr.f32.gmra.mrb[0].mxu0 %v4499
  %v4567 = vpop.f32.mrb[0].mxu0
  %v4568 = vadd.f32 0.0, %v4567
  %v4569 = vpop.f32.mrb[0].mxu0
  %v4570 = vadd.f32 0.0, %v4569
  %4571 = vdwg.mxu0
  %v4572 = vld [vmem:[%s5 + $0x100] sm:$0xf]
  %v4573 = vld [vmem:[%s5 + $0x104] sm:$0xf]
  %v4574 = vld [vmem:[%s5 + $0x108] sm:$0xf]
  %v4575 = vld [vmem:[%s5 + $0x10c] sm:$0xf]
  %v4576 = vld [vmem:[%s5 + $0x110] sm:$0xf]
  %v4577 = vld [vmem:[%s5 + $0x114] sm:$0xf]
  %v4578 = vld [vmem:[%s5 + $0x118] sm:$0xf]
  %v4579 = vld [vmem:[%s5 + $0x11c] sm:$0xf]
  %v4580 = vld [vmem:[%s5 + $0x120] sm:$0xf]
  %v4581 = vld [vmem:[%s5 + $0x124] sm:$0xf]
  %v4582 = vld [vmem:[%s5 + $0x128] sm:$0xf]
  %v4583 = vld [vmem:[%s5 + $0x12c] sm:$0xf]
  %v4584 = vld [vmem:[%s5 + $0x130] sm:$0xf]
  %v4585 = vld [vmem:[%s5 + $0x134] sm:$0xf]
  %v4586 = vld [vmem:[%s5 + $0x138] sm:$0xf]
  %v4587 = vld [vmem:[%s5 + $0x13c] sm:$0xf]
  %v4588 = vld [vmem:[%s5 + $0x140] sm:$0xf]
  %v4589 = vld [vmem:[%s5 + $0x144] sm:$0xf]
  %v4590 = vld [vmem:[%s5 + $0x148] sm:$0xf]
  %v4591 = vld [vmem:[%s5 + $0x14c] sm:$0xf]
  %v4592 = vld [vmem:[%s5 + $0x150] sm:$0xf]
  %v4593 = vld [vmem:[%s5 + $0x154] sm:$0xf]
  %v4594 = vld [vmem:[%s5 + $0x158] sm:$0xf]
  %v4595 = vld [vmem:[%s5 + $0x15c] sm:$0xf]
  %v4596 = vld [vmem:[%s5 + $0x160] sm:$0xf]
  %v4597 = vld [vmem:[%s5 + $0x164] sm:$0xf]
  %v4598 = vld [vmem:[%s5 + $0x168] sm:$0xf]
  %v4599 = vld [vmem:[%s5 + $0x16c] sm:$0xf]
  %v4600 = vld [vmem:[%s5 + $0x170] sm:$0xf]
  %v4601 = vld [vmem:[%s5 + $0x174] sm:$0xf]
  %v4602 = vld [vmem:[%s5 + $0x178] sm:$0xf]
  %v4603 = vld [vmem:[%s5 + $0x17c] sm:$0xf]
  %v4604 = vpack.c.bf16 %v4568, %v4568
  %v4605 = vpack.c.bf16 %v4570, %v4570
  %v4638 = vunpack.c.l.b16 %v4572
  %v4639 = vunpack.c.l.b16 %v4573
  %v4640 = vunpack.c.l.b16 %v4574
  %v4641 = vunpack.c.l.b16 %v4575
  %v4642 = vunpack.c.l.b16 %v4576
  %v4643 = vunpack.c.l.b16 %v4577
  %v4644 = vunpack.c.l.b16 %v4578
  %v4645 = vunpack.c.l.b16 %v4579
  %v4646 = vunpack.c.l.b16 %v4580
  %v4647 = vunpack.c.l.b16 %v4581
  %v4648 = vunpack.c.l.b16 %v4582
  %v4649 = vunpack.c.l.b16 %v4583
  %v4650 = vunpack.c.l.b16 %v4584
  %v4651 = vunpack.c.l.b16 %v4585
  %v4652 = vunpack.c.l.b16 %v4586
  %v4653 = vunpack.c.l.b16 %v4587
  %v4654 = vunpack.c.l.b16 %v4588
  %v4655 = vunpack.c.l.b16 %v4589
  %v4656 = vunpack.c.l.b16 %v4590
  %v4657 = vunpack.c.l.b16 %v4591
  %v4658 = vunpack.c.l.b16 %v4592
  %v4659 = vunpack.c.l.b16 %v4593
  %v4660 = vunpack.c.l.b16 %v4594
  %v4661 = vunpack.c.l.b16 %v4595
  %v4662 = vunpack.c.l.b16 %v4596
  %v4663 = vunpack.c.l.b16 %v4597
  %v4664 = vunpack.c.l.b16 %v4598
  %v4665 = vunpack.c.l.b16 %v4599
  %v4666 = vunpack.c.l.b16 %v4600
  %v4667 = vunpack.c.l.b16 %v4601
  %v4668 = vunpack.c.l.b16 %v4602
  %v4669 = vunpack.c.l.b16 %v4603
  %v4670 = vpack.c.b16 %v4639, %v4638
  %v4671 = vpack.c.b16 %v4641, %v4640
  %v4672 = vpack.c.b16 %v4643, %v4642
  %v4673 = vpack.c.b16 %v4645, %v4644
  %v4674 = vpack.c.b16 %v4647, %v4646
  %v4675 = vpack.c.b16 %v4649, %v4648
  %v4676 = vpack.c.b16 %v4651, %v4650
  %v4677 = vpack.c.b16 %v4653, %v4652
  %v4678 = vpack.c.b16 %v4655, %v4654
  %v4679 = vpack.c.b16 %v4657, %v4656
  %v4680 = vpack.c.b16 %v4659, %v4658
  %v4681 = vpack.c.b16 %v4661, %v4660
  %v4682 = vpack.c.b16 %v4663, %v4662
  %v4683 = vpack.c.b16 %v4665, %v4664
  %v4684 = vpack.c.b16 %v4667, %v4666
  %v4685 = vpack.c.b16 %v4669, %v4668
  %4702 = vmatprep.subr.bf16.mxu0 0
  %4703 = vmatpush1.bf16.msra.mxu0 %v4670
  %4704 = vmatprep.subr.bf16.mxu0 0
  %4705 = vmatpush1.bf16.msra.mxu0 %v4671
  %4706 = vmatprep.subr.bf16.mxu0 0
  %4707 = vmatpush1.bf16.msra.mxu0 %v4672
  %4708 = vmatprep.subr.bf16.mxu0 0
  %4709 = vmatpush1.bf16.msra.mxu0 %v4673
  %4710 = vmatprep.subr.bf16.mxu0 0
  %4711 = vmatpush1.bf16.msra.mxu0 %v4674
  %4712 = vmatprep.subr.bf16.mxu0 0
  %4713 = vmatpush1.bf16.msra.mxu0 %v4675
  %4714 = vmatprep.subr.bf16.mxu0 0
  %4715 = vmatpush1.bf16.msra.mxu0 %v4676
  %4716 = vmatprep.subr.bf16.mxu0 0
  %4717 = vmatpush1.bf16.msra.mxu0 %v4677
  %4718 = vmatprep.subr.bf16.mxu0 0
  %4719 = vmatpush1.bf16.msra.mxu0 %v4678
  %4720 = vmatprep.subr.bf16.mxu0 0
  %4721 = vmatpush1.bf16.msra.mxu0 %v4679
  %4722 = vmatprep.subr.bf16.mxu0 0
  %4723 = vmatpush1.bf16.msra.mxu0 %v4680
  %4724 = vmatprep.subr.bf16.mxu0 0
  %4725 = vmatpush1.bf16.msra.mxu0 %v4681
  %4726 = vmatprep.subr.bf16.mxu0 0
  %4727 = vmatpush1.bf16.msra.mxu0 %v4682
  %4728 = vmatprep.subr.bf16.mxu0 0
  %4729 = vmatpush1.bf16.msra.mxu0 %v4683
  %4730 = vmatprep.subr.bf16.mxu0 0
  %4731 = vmatpush1.bf16.msra.mxu0 %v4684
  %4732 = vmatprep.subr.bf16.mxu0 0
  %4733 = vmatpush1.bf16.msra.mxu0 %v4685
  %4734 = vmatprep.mubr.bf16.mxu0 %v4605
  %4735 = vmatmul.mubr.bf16.gmra.mrb[0].mxu0 %v4604
  %v4736 = vpop.f32.mrb[0].mxu0
  %v4737 = vadd.f32 0.0, %v4736
  %v4738 = vpop.f32.mrb[0].mxu0
  %v4739 = vpop.f32.mrb[0].mxu0
  %v4740 = vpop.f32.mrb[0].mxu0
  %4741 = vdwg.mxu0
  %v4742 = vadd.f32 %v4488, %v4737
  %v4743 = vadd.s32 %v3991, 6
  %vm4744 = vcmp.eq.s32.totalorder %v3993, %v4743
  %vm4745 = vmand %vm4744, %vm3995
  %v4746 = vsel %vm4745, 1, 0
  %v4747 = vcvt.s32.f32 %v4746
  %v4749 = vsel %vm3999, %v4747, 0
  %4751 = vmatprep.subr.mxu0 %v3989
  %4752 = vmatpush1.msra.mxu0 %v3988
  %4753 = vmatprep.subr.mxu0 0.0
  %4754 = vmatpush1.msra.mxu0 0.0
  %4755 = vmatprep.subr.mxu0 0.0
  %4756 = vmatpush1.msra.mxu0 0.0
  %4757 = vmatprep.subr.mxu0 0.0
  %4758 = vmatpush1.msra.mxu0 0.0
  %4759 = vmatprep.subr.mxu0 0.0
  %4760 = vmatpush1.msra.mxu0 0.0
  %4761 = vmatprep.subr.mxu0 0.0
  %4762 = vmatpush1.msra.mxu0 0.0
  %4763 = vmatprep.subr.mxu0 0.0
  %4764 = vmatpush1.msra.mxu0 0.0
  %4765 = vmatprep.subr.mxu0 0.0
  %4766 = vmatpush1.msra.mxu0 0.0
  %4767 = vmatprep.subr.mxu0 0.0
  %4768 = vmatpush1.msra.mxu0 0.0
  %4769 = vmatprep.subr.mxu0 0.0
  %4770 = vmatpush1.msra.mxu0 0.0
  %4771 = vmatprep.subr.mxu0 0.0
  %4772 = vmatpush1.msra.mxu0 0.0
  %4773 = vmatprep.subr.mxu0 0.0
  %4774 = vmatpush1.msra.mxu0 0.0
  %4775 = vmatprep.subr.mxu0 0.0
  %4776 = vmatpush1.msra.mxu0 0.0
  %4777 = vmatprep.subr.mxu0 0.0
  %4778 = vmatpush1.msra.mxu0 0.0
  %4779 = vmatprep.subr.mxu0 0.0
  %4780 = vmatpush1.msra.mxu0 0.0
  %4781 = vmatprep.subr.mxu0 0.0
  %4782 = vmatpush1.msra.mxu0 0.0
  %4783 = vmatprep.subr.mxu0 0.0
  %4784 = vmatpush1.msra.mxu0 0.0
  %4785 = vmatprep.subr.mxu0 0.0
  %4786 = vmatpush1.msra.mxu0 0.0
  %4787 = vmatprep.subr.mxu0 0.0
  %4788 = vmatpush1.msra.mxu0 0.0
  %4789 = vmatprep.subr.mxu0 0.0
  %4790 = vmatpush1.msra.mxu0 0.0
  %4791 = vmatprep.subr.mxu0 0.0
  %4792 = vmatpush1.msra.mxu0 0.0
  %4793 = vmatprep.subr.mxu0 0.0
  %4794 = vmatpush1.msra.mxu0 0.0
  %4795 = vmatprep.subr.mxu0 0.0
  %4796 = vmatpush1.msra.mxu0 0.0
  %4797 = vmatprep.subr.mxu0 0.0
  %4798 = vmatpush1.msra.mxu0 0.0
  %4799 = vmatprep.subr.mxu0 0.0
  %4800 = vmatpush1.msra.mxu0 0.0
  %4801 = vmatprep.subr.mxu0 0.0
  %4802 = vmatpush1.msra.mxu0 0.0
  %4803 = vmatprep.subr.mxu0 0.0
  %4804 = vmatpush1.msra.mxu0 0.0
  %4805 = vmatprep.subr.mxu0 0.0
  %4806 = vmatpush1.msra.mxu0 0.0
  %4807 = vmatprep.subr.mxu0 0.0
  %4808 = vmatpush1.msra.mxu0 0.0
  %4809 = vmatprep.subr.mxu0 0.0
  %4810 = vmatpush1.msra.mxu0 0.0
  %4811 = vmatprep.subr.mxu0 0.0
  %4812 = vmatpush1.msra.mxu0 0.0
  %4813 = vmatprep.subr.mxu0 0.0
  %4814 = vmatpush1.msra.mxu0 0.0
  %4815 = vmatprep.mubr.f32.mxu0 0.0
  %4816 = vmatmul.mubr.f32.gmra.mrb[0].mxu0 %v4749
  %v4817 = vpop.f32.mrb[0].mxu0
  %v4818 = vadd.f32 0.0, %v4817
  %v4819 = vpop.f32.mrb[0].mxu0
  %v4820 = vadd.f32 0.0, %v4819
  %4821 = vdwg.mxu0
  %v4822 = vld [vmem:[%s5 + $0x180] sm:$0xf]
  %v4823 = vld [vmem:[%s5 + $0x184] sm:$0xf]
  %v4824 = vld [vmem:[%s5 + $0x188] sm:$0xf]
  %v4825 = vld [vmem:[%s5 + $0x18c] sm:$0xf]
  %v4826 = vld [vmem:[%s5 + $0x190] sm:$0xf]
  %v4827 = vld [vmem:[%s5 + $0x194] sm:$0xf]
  %v4828 = vld [vmem:[%s5 + $0x198] sm:$0xf]
  %v4829 = vld [vmem:[%s5 + $0x19c] sm:$0xf]
  %v4830 = vld [vmem:[%s5 + $0x1a0] sm:$0xf]
  %v4831 = vld [vmem:[%s5 + $0x1a4] sm:$0xf]
  %v4832 = vld [vmem:[%s5 + $0x1a8] sm:$0xf]
  %v4833 = vld [vmem:[%s5 + $0x1ac] sm:$0xf]
  %v4834 = vld [vmem:[%s5 + $0x1b0] sm:$0xf]
  %v4835 = vld [vmem:[%s5 + $0x1b4] sm:$0xf]
  %v4836 = vld [vmem:[%s5 + $0x1b8] sm:$0xf]
  %v4837 = vld [vmem:[%s5 + $0x1bc] sm:$0xf]
  %v4838 = vld [vmem:[%s5 + $0x1c0] sm:$0xf]
  %v4839 = vld [vmem:[%s5 + $0x1c4] sm:$0xf]
  %v4840 = vld [vmem:[%s5 + $0x1c8] sm:$0xf]
  %v4841 = vld [vmem:[%s5 + $0x1cc] sm:$0xf]
  %v4842 = vld [vmem:[%s5 + $0x1d0] sm:$0xf]
  %v4843 = vld [vmem:[%s5 + $0x1d4] sm:$0xf]
  %v4844 = vld [vmem:[%s5 + $0x1d8] sm:$0xf]
  %v4845 = vld [vmem:[%s5 + $0x1dc] sm:$0xf]
  %v4846 = vld [vmem:[%s5 + $0x1e0] sm:$0xf]
  %v4847 = vld [vmem:[%s5 + $0x1e4] sm:$0xf]
  %v4848 = vld [vmem:[%s5 + $0x1e8] sm:$0xf]
  %v4849 = vld [vmem:[%s5 + $0x1ec] sm:$0xf]
  %v4850 = vld [vmem:[%s5 + $0x1f0] sm:$0xf]
  %v4851 = vld [vmem:[%s5 + $0x1f4] sm:$0xf]
  %v4852 = vld [vmem:[%s5 + $0x1f8] sm:$0xf]
  %v4853 = vld [vmem:[%s5 + $0x1fc] sm:$0xf]
  %v4854 = vpack.c.bf16 %v4818, %v4818
  %v4855 = vpack.c.bf16 %v4820, %v4820
  %v4888 = vunpack.c.l.b16 %v4822
  %v4889 = vunpack.c.l.b16 %v4823
  %v4890 = vunpack.c.l.b16 %v4824
  %v4891 = vunpack.c.l.b16 %v4825
  %v4892 = vunpack.c.l.b16 %v4826
  %v4893 = vunpack.c.l.b16 %v4827
  %v4894 = vunpack.c.l.b16 %v4828
  %v4895 = vunpack.c.l.b16 %v4829
  %v4896 = vunpack.c.l.b16 %v4830
  %v4897 = vunpack.c.l.b16 %v4831
  %v4898 = vunpack.c.l.b16 %v4832
  %v4899 = vunpack.c.l.b16 %v4833
  %v4900 = vunpack.c.l.b16 %v4834
  %v4901 = vunpack.c.l.b16 %v4835
  %v4902 = vunpack.c.l.b16 %v4836
  %v4903 = vunpack.c.l.b16 %v4837
  %v4904 = vunpack.c.l.b16 %v4838
  %v4905 = vunpack.c.l.b16 %v4839
  %v4906 = vunpack.c.l.b16 %v4840
  %v4907 = vunpack.c.l.b16 %v4841
  %v4908 = vunpack.c.l.b16 %v4842
  %v4909 = vunpack.c.l.b16 %v4843
  %v4910 = vunpack.c.l.b16 %v4844
  %v4911 = vunpack.c.l.b16 %v4845
  %v4912 = vunpack.c.l.b16 %v4846
  %v4913 = vunpack.c.l.b16 %v4847
  %v4914 = vunpack.c.l.b16 %v4848
  %v4915 = vunpack.c.l.b16 %v4849
  %v4916 = vunpack.c.l.b16 %v4850
  %v4917 = vunpack.c.l.b16 %v4851
  %v4918 = vunpack.c.l.b16 %v4852
  %v4919 = vunpack.c.l.b16 %v4853
  %v4920 = vpack.c.b16 %v4889, %v4888
  %v4921 = vpack.c.b16 %v4891, %v4890
  %v4922 = vpack.c.b16 %v4893, %v4892
  %v4923 = vpack.c.b16 %v4895, %v4894
  %v4924 = vpack.c.b16 %v4897, %v4896
  %v4925 = vpack.c.b16 %v4899, %v4898
  %v4926 = vpack.c.b16 %v4901, %v4900
  %v4927 = vpack.c.b16 %v4903, %v4902
  %v4928 = vpack.c.b16 %v4905, %v4904
  %v4929 = vpack.c.b16 %v4907, %v4906
  %v4930 = vpack.c.b16 %v4909, %v4908
  %v4931 = vpack.c.b16 %v4911, %v4910
  %v4932 = vpack.c.b16 %v4913, %v4912
  %v4933 = vpack.c.b16 %v4915, %v4914
  %v4934 = vpack.c.b16 %v4917, %v4916
  %v4935 = vpack.c.b16 %v4919, %v4918
  %4952 = vmatprep.subr.bf16.mxu0 0
  %4953 = vmatpush1.bf16.msra.mxu0 %v4920
  %4954 = vmatprep.subr.bf16.mxu0 0
  %4955 = vmatpush1.bf16.msra.mxu0 %v4921
  %4956 = vmatprep.subr.bf16.mxu0 0
  %4957 = vmatpush1.bf16.msra.mxu0 %v4922
  %4958 = vmatprep.subr.bf16.mxu0 0
  %4959 = vmatpush1.bf16.msra.mxu0 %v4923
  %4960 = vmatprep.subr.bf16.mxu0 0
  %4961 = vmatpush1.bf16.msra.mxu0 %v4924
  %4962 = vmatprep.subr.bf16.mxu0 0
  %4963 = vmatpush1.bf16.msra.mxu0 %v4925
  %4964 = vmatprep.subr.bf16.mxu0 0
  %4965 = vmatpush1.bf16.msra.mxu0 %v4926
  %4966 = vmatprep.subr.bf16.mxu0 0
  %4967 = vmatpush1.bf16.msra.mxu0 %v4927
  %4968 = vmatprep.subr.bf16.mxu0 0
  %4969 = vmatpush1.bf16.msra.mxu0 %v4928
  %4970 = vmatprep.subr.bf16.mxu0 0
  %4971 = vmatpush1.bf16.msra.mxu0 %v4929
  %4972 = vmatprep.subr.bf16.mxu0 0
  %4973 = vmatpush1.bf16.msra.mxu0 %v4930
  %4974 = vmatprep.subr.bf16.mxu0 0
  %4975 = vmatpush1.bf16.msra.mxu0 %v4931
  %4976 = vmatprep.subr.bf16.mxu0 0
  %4977 = vmatpush1.bf16.msra.mxu0 %v4932
  %4978 = vmatprep.subr.bf16.mxu0 0
  %4979 = vmatpush1.bf16.msra.mxu0 %v4933
  %4980 = vmatprep.subr.bf16.mxu0 0
  %4981 = vmatpush1.bf16.msra.mxu0 %v4934
  %4982 = vmatprep.subr.bf16.mxu0 0
  %4983 = vmatpush1.bf16.msra.mxu0 %v4935
  %4984 = vmatprep.mubr.bf16.mxu0 %v4855
  %4985 = vmatmul.mubr.bf16.gmra.mrb[0].mxu0 %v4854
  %v4986 = vpop.f32.mrb[0].mxu0
  %v4987 = vadd.f32 0.0, %v4986
  %v4988 = vpop.f32.mrb[0].mxu0
  %v4989 = vpop.f32.mrb[0].mxu0
  %v4990 = vpop.f32.mrb[0].mxu0
  %4991 = vdwg.mxu0
  %v4992 = vadd.f32 %v4742, %v4987
  %4993 = vst [vmem:[%s6] sm:$0xff] %v4992
  // Predicated region
  $region26: #{encoder_forward.3} parent=0 // pred_check
    _
  $region27: #{encoder_forward.3} parent=0 // pred_check_branch
    %4995 = sbr.rel (0) target = $region29
  $region28: #{encoder_forward.3} parent=0 // pred_region
    _
  $region29: #{encoder_forward.3} parent=0 // pred_fallthru
    _
  // Predicated region
  $region30: #{encoder_forward.3} parent=0 // pred_check
    _
  $region31: #{encoder_forward.3} parent=0 // pred_check_branch
    %4997 = sbr.rel (0) target = $region33
  $region32: #{encoder_forward.3} parent=0 // pred_region
    _
  $region33: #{encoder_forward.3} parent=0 // pred_fallthru
    _

</llo_original>
